<compile_context>
chip_gen: v7x
topology: tpu7x:2x2x1
jax: 0.10.0
libtpu: 0.0.40
codegen_flags: <defaults>
</compile_context>

<pallas_src>
import functools

import jax
import jax.numpy as jnp
import numpy as np
from jax.experimental import pallas as pl
from jax.experimental.pallas import tpu as pltpu

# Cubic B-spline basis matrix ([1, t, t^2, t^3] @ M -> 4 stencil weights).
CUBIC_B_SPLINE_MATRIX = (1.0 / 6.0) * np.array(
    [[1.0, 4.0, 1.0, 0.0],
     [-3.0, 0.0, 3.0, 0.0],
     [3.0, -6.0, 3.0, 0.0],
     [-1.0, 3.0, -3.0, 1.0]],
    dtype=np.float32,
)

GP = 128   # lane-padded width of the per-axis one-hot (grid side G <= GP)


def _round_up(x, m):
    return ((x + m - 1) // m) * m


def _default_tile_n():
    """TN=256 fills the 2x256^2 MXU on v6e/v7x; 128 elsewhere (v5e: 4x128^2)."""
    try:
        kind = jax.devices()[0].device_kind.lower()
    except Exception:
        return 128
    if "v6" in kind or "v7" in kind or "7x" in kind:
        return 256
    return 128


def create_grid(spacing, channels, size, key):
    """Synthetic stand-in for create_grid: (C, G, G, G) parameter grid."""
    g = int(round(size / spacing)) + 1
    return 0.1 * jax.random.normal(key, (channels, g, g, g), dtype=jnp.float32)


# ----------------------------------------------------------------------------
# Pallas kernel
# ----------------------------------------------------------------------------
def _lig_grid_kernel(pts_ref, ex_ref, ey_ref, rrep_ref, gw_ref, sred_ref,
                     b_ref, out_ref, *, G, M, radius):
    # pts_ref  : (TN, 3)   f32  raw nb_params tile
    # ex_ref   : (GP, XYP) bf16 0/1: x one-hot -> (x,y)-plane columns
    # ey_ref   : (GP, XYP) bf16 0/1: y one-hot -> (x,y)-plane columns
    # rrep_ref : (GP, ZFP) bf16 0/1: z one-hot -> repeated over F columns
    # gw_ref   : (XYP, ZFP) bf16 fused grid (grid @ enc_w), (x*G+y, z*F+f)
    # sred_ref : (ZFP, FP) bf16 0/1 reduce-over-z matrix
    # b_ref    : (1, FP)   f32  encoder bias (lane padded)
    # out_ref  : (TN, FP)  f32  lane-dense output block
    pts = pts_ref[...]
    nb_norm = jnp.clip(0.5 + 0.5 * (pts / radius), 0.0, 1.0)          # (TN, 3)

    u = nb_norm * (G - 1)
    base_f = jnp.clip(jnp.floor(u), 1.0, float(G - 3))
    t = u - base_f                                                    # (TN, 3)
    base = base_f.astype(jnp.int32)

    t2 = t * t
    t3 = t2 * t
    # per-axis cubic B-spline stencil weights, k = 0..3 (offsets -1..+2)
    wk = [M[0][k] + M[1][k] * t + M[2][k] * t2 + M[3][k] * t3 for k in range(4)]

    tn = pts.shape[0]
    lane = jax.lax.broadcasted_iota(jnp.int32, (tn, GP), 1)           # (TN, GP)

    def one_hot_bf16(axis):
        # Weighted one-hot of the 4-tap stencil along one axis: (TN, GP) bf16.
        d = lane - base[:, axis:axis + 1] + 1                         # 0..3 in-stencil
        h = jnp.where(d == 0, wk[0][:, axis:axis + 1],
            jnp.where(d == 1, wk[1][:, axis:axis + 1],
            jnp.where(d == 2, wk[2][:, axis:axis + 1],
            jnp.where(d == 3, wk[3][:, axis:axis + 1], 0.0))))
        return h.astype(jnp.bfloat16)

    hx = one_hot_bf16(0)
    hy = one_hot_bf16(1)
    hz = one_hot_bf16(2)

    # Expand x/y one-hots onto the padded (x, y) plane on the MXU and combine:
    # hxy[n, x*G + y] = hx[n, x] * hy[n, y]   (padded columns are zero).
    hxy = (jnp.dot(hx, ex_ref[...], preferred_element_type=jnp.float32) *
           jnp.dot(hy, ey_ref[...], preferred_element_type=jnp.float32)
           ).astype(jnp.bfloat16)                                     # (TN, XYP)

    # Single lane-dense contraction over the (x, y) plane for all z at once:
    # p[n, z*F + f] = sum_xy hxy[n, xy] * GW[xy, z, f]
    p = jnp.dot(hxy, gw_ref[...], preferred_element_type=jnp.float32)  # (TN, ZFP)

    # Broadcast hz over the F columns of each z block via a 0/1 repeat matrix.
    hz_rep = jnp.dot(hz, rrep_ref[...], preferred_element_type=jnp.float32)

    # Weight by hz and reduce over z with a 0/1 matrix (lane-dense FP output).
    q = (p * hz_rep).astype(jnp.bfloat16)                              # (TN, ZFP)
    out = jnp.dot(q, sred_ref[...], preferred_element_type=jnp.float32)
    out_ref[...] = out + b_ref[...]


# ----------------------------------------------------------------------------
# Parameter preparation (hoist out of the per-call path when params are fixed)
# ----------------------------------------------------------------------------
@functools.lru_cache(maxsize=None)
def _constant_mats(g, f, xyp, zfp, fp):
    """0/1 expansion / repeat / reduce matrices (exact in bf16)."""
    ex = np.zeros((GP, xyp), np.float32)
    ey = np.zeros((GP, xyp), np.float32)
    for x in range(g):
        for y in range(g):
            ex[x, x * g + y] = 1.0
            ey[y, x * g + y] = 1.0
    rrep = np.zeros((GP, zfp), np.float32)
    sred = np.zeros((zfp, fp), np.float32)
    for z in range(g):
        rrep[z, z * f:(z + 1) * f] = 1.0
        for ff in range(f):
            sred[z * f + ff, ff] = 1.0
    return (jnp.asarray(ex, jnp.bfloat16), jnp.asarray(ey, jnp.bfloat16),
            jnp.asarray(rrep, jnp.bfloat16), jnp.asarray(sred, jnp.bfloat16))


def prepare_lig_grid_encoder(lig_grid, enc_w, enc_b):
    """One-time prep (per parameter update): fuse the encoder into the grid
    and build the constant 0/1 matrices."""
    c, g = lig_grid.shape[0], lig_grid.shape[1]
    f = enc_w.shape[1]
    assert g >= 4, "cubic B-spline stencil needs a grid side of at least 4"
    assert g <= GP
    xyp = max(128, _round_up(g * g, 128))
    zfp = _round_up(g * f, 128)
    fp = _round_up(f, 128)

    # Fuse the encoder into the grid:
    #   GW[x*G+y, z*F+f] = sum_c grid[c,x,y,z] * W[c,f]
    # (associativity: (Wspline @ grid) @ W == Wspline @ (grid @ W)).
    gw = jnp.einsum('cxyz,cf->xyzf', lig_grid.astype(jnp.float32),
                    enc_w.astype(jnp.float32))                         # (G,G,G,F)
    gw = gw.reshape(g * g, g * f)
    gw = jnp.pad(gw, ((0, xyp - g * g), (0, zfp - g * f)))
    gw = gw.astype(jnp.bfloat16)                                       # lane-dense RHS

    ex, ey, rrep, sred = _constant_mats(g, f, xyp, zfp, fp)
    b_pad = jnp.pad(enc_b.astype(jnp.float32).reshape(1, f), ((0, 0), (0, fp - f)))
    return dict(gw=gw, ex=ex, ey=ey, rrep=rrep, sred=sred, b=b_pad,
                g=g, f=f, xyp=xyp, zfp=zfp, fp=fp)


# ----------------------------------------------------------------------------
# Wrapper
# ----------------------------------------------------------------------------
def lig_grid_encoder(nb_params, lig_grid, enc_w, enc_b, nb_param_radius,
                     *, tile_n=None, prepared=None):
    radius = float(nb_param_radius)
    assert radius > 0.0, "nb_param_radius must be positive"
    if prepared is None:
        prepared = prepare_lig_grid_encoder(lig_grid, enc_w, enc_b)

    n = nb_params.shape[0]
    g, f = prepared["g"], prepared["f"]
    xyp, zfp, fp = prepared["xyp"], prepared["zfp"], prepared["fp"]

    tn = tile_n if tile_n is not None else _default_tile_n()
    n_pad = pl.cdiv(n, tn) * tn
    pts = jnp.pad(nb_params.astype(jnp.float32), ((0, n_pad - n), (0, 0)))

    m_list = [[float(CUBIC_B_SPLINE_MATRIX[p][k]) for k in range(4)]
              for p in range(4)]
    kernel = functools.partial(_lig_grid_kernel, G=g, M=m_list, radius=radius)

    out = pl.pallas_call(
        kernel,
        out_shape=jax.ShapeDtypeStruct((n_pad, fp), jnp.float32),
        grid_spec=pltpu.PrefetchScalarGridSpec(
            num_scalar_prefetch=0,
            grid=(n_pad // tn,),
            in_specs=[
                pl.BlockSpec((tn, 3), lambda i: (i, 0)),
                pl.BlockSpec((GP, xyp), lambda i: (0, 0)),
                pl.BlockSpec((GP, xyp), lambda i: (0, 0)),
                pl.BlockSpec((GP, zfp), lambda i: (0, 0)),
                pl.BlockSpec((xyp, zfp), lambda i: (0, 0)),
                pl.BlockSpec((zfp, fp), lambda i: (0, 0)),
                pl.BlockSpec((1, fp), lambda i: (0, 0)),
            ],
            out_specs=pl.BlockSpec((tn, fp), lambda i: (i, 0)),
        ),
        compiler_params=pltpu.CompilerParams(
            dimension_semantics=("parallel",)),
    )(pts, prepared["ex"], prepared["ey"], prepared["rrep"], prepared["gw"],
      prepared["sred"], prepared["b"])
    return out[:n, :f]


# ----------------------------------------------------------------------------
# Pure-JAX reference (independent gather-based code path) for validation
# ----------------------------------------------------------------------------
def reference_forward(nb_params, lig_grid, enc_w, enc_b, radius):
    m = jnp.asarray(CUBIC_B_SPLINE_MATRIX)
    nb_norm = jnp.clip(0.5 + 0.5 * (nb_params / radius), 0.0, 1.0)
    g = lig_grid.shape[1]
    u = nb_norm * (g - 1)
    base = jnp.clip(jnp.floor(u), 1.0, float(g - 3)).astype(jnp.int32)
    t = u - base.astype(jnp.float32)
    tp = jnp.stack([jnp.ones_like(t), t, t * t, t * t * t], axis=-1)  # (N,3,4)
    w = jnp.einsum("ndp,pk->ndk", tp, m)                              # (N,3,4)
    offs = jnp.arange(-1, 3)

    def one(b, w3):
        ix, iy, iz = b[0] + offs, b[1] + offs, b[2] + offs
        patch = lig_grid[:, ix][:, :, iy][:, :, :, iz]                # (C,4,4,4)
        return jnp.einsum("cijk,i,j,k->c", patch, w3[0], w3[1], w3[2])

    vals = jax.vmap(one)(base, w)                                     # (N,C)
    return vals @ enc_w + enc_b


if __name__ == "__main__":
    key = jax.random.PRNGKey(0)
    k1, k2, k3, k4 = jax.random.split(key, 4)

    # lig_cfg: spacing=0.25, channels=8, max_val=1.0; lig_enc_feats=16
    spacing, channels, max_val, enc_feats = 0.25, 8, 1.0, 16
    n_atoms = 20

    lig_grid = create_grid(spacing, channels, max_val * 2, k1)        # (8,9,9,9)
    enc_w = 0.1 * jax.random.normal(k2, (channels, enc_feats), jnp.float32)
    enc_b = 0.01 * jax.random.normal(k3, (1, enc_feats), jnp.float32)
    nb_params = jax.random.uniform(k4, (n_atoms, 3), jnp.float32,
                                   minval=-1.5 * max_val, maxval=1.5 * max_val)

    out = lig_grid_encoder(nb_params, lig_grid, enc_w, enc_b, max_val)
    out = jax.block_until_ready(out)

    ref = reference_forward(nb_params, lig_grid, enc_w, enc_b, max_val)
    assert out.shape == (n_atoms, enc_feats), out.shape
    # bf16 MXU operands -> tolerance loosened vs. the f32 revision (review note).
    assert jnp.allclose(out, ref, rtol=5e-2, atol=5e-3), (
        float(jnp.max(jnp.abs(out - ref))))

    print("KERNEL_OK")
</pallas_src>

<mosaic_0001>
module attributes {stable_mosaic.version = 11 : i64} {
  func.func @_lig_grid_kernel(%arg0: i32, %arg1: memref<128x3xf32, #tpu.memory_space<vmem>>, %arg2: memref<128x128xbf16, #tpu.memory_space<vmem>>, %arg3: memref<128x128xbf16, #tpu.memory_space<vmem>>, %arg4: memref<128x256xbf16, #tpu.memory_space<vmem>>, %arg5: memref<128x256xbf16, #tpu.memory_space<vmem>>, %arg6: memref<256x128xbf16, #tpu.memory_space<vmem>>, %arg7: memref<1x128xf32, #tpu.memory_space<vmem>>, %arg8: memref<128x128xf32, #tpu.memory_space<vmem>>) attributes {dimension_semantics = [#tpu.dimension_semantics<parallel>], iteration_bounds = array<i64: 1>, scalar_prefetch = 0 : i64, scratch_operands = 0 : i64, tpu.core_type = #tpu.core_type<tc>, window_params = [{transform_indices = @transform_0, window_bounds = array<i64: 128, 3>}, {pipeline_mode = #tpu.pipeline_mode<synchronous>, transform_indices = @transform_1, window_bounds = array<i64: 128, 128>}, {pipeline_mode = #tpu.pipeline_mode<synchronous>, transform_indices = @transform_2, window_bounds = array<i64: 128, 128>}, {pipeline_mode = #tpu.pipeline_mode<synchronous>, transform_indices = @transform_3, window_bounds = array<i64: 128, 256>}, {pipeline_mode = #tpu.pipeline_mode<synchronous>, transform_indices = @transform_4, window_bounds = array<i64: 128, 256>}, {pipeline_mode = #tpu.pipeline_mode<synchronous>, transform_indices = @transform_5, window_bounds = array<i64: 256, 128>}, {pipeline_mode = #tpu.pipeline_mode<synchronous>, transform_indices = @transform_6, window_bounds = array<i64: 1, 128>}, {transform_indices = @transform_7, window_bounds = array<i64: 128, 128>}]} {
    %c0 = arith.constant 0 : index
    %c0_0 = arith.constant 0 : index
    %0 = vector.load %arg1[%c0, %c0_0] : memref<128x3xf32, #tpu.memory_space<vmem>>, vector<128x3xf32>
    %cst = arith.constant 1.000000e+00 : f32
    %1 = vector.broadcast %cst : f32 to vector<128x3xf32>
    %2 = arith.divf %0, %1 : vector<128x3xf32>
    %cst_1 = arith.constant 5.000000e-01 : f32
    %3 = vector.broadcast %cst_1 : f32 to vector<128x3xf32>
    %4 = arith.mulf %3, %2 : vector<128x3xf32>
    %cst_2 = arith.constant 5.000000e-01 : f32
    %5 = vector.broadcast %cst_2 : f32 to vector<128x3xf32>
    %6 = arith.addf %5, %4 : vector<128x3xf32>
    %cst_3 = arith.constant 0.000000e+00 : f32
    %cst_4 = arith.constant 1.000000e+00 : f32
    %7 = vector.broadcast %cst_3 : f32 to vector<128x3xf32>
    %8 = arith.maximumf %7, %6 : vector<128x3xf32>
    %9 = vector.broadcast %cst_4 : f32 to vector<128x3xf32>
    %10 = arith.minimumf %9, %8 : vector<128x3xf32>
    %cst_5 = arith.constant 8.000000e+00 : f32
    %11 = vector.broadcast %cst_5 : f32 to vector<128x3xf32>
    %12 = arith.mulf %10, %11 : vector<128x3xf32>
    %13 = math.floor %12 : vector<128x3xf32>
    %cst_6 = arith.constant 1.000000e+00 : f32
    %cst_7 = arith.constant 6.000000e+00 : f32
    %14 = vector.broadcast %cst_6 : f32 to vector<128x3xf32>
    %15 = arith.maximumf %14, %13 : vector<128x3xf32>
    %16 = vector.broadcast %cst_7 : f32 to vector<128x3xf32>
    %17 = arith.minimumf %16, %15 : vector<128x3xf32>
    %18 = arith.subf %12, %17 : vector<128x3xf32>
    %19 = arith.fptosi %17 : vector<128x3xf32> to vector<128x3xi32>
    %20 = arith.mulf %18, %18 : vector<128x3xf32>
    %21 = arith.mulf %20, %18 : vector<128x3xf32>
    %cst_8 = arith.constant -5.000000e-01 : f32
    %22 = vector.broadcast %cst_8 : f32 to vector<128x3xf32>
    %23 = arith.mulf %22, %18 : vector<128x3xf32>
    %cst_9 = arith.constant 0.166666672 : f32
    %24 = vector.broadcast %cst_9 : f32 to vector<128x3xf32>
    %25 = arith.addf %24, %23 : vector<128x3xf32>
    %cst_10 = arith.constant 5.000000e-01 : f32
    %26 = vector.broadcast %cst_10 : f32 to vector<128x3xf32>
    %27 = arith.mulf %26, %20 : vector<128x3xf32>
    %28 = arith.addf %25, %27 : vector<128x3xf32>
    %cst_11 = arith.constant -0.166666672 : f32
    %29 = vector.broadcast %cst_11 : f32 to vector<128x3xf32>
    %30 = arith.mulf %29, %21 : vector<128x3xf32>
    %31 = arith.addf %28, %30 : vector<128x3xf32>
    %cst_12 = arith.constant 0.000000e+00 : f32
    %32 = vector.broadcast %cst_12 : f32 to vector<128x3xf32>
    %33 = arith.mulf %32, %18 : vector<128x3xf32>
    %cst_13 = arith.constant 0.666666686 : f32
    %34 = vector.broadcast %cst_13 : f32 to vector<128x3xf32>
    %35 = arith.addf %34, %33 : vector<128x3xf32>
    %cst_14 = arith.constant -1.000000e+00 : f32
    %36 = vector.broadcast %cst_14 : f32 to vector<128x3xf32>
    %37 = arith.mulf %36, %20 : vector<128x3xf32>
    %38 = arith.addf %35, %37 : vector<128x3xf32>
    %cst_15 = arith.constant 5.000000e-01 : f32
    %39 = vector.broadcast %cst_15 : f32 to vector<128x3xf32>
    %40 = arith.mulf %39, %21 : vector<128x3xf32>
    %41 = arith.addf %38, %40 : vector<128x3xf32>
    %cst_16 = arith.constant 5.000000e-01 : f32
    %42 = vector.broadcast %cst_16 : f32 to vector<128x3xf32>
    %43 = arith.mulf %42, %18 : vector<128x3xf32>
    %cst_17 = arith.constant 0.166666672 : f32
    %44 = vector.broadcast %cst_17 : f32 to vector<128x3xf32>
    %45 = arith.addf %44, %43 : vector<128x3xf32>
    %cst_18 = arith.constant 5.000000e-01 : f32
    %46 = vector.broadcast %cst_18 : f32 to vector<128x3xf32>
    %47 = arith.mulf %46, %20 : vector<128x3xf32>
    %48 = arith.addf %45, %47 : vector<128x3xf32>
    %cst_19 = arith.constant -5.000000e-01 : f32
    %49 = vector.broadcast %cst_19 : f32 to vector<128x3xf32>
    %50 = arith.mulf %49, %21 : vector<128x3xf32>
    %51 = arith.addf %48, %50 : vector<128x3xf32>
    %cst_20 = arith.constant 0.000000e+00 : f32
    %52 = vector.broadcast %cst_20 : f32 to vector<128x3xf32>
    %53 = arith.mulf %52, %18 : vector<128x3xf32>
    %cst_21 = arith.constant 0.000000e+00 : f32
    %54 = vector.broadcast %cst_21 : f32 to vector<128x3xf32>
    %55 = arith.addf %54, %53 : vector<128x3xf32>
    %cst_22 = arith.constant 0.000000e+00 : f32
    %56 = vector.broadcast %cst_22 : f32 to vector<128x3xf32>
    %57 = arith.mulf %56, %20 : vector<128x3xf32>
    %58 = arith.addf %55, %57 : vector<128x3xf32>
    %cst_23 = arith.constant 0.166666672 : f32
    %59 = vector.broadcast %cst_23 : f32 to vector<128x3xf32>
    %60 = arith.mulf %59, %21 : vector<128x3xf32>
    %61 = arith.addf %58, %60 : vector<128x3xf32>
    %62 = tpu.iota {dimensions = array<i32: 1>} : vector<128x128xi32>
    %63 = vector.extract_strided_slice %19 {offsets = [0, 0], sizes = [128, 1], strides = [1, 1]} : vector<128x3xi32> to vector<128x1xi32>
    %64 = vector.broadcast %63 : vector<128x1xi32> to vector<128x128xi32>
    %65 = arith.subi %62, %64 : vector<128x128xi32>
    %c1_i32 = arith.constant 1 : i32
    %66 = vector.broadcast %c1_i32 : i32 to vector<128x128xi32>
    %67 = arith.addi %65, %66 : vector<128x128xi32>
    %c0_i32 = arith.constant 0 : i32
    %68 = vector.broadcast %c0_i32 : i32 to vector<128x128xi32>
    %69 = arith.cmpi eq, %67, %68 : vector<128x128xi32>
    %70 = vector.extract_strided_slice %31 {offsets = [0, 0], sizes = [128, 1], strides = [1, 1]} : vector<128x3xf32> to vector<128x1xf32>
    %c1_i32_24 = arith.constant 1 : i32
    %71 = vector.broadcast %c1_i32_24 : i32 to vector<128x128xi32>
    %72 = arith.cmpi eq, %67, %71 : vector<128x128xi32>
    %73 = vector.extract_strided_slice %41 {offsets = [0, 0], sizes = [128, 1], strides = [1, 1]} : vector<128x3xf32> to vector<128x1xf32>
    %c2_i32 = arith.constant 2 : i32
    %74 = vector.broadcast %c2_i32 : i32 to vector<128x128xi32>
    %75 = arith.cmpi eq, %67, %74 : vector<128x128xi32>
    %76 = vector.extract_strided_slice %51 {offsets = [0, 0], sizes = [128, 1], strides = [1, 1]} : vector<128x3xf32> to vector<128x1xf32>
    %c3_i32 = arith.constant 3 : i32
    %77 = vector.broadcast %c3_i32 : i32 to vector<128x128xi32>
    %78 = arith.cmpi eq, %67, %77 : vector<128x128xi32>
    %79 = vector.extract_strided_slice %61 {offsets = [0, 0], sizes = [128, 1], strides = [1, 1]} : vector<128x3xf32> to vector<128x1xf32>
    %cst_25 = arith.constant 0.000000e+00 : f32
    %80 = vector.shape_cast %79 : vector<128x1xf32> to vector<128x1xf32>
    %81 = vector.broadcast %80 : vector<128x1xf32> to vector<128x128xf32>
    %82 = vector.broadcast %cst_25 : f32 to vector<128x128xf32>
    %83 = arith.select %78, %81, %82 : vector<128x128xi1>, vector<128x128xf32>
    %84 = vector.shape_cast %76 : vector<128x1xf32> to vector<128x1xf32>
    %85 = vector.broadcast %84 : vector<128x1xf32> to vector<128x128xf32>
    %86 = arith.select %75, %85, %83 : vector<128x128xi1>, vector<128x128xf32>
    %87 = vector.shape_cast %73 : vector<128x1xf32> to vector<128x1xf32>
    %88 = vector.broadcast %87 : vector<128x1xf32> to vector<128x128xf32>
    %89 = arith.select %72, %88, %86 : vector<128x128xi1>, vector<128x128xf32>
    %90 = vector.shape_cast %70 : vector<128x1xf32> to vector<128x1xf32>
    %91 = vector.broadcast %90 : vector<128x1xf32> to vector<128x128xf32>
    %92 = arith.select %69, %91, %89 : vector<128x128xi1>, vector<128x128xf32>
    %93 = arith.truncf %92 : vector<128x128xf32> to vector<128x128xbf16>
    %94 = vector.extract_strided_slice %19 {offsets = [0, 1], sizes = [128, 1], strides = [1, 1]} : vector<128x3xi32> to vector<128x1xi32>
    %95 = vector.broadcast %94 : vector<128x1xi32> to vector<128x128xi32>
    %96 = arith.subi %62, %95 : vector<128x128xi32>
    %c1_i32_26 = arith.constant 1 : i32
    %97 = vector.broadcast %c1_i32_26 : i32 to vector<128x128xi32>
    %98 = arith.addi %96, %97 : vector<128x128xi32>
    %c0_i32_27 = arith.constant 0 : i32
    %99 = vector.broadcast %c0_i32_27 : i32 to vector<128x128xi32>
    %100 = arith.cmpi eq, %98, %99 : vector<128x128xi32>
    %101 = vector.extract_strided_slice %31 {offsets = [0, 1], sizes = [128, 1], strides = [1, 1]} : vector<128x3xf32> to vector<128x1xf32>
    %c1_i32_28 = arith.constant 1 : i32
    %102 = vector.broadcast %c1_i32_28 : i32 to vector<128x128xi32>
    %103 = arith.cmpi eq, %98, %102 : vector<128x128xi32>
    %104 = vector.extract_strided_slice %41 {offsets = [0, 1], sizes = [128, 1], strides = [1, 1]} : vector<128x3xf32> to vector<128x1xf32>
    %c2_i32_29 = arith.constant 2 : i32
    %105 = vector.broadcast %c2_i32_29 : i32 to vector<128x128xi32>
    %106 = arith.cmpi eq, %98, %105 : vector<128x128xi32>
    %107 = vector.extract_strided_slice %51 {offsets = [0, 1], sizes = [128, 1], strides = [1, 1]} : vector<128x3xf32> to vector<128x1xf32>
    %c3_i32_30 = arith.constant 3 : i32
    %108 = vector.broadcast %c3_i32_30 : i32 to vector<128x128xi32>
    %109 = arith.cmpi eq, %98, %108 : vector<128x128xi32>
    %110 = vector.extract_strided_slice %61 {offsets = [0, 1], sizes = [128, 1], strides = [1, 1]} : vector<128x3xf32> to vector<128x1xf32>
    %cst_31 = arith.constant 0.000000e+00 : f32
    %111 = vector.shape_cast %110 : vector<128x1xf32> to vector<128x1xf32>
    %112 = vector.broadcast %111 : vector<128x1xf32> to vector<128x128xf32>
    %113 = vector.broadcast %cst_31 : f32 to vector<128x128xf32>
    %114 = arith.select %109, %112, %113 : vector<128x128xi1>, vector<128x128xf32>
    %115 = vector.shape_cast %107 : vector<128x1xf32> to vector<128x1xf32>
    %116 = vector.broadcast %115 : vector<128x1xf32> to vector<128x128xf32>
    %117 = arith.select %106, %116, %114 : vector<128x128xi1>, vector<128x128xf32>
    %118 = vector.shape_cast %104 : vector<128x1xf32> to vector<128x1xf32>
    %119 = vector.broadcast %118 : vector<128x1xf32> to vector<128x128xf32>
    %120 = arith.select %103, %119, %117 : vector<128x128xi1>, vector<128x128xf32>
    %121 = vector.shape_cast %101 : vector<128x1xf32> to vector<128x1xf32>
    %122 = vector.broadcast %121 : vector<128x1xf32> to vector<128x128xf32>
    %123 = arith.select %100, %122, %120 : vector<128x128xi1>, vector<128x128xf32>
    %124 = arith.truncf %123 : vector<128x128xf32> to vector<128x128xbf16>
    %125 = vector.extract_strided_slice %19 {offsets = [0, 2], sizes = [128, 1], strides = [1, 1]} : vector<128x3xi32> to vector<128x1xi32>
    %126 = vector.broadcast %125 : vector<128x1xi32> to vector<128x128xi32>
    %127 = arith.subi %62, %126 : vector<128x128xi32>
    %c1_i32_32 = arith.constant 1 : i32
    %128 = vector.broadcast %c1_i32_32 : i32 to vector<128x128xi32>
    %129 = arith.addi %127, %128 : vector<128x128xi32>
    %c0_i32_33 = arith.constant 0 : i32
    %130 = vector.broadcast %c0_i32_33 : i32 to vector<128x128xi32>
    %131 = arith.cmpi eq, %129, %130 : vector<128x128xi32>
    %132 = vector.extract_strided_slice %31 {offsets = [0, 2], sizes = [128, 1], strides = [1, 1]} : vector<128x3xf32> to vector<128x1xf32>
    %c1_i32_34 = arith.constant 1 : i32
    %133 = vector.broadcast %c1_i32_34 : i32 to vector<128x128xi32>
    %134 = arith.cmpi eq, %129, %133 : vector<128x128xi32>
    %135 = vector.extract_strided_slice %41 {offsets = [0, 2], sizes = [128, 1], strides = [1, 1]} : vector<128x3xf32> to vector<128x1xf32>
    %c2_i32_35 = arith.constant 2 : i32
    %136 = vector.broadcast %c2_i32_35 : i32 to vector<128x128xi32>
    %137 = arith.cmpi eq, %129, %136 : vector<128x128xi32>
    %138 = vector.extract_strided_slice %51 {offsets = [0, 2], sizes = [128, 1], strides = [1, 1]} : vector<128x3xf32> to vector<128x1xf32>
    %c3_i32_36 = arith.constant 3 : i32
    %139 = vector.broadcast %c3_i32_36 : i32 to vector<128x128xi32>
    %140 = arith.cmpi eq, %129, %139 : vector<128x128xi32>
    %141 = vector.extract_strided_slice %61 {offsets = [0, 2], sizes = [128, 1], strides = [1, 1]} : vector<128x3xf32> to vector<128x1xf32>
    %cst_37 = arith.constant 0.000000e+00 : f32
    %142 = vector.shape_cast %141 : vector<128x1xf32> to vector<128x1xf32>
    %143 = vector.broadcast %142 : vector<128x1xf32> to vector<128x128xf32>
    %144 = vector.broadcast %cst_37 : f32 to vector<128x128xf32>
    %145 = arith.select %140, %143, %144 : vector<128x128xi1>, vector<128x128xf32>
    %146 = vector.shape_cast %138 : vector<128x1xf32> to vector<128x1xf32>
    %147 = vector.broadcast %146 : vector<128x1xf32> to vector<128x128xf32>
    %148 = arith.select %137, %147, %145 : vector<128x128xi1>, vector<128x128xf32>
    %149 = vector.shape_cast %135 : vector<128x1xf32> to vector<128x1xf32>
    %150 = vector.broadcast %149 : vector<128x1xf32> to vector<128x128xf32>
    %151 = arith.select %134, %150, %148 : vector<128x128xi1>, vector<128x128xf32>
    %152 = vector.shape_cast %132 : vector<128x1xf32> to vector<128x1xf32>
    %153 = vector.broadcast %152 : vector<128x1xf32> to vector<128x128xf32>
    %154 = arith.select %131, %153, %151 : vector<128x128xi1>, vector<128x128xf32>
    %155 = arith.truncf %154 : vector<128x128xf32> to vector<128x128xbf16>
    %c0_38 = arith.constant 0 : index
    %c0_39 = arith.constant 0 : index
    %156 = vector.load %arg2[%c0_38, %c0_39] : memref<128x128xbf16, #tpu.memory_space<vmem>>, vector<128x128xbf16>
    %cst_40 = arith.constant dense<0.000000e+00> : vector<128x128xf32>
    %157 = tpu.matmul %93, %156, %cst_40 {dimension_numbers = #tpu.dot_dimension_numbers<[1], [0], [0], [1], [0, 0, 1, 1], [], []>} : vector<128x128xbf16>, vector<128x128xbf16>, vector<128x128xf32> -> vector<128x128xf32>
    %c0_41 = arith.constant 0 : index
    %c0_42 = arith.constant 0 : index
    %158 = vector.load %arg3[%c0_41, %c0_42] : memref<128x128xbf16, #tpu.memory_space<vmem>>, vector<128x128xbf16>
    %cst_43 = arith.constant dense<0.000000e+00> : vector<128x128xf32>
    %159 = tpu.matmul %124, %158, %cst_43 {dimension_numbers = #tpu.dot_dimension_numbers<[1], [0], [0], [1], [0, 0, 1, 1], [], []>} : vector<128x128xbf16>, vector<128x128xbf16>, vector<128x128xf32> -> vector<128x128xf32>
    %160 = arith.mulf %157, %159 : vector<128x128xf32>
    %161 = arith.truncf %160 : vector<128x128xf32> to vector<128x128xbf16>
    %c0_44 = arith.constant 0 : index
    %c0_45 = arith.constant 0 : index
    %162 = vector.load %arg5[%c0_44, %c0_45] : memref<128x256xbf16, #tpu.memory_space<vmem>>, vector<128x256xbf16>
    %cst_46 = arith.constant dense<0.000000e+00> : vector<128x256xf32>
    %163 = tpu.matmul %161, %162, %cst_46 {dimension_numbers = #tpu.dot_dimension_numbers<[1], [0], [0], [1], [0, 0, 1, 1], [], []>} : vector<128x128xbf16>, vector<128x256xbf16>, vector<128x256xf32> -> vector<128x256xf32>
    %c0_47 = arith.constant 0 : index
    %c0_48 = arith.constant 0 : index
    %164 = vector.load %arg4[%c0_47, %c0_48] : memref<128x256xbf16, #tpu.memory_space<vmem>>, vector<128x256xbf16>
    %cst_49 = arith.constant dense<0.000000e+00> : vector<128x256xf32>
    %165 = tpu.matmul %155, %164, %cst_49 {dimension_numbers = #tpu.dot_dimension_numbers<[1], [0], [0], [1], [0, 0, 1, 1], [], []>} : vector<128x128xbf16>, vector<128x256xbf16>, vector<128x256xf32> -> vector<128x256xf32>
    %166 = arith.mulf %163, %165 : vector<128x256xf32>
    %167 = arith.truncf %166 : vector<128x256xf32> to vector<128x256xbf16>
    %c0_50 = arith.constant 0 : index
    %c0_51 = arith.constant 0 : index
    %168 = vector.load %arg6[%c0_50, %c0_51] : memref<256x128xbf16, #tpu.memory_space<vmem>>, vector<256x128xbf16>
    %cst_52 = arith.constant dense<0.000000e+00> : vector<128x128xf32>
    %169 = tpu.matmul %167, %168, %cst_52 {dimension_numbers = #tpu.dot_dimension_numbers<[1], [0], [0], [1], [0, 0, 1, 1], [], []>} : vector<128x256xbf16>, vector<256x128xbf16>, vector<128x128xf32> -> vector<128x128xf32>
    %c0_53 = arith.constant 0 : index
    %c0_54 = arith.constant 0 : index
    %170 = vector.load %arg7[%c0_53, %c0_54] : memref<1x128xf32, #tpu.memory_space<vmem>>, vector<1x128xf32>
    %171 = vector.broadcast %170 : vector<1x128xf32> to vector<128x128xf32>
    %172 = arith.addf %169, %171 : vector<128x128xf32>
    %c0_55 = arith.constant 0 : index
    %c0_56 = arith.constant 0 : index
    %173 = vector.load %arg8[%c0_55, %c0_56] : memref<128x128xf32, #tpu.memory_space<vmem>>, vector<128x128xf32>
    tpu.vector_store %arg8[%c0_55, %c0_56], %172 {strides = array<i32>} : memref<128x128xf32, #tpu.memory_space<vmem>>, vector<128x128xf32>,
    return
  }
  func.func @transform_0(%arg0: i32) -> (i32, i32) {
    %c0_i32 = arith.constant 0 : i32
    %c0_i32_0 = arith.constant 0 : i32
    return %arg0, %c0_i32 : i32, i32
  }
  func.func @transform_1(%arg0: i32) -> (i32, i32) {
    %c0_i32 = arith.constant 0 : i32
    %c0_i32_0 = arith.constant 0 : i32
    %c0_i32_1 = arith.constant 0 : i32
    return %c0_i32, %c0_i32_0 : i32, i32
  }
  func.func @transform_2(%arg0: i32) -> (i32, i32) {
    %c0_i32 = arith.constant 0 : i32
    %c0_i32_0 = arith.constant 0 : i32
    %c0_i32_1 = arith.constant 0 : i32
    return %c0_i32, %c0_i32_0 : i32, i32
  }
  func.func @transform_3(%arg0: i32) -> (i32, i32) {
    %c0_i32 = arith.constant 0 : i32
    %c0_i32_0 = arith.constant 0 : i32
    %c0_i32_1 = arith.constant 0 : i32
    return %c0_i32, %c0_i32_0 : i32, i32
  }
  func.func @transform_4(%arg0: i32) -> (i32, i32) {
    %c0_i32 = arith.constant 0 : i32
    %c0_i32_0 = arith.constant 0 : i32
    %c0_i32_1 = arith.constant 0 : i32
    return %c0_i32, %c0_i32_0 : i32, i32
  }
  func.func @transform_5(%arg0: i32) -> (i32, i32) {
    %c0_i32 = arith.constant 0 : i32
    %c0_i32_0 = arith.constant 0 : i32
    %c0_i32_1 = arith.constant 0 : i32
    return %c0_i32, %c0_i32_0 : i32, i32
  }
  func.func @transform_6(%arg0: i32) -> (i32, i32) {
    %c0_i32 = arith.constant 0 : i32
    %c0_i32_0 = arith.constant 0 : i32
    %c0_i32_1 = arith.constant 0 : i32
    return %c0_i32, %c0_i32_0 : i32, i32
  }
  func.func @transform_7(%arg0: i32) -> (i32, i32) {
    %c0_i32 = arith.constant 0 : i32
    %c0_i32_0 = arith.constant 0 : i32
    return %arg0, %c0_i32 : i32, i32
  }
}

</mosaic_0001>

<llo_original>
// kernel: tpu_custom_call.1
$region0: #{tpu_custom_call.1}
  #allocation0 [shape = 'u32[]', space=smem, size = 0x4, offset = 0x4, fixed_abs, tag = 'smem constant byte address 0x4 - core index']
  #allocation1 [shape = 'u32[144,128]{1,0:T(1,128)}', space=vmem, size = 0x12000, scoped, tag = 'internal scratch']
  %s0 = inlined_call_operand.vmem [shape: f32[128,3], index: 0, kind: input, shape index: {}]
  %s1 = inlined_call_operand.hbm [shape: bf16[128,128], index: 1, kind: input, shape index: {}]
  %s2 = inlined_call_operand.hbm [shape: bf16[128,128], index: 2, kind: input, shape index: {}]
  %s3 = inlined_call_operand.vmem [shape: bf16[128,256], index: 3, kind: input, shape index: {}]
  %s4 = inlined_call_operand.hbm [shape: bf16[128,256], index: 4, kind: input, shape index: {}]
  %s5 = inlined_call_operand.hbm [shape: bf16[256,128], index: 5, kind: input, shape index: {}]
  %s6 = inlined_call_operand.vmem [shape: f32[1,128], index: 6, kind: input, shape index: {}]
  %s7 = inlined_call_operand.hbm [shape: f32[128,128], index: 7, kind: output, shape index: {}]
  %s8 = sld [smem:[#allocation0]]
  $region54: #{tpu_custom_call.1} parent=0
    _
  %s10 = ssub.s32 1, %s8
  %s11 = scalar_select 0, %s10, %s8
  $region1: #{tpu_custom_call.1} parent=0
    #allocation2 [shape = 'u8[32768]{0}', space=vmem, size = 0x8000, scoped, tag = 'input window, operand 1, single buffered']
    #allocation3 [shape = 's32[1]{0}', space=sflag, size = 0x4, scoped, tag = 'scoped memory for tpu_custom_call.1']
    #allocation4 [shape = 's32[1]{0}', space=sflag, size = 0x4, scoped, tag = 'scoped memory for tpu_custom_call.1']
    #allocation5 [shape = 'u8[32768]{0}', space=vmem, size = 0x8000, scoped, tag = 'input window, operand 2, single buffered']
    #allocation6 [shape = 's32[1]{0}', space=sflag, size = 0x4, scoped, tag = 'scoped memory for tpu_custom_call.1']
    #allocation7 [shape = 'u8[65536]{0}', space=vmem, size = 0x10000, scoped, tag = 'input window, operand 4, single buffered']
    #allocation8 [shape = 'u8[65536]{0}', space=vmem, size = 0x10000, scoped, tag = 'input window, operand 5, single buffered']
    #allocation9 [shape = 's32[1]{0}', space=sflag, size = 0x4, scoped, tag = 'scoped memory for tpu_custom_call.1']
    #allocation10 [shape = 'u8[65536]{0}', space=vmem, size = 0x10000, scoped, tag = 'output window, operand 0, single buffered']
    %12 = vsyncpa [#allocation3], 0
    %13 = vsyncpa [#allocation6], 0
    %14 = vsyncpa [#allocation9], 0
    %15 = vsyncpa [#allocation4], 0
    // Predicated region
    $region2: #{tpu_custom_call.1} parent=1 // pred_check
      _
    $region3: #{tpu_custom_call.1} parent=1 // pred_check_branch
      %17 = sbr.rel (0) target = $region5
    $region4: #{tpu_custom_call.1} parent=1 // pred_region
      _
    $region5: #{tpu_custom_call.1} parent=1 // pred_fallthru
      _
    // Predicated region
    $region6: #{tpu_custom_call.1} parent=1 // pred_check
      _
    $region7: #{tpu_custom_call.1} parent=1 // pred_check_branch
      %19 = sbr.rel (0) target = $region9
    $region8: #{tpu_custom_call.1} parent=1 // pred_region
      %s21 = ssub.s32 1024, 1024
      %22 = vsyncadd [#allocation3], %s21
      %s23 = sshll.u32 [#allocation2], 4
      %s24 = int_to_ptr.vmem [resolvable:$true] %s23
      %29 = dma.hbm_to_vmem [thread:$0]  %s1, 1024, %s24, [#allocation3], 64, 64, 4
    $region9: #{tpu_custom_call.1} parent=1 // pred_fallthru
      _
    // Predicated region
    $region10: #{tpu_custom_call.1} parent=1 // pred_check
      _
    $region11: #{tpu_custom_call.1} parent=1 // pred_check_branch
      %31 = sbr.rel (0) target = $region13
    $region12: #{tpu_custom_call.1} parent=1 // pred_region
      %s33 = ssub.s32 1024, 1024
      %34 = vsyncadd [#allocation6], %s33
      %s35 = sshll.u32 [#allocation5], 4
      %s36 = int_to_ptr.vmem [resolvable:$true] %s35
      %41 = dma.hbm_to_vmem [thread:$0]  %s2, 1024, %s36, [#allocation6], 64, 64, 4
    $region13: #{tpu_custom_call.1} parent=1 // pred_fallthru
      _
    // Predicated region
    $region14: #{tpu_custom_call.1} parent=1 // pred_check
      _
    $region15: #{tpu_custom_call.1} parent=1 // pred_check_branch
      %43 = sbr.rel (0) target = $region17
    $region16: #{tpu_custom_call.1} parent=1 // pred_region
      _
    $region17: #{tpu_custom_call.1} parent=1 // pred_fallthru
      _
    // Predicated region
    $region18: #{tpu_custom_call.1} parent=1 // pred_check
      _
    $region19: #{tpu_custom_call.1} parent=1 // pred_check_branch
      %45 = sbr.rel (0) target = $region21
    $region20: #{tpu_custom_call.1} parent=1 // pred_region
      %s47 = ssub.s32 2048, 2048
      %48 = vsyncadd [#allocation6], %s47
      %s49 = sshll.u32 [#allocation7], 4
      %s50 = int_to_ptr.vmem [resolvable:$true] %s49
      %55 = dma.hbm_to_vmem [thread:$0]  %s4, 2048, %s50, [#allocation6], 128, 128, 8
    $region21: #{tpu_custom_call.1} parent=1 // pred_fallthru
      _
    // Predicated region
    $region22: #{tpu_custom_call.1} parent=1 // pred_check
      _
    $region23: #{tpu_custom_call.1} parent=1 // pred_check_branch
      %57 = sbr.rel (0) target = $region25
    $region24: #{tpu_custom_call.1} parent=1 // pred_region
      %s59 = ssub.s32 2048, 2048
      %60 = vsyncadd [#allocation9], %s59
      %s61 = sshll.u32 [#allocation8], 4
      %s62 = int_to_ptr.vmem [resolvable:$true] %s61
      %67 = dma.hbm_to_vmem [thread:$0]  %s5, 2048, %s62, [#allocation9], 64, 64, 4
    $region25: #{tpu_custom_call.1} parent=1 // pred_fallthru
      _
    // Predicated region
    $region26: #{tpu_custom_call.1} parent=1 // pred_check
      _
    $region27: #{tpu_custom_call.1} parent=1 // pred_check_branch
      %69 = sbr.rel (0) target = $region29
    $region28: #{tpu_custom_call.1} parent=1 // pred_region
      _
    $region29: #{tpu_custom_call.1} parent=1 // pred_fallthru
      _
    // Predicated region
    $region30: #{tpu_custom_call.1} parent=1 // pred_check
      _
    $region31: #{tpu_custom_call.1} parent=1 // pred_check_branch
      %71 = sbr.rel (0) target = $region33
    $region32: #{tpu_custom_call.1} parent=1 // pred_region
      %72 = dma.done [#allocation3], 1024
    $region33: #{tpu_custom_call.1} parent=1 // pred_fallthru
      _
    // Predicated region
    $region34: #{tpu_custom_call.1} parent=1 // pred_check
      _
    $region35: #{tpu_custom_call.1} parent=1 // pred_check_branch
      %74 = sbr.rel (0) target = $region37
    $region36: #{tpu_custom_call.1} parent=1 // pred_region
      %75 = dma.done [#allocation6], 1024
    $region37: #{tpu_custom_call.1} parent=1 // pred_fallthru
      _
    // Predicated region
    $region38: #{tpu_custom_call.1} parent=1 // pred_check
      _
    $region39: #{tpu_custom_call.1} parent=1 // pred_check_branch
      %77 = sbr.rel (0) target = $region41
    $region40: #{tpu_custom_call.1} parent=1 // pred_region
      %78 = dma.done [#allocation6], 2048
    $region41: #{tpu_custom_call.1} parent=1 // pred_fallthru
      _
    // Predicated region
    $region42: #{tpu_custom_call.1} parent=1 // pred_check
      _
    $region43: #{tpu_custom_call.1} parent=1 // pred_check_branch
      %80 = sbr.rel (0) target = $region45
    $region44: #{tpu_custom_call.1} parent=1 // pred_region
      %81 = dma.done [#allocation9], 2048
    $region45: #{tpu_custom_call.1} parent=1 // pred_fallthru
      _
    %v83 = vld [vmem:[%s0] sm:$0xff]
    %v84 = vld [vmem:[%s0 + $0x8] sm:$0xff]
    %v85 = vld [vmem:[%s0 + $0x10] sm:$0xff]
    %v86 = vld [vmem:[%s0 + $0x18] sm:$0xff]
    %v87 = vld [vmem:[%s0 + $0x20] sm:$0xff]
    %v88 = vld [vmem:[%s0 + $0x28] sm:$0xff]
    %v89 = vld [vmem:[%s0 + $0x30] sm:$0xff]
    %v90 = vld [vmem:[%s0 + $0x38] sm:$0xff]
    %v91 = vld [vmem:[%s0 + $0x40] sm:$0xff]
    %v92 = vld [vmem:[%s0 + $0x48] sm:$0xff]
    %v93 = vld [vmem:[%s0 + $0x50] sm:$0xff]
    %v94 = vld [vmem:[%s0 + $0x58] sm:$0xff]
    %v95 = vld [vmem:[%s0 + $0x60] sm:$0xff]
    %v96 = vld [vmem:[%s0 + $0x68] sm:$0xff]
    %v97 = vld [vmem:[%s0 + $0x70] sm:$0xff]
    %v98 = vld [vmem:[%s0 + $0x78] sm:$0xff]
    %v99 = vmul.f32 %v83, 0.5
    %v100 = vmul.f32 %v84, 0.5
    %v101 = vmul.f32 %v85, 0.5
    %v102 = vmul.f32 %v86, 0.5
    %v103 = vmul.f32 %v87, 0.5
    %v104 = vmul.f32 %v88, 0.5
    %v105 = vmul.f32 %v89, 0.5
    %v106 = vmul.f32 %v90, 0.5
    %v107 = vmul.f32 %v91, 0.5
    %v108 = vmul.f32 %v92, 0.5
    %v109 = vmul.f32 %v93, 0.5
    %v110 = vmul.f32 %v94, 0.5
    %v111 = vmul.f32 %v95, 0.5
    %v112 = vmul.f32 %v96, 0.5
    %v113 = vmul.f32 %v97, 0.5
    %v114 = vmul.f32 %v98, 0.5
    %v115 = vadd.f32 %v99, 0.5
    %v116 = vadd.f32 %v100, 0.5
    %v117 = vadd.f32 %v101, 0.5
    %v118 = vadd.f32 %v102, 0.5
    %v119 = vadd.f32 %v103, 0.5
    %v120 = vadd.f32 %v104, 0.5
    %v121 = vadd.f32 %v105, 0.5
    %v122 = vadd.f32 %v106, 0.5
    %v123 = vadd.f32 %v107, 0.5
    %v124 = vadd.f32 %v108, 0.5
    %v125 = vadd.f32 %v109, 0.5
    %v126 = vadd.f32 %v110, 0.5
    %v127 = vadd.f32 %v111, 0.5
    %v128 = vadd.f32 %v112, 0.5
    %v129 = vadd.f32 %v113, 0.5
    %v130 = vadd.f32 %v114, 0.5
    %v131 = vmax.f32 %v115, 0.0
    %v132 = vmax.f32 %v116, 0.0
    %v133 = vmax.f32 %v117, 0.0
    %v134 = vmax.f32 %v118, 0.0
    %v135 = vmax.f32 %v119, 0.0
    %v136 = vmax.f32 %v120, 0.0
    %v137 = vmax.f32 %v121, 0.0
    %v138 = vmax.f32 %v122, 0.0
    %v139 = vmax.f32 %v123, 0.0
    %v140 = vmax.f32 %v124, 0.0
    %v141 = vmax.f32 %v125, 0.0
    %v142 = vmax.f32 %v126, 0.0
    %v143 = vmax.f32 %v127, 0.0
    %v144 = vmax.f32 %v128, 0.0
    %v145 = vmax.f32 %v129, 0.0
    %v146 = vmax.f32 %v130, 0.0
    %v147 = vmin.f32 %v131, 1.0
    %v148 = vmin.f32 %v132, 1.0
    %v149 = vmin.f32 %v133, 1.0
    %v150 = vmin.f32 %v134, 1.0
    %v151 = vmin.f32 %v135, 1.0
    %v152 = vmin.f32 %v136, 1.0
    %v153 = vmin.f32 %v137, 1.0
    %v154 = vmin.f32 %v138, 1.0
    %v155 = vmin.f32 %v139, 1.0
    %v156 = vmin.f32 %v140, 1.0
    %v157 = vmin.f32 %v141, 1.0
    %v158 = vmin.f32 %v142, 1.0
    %v159 = vmin.f32 %v143, 1.0
    %v160 = vmin.f32 %v144, 1.0
    %v161 = vmin.f32 %v145, 1.0
    %v162 = vmin.f32 %v146, 1.0
    %v163 = vmul.f32 %v147, 8.0
    %v164 = vmul.f32 %v148, 8.0
    %v165 = vmul.f32 %v149, 8.0
    %v166 = vmul.f32 %v150, 8.0
    %v167 = vmul.f32 %v151, 8.0
    %v168 = vmul.f32 %v152, 8.0
    %v169 = vmul.f32 %v153, 8.0
    %v170 = vmul.f32 %v154, 8.0
    %v171 = vmul.f32 %v155, 8.0
    %v172 = vmul.f32 %v156, 8.0
    %v173 = vmul.f32 %v157, 8.0
    %v174 = vmul.f32 %v158, 8.0
    %v175 = vmul.f32 %v159, 8.0
    %v176 = vmul.f32 %v160, 8.0
    %v177 = vmul.f32 %v161, 8.0
    %v178 = vmul.f32 %v162, 8.0
    %v179 = vfloor.f32 %v163
    %v180 = vfloor.f32 %v164
    %v181 = vfloor.f32 %v165
    %v182 = vfloor.f32 %v166
    %v183 = vfloor.f32 %v167
    %v184 = vfloor.f32 %v168
    %v185 = vfloor.f32 %v169
    %v186 = vfloor.f32 %v170
    %v187 = vfloor.f32 %v171
    %v188 = vfloor.f32 %v172
    %v189 = vfloor.f32 %v173
    %v190 = vfloor.f32 %v174
    %v191 = vfloor.f32 %v175
    %v192 = vfloor.f32 %v176
    %v193 = vfloor.f32 %v177
    %v194 = vfloor.f32 %v178
    %v195 = vmax.f32 %v179, 1.0
    %v196 = vmax.f32 %v180, 1.0
    %v197 = vmax.f32 %v181, 1.0
    %v198 = vmax.f32 %v182, 1.0
    %v199 = vmax.f32 %v183, 1.0
    %v200 = vmax.f32 %v184, 1.0
    %v201 = vmax.f32 %v185, 1.0
    %v202 = vmax.f32 %v186, 1.0
    %v203 = vmax.f32 %v187, 1.0
    %v204 = vmax.f32 %v188, 1.0
    %v205 = vmax.f32 %v189, 1.0
    %v206 = vmax.f32 %v190, 1.0
    %v207 = vmax.f32 %v191, 1.0
    %v208 = vmax.f32 %v192, 1.0
    %v209 = vmax.f32 %v193, 1.0
    %v210 = vmax.f32 %v194, 1.0
    %v211 = vmin.f32 %v195, 6.0
    %v212 = vmin.f32 %v196, 6.0
    %v213 = vmin.f32 %v197, 6.0
    %v214 = vmin.f32 %v198, 6.0
    %v215 = vmin.f32 %v199, 6.0
    %v216 = vmin.f32 %v200, 6.0
    %v217 = vmin.f32 %v201, 6.0
    %v218 = vmin.f32 %v202, 6.0
    %v219 = vmin.f32 %v203, 6.0
    %v220 = vmin.f32 %v204, 6.0
    %v221 = vmin.f32 %v205, 6.0
    %v222 = vmin.f32 %v206, 6.0
    %v223 = vmin.f32 %v207, 6.0
    %v224 = vmin.f32 %v208, 6.0
    %v225 = vmin.f32 %v209, 6.0
    %v226 = vmin.f32 %v210, 6.0
    %v227 = vsub.f32 %v163, %v211
    %v228 = vsub.f32 %v164, %v212
    %v229 = vsub.f32 %v165, %v213
    %v230 = vsub.f32 %v166, %v214
    %v231 = vsub.f32 %v167, %v215
    %v232 = vsub.f32 %v168, %v216
    %v233 = vsub.f32 %v169, %v217
    %v234 = vsub.f32 %v170, %v218
    %v235 = vsub.f32 %v171, %v219
    %v236 = vsub.f32 %v172, %v220
    %v237 = vsub.f32 %v173, %v221
    %v238 = vsub.f32 %v174, %v222
    %v239 = vsub.f32 %v175, %v223
    %v240 = vsub.f32 %v176, %v224
    %v241 = vsub.f32 %v177, %v225
    %v242 = vsub.f32 %v178, %v226
    %v243 = vcvt.f32.s32.to.zero.pseudo %v211
    %v244 = vcvt.f32.s32.to.zero.pseudo %v212
    %v245 = vcvt.f32.s32.to.zero.pseudo %v213
    %v246 = vcvt.f32.s32.to.zero.pseudo %v214
    %v247 = vcvt.f32.s32.to.zero.pseudo %v215
    %v248 = vcvt.f32.s32.to.zero.pseudo %v216
    %v249 = vcvt.f32.s32.to.zero.pseudo %v217
    %v250 = vcvt.f32.s32.to.zero.pseudo %v218
    %v251 = vcvt.f32.s32.to.zero.pseudo %v219
    %v252 = vcvt.f32.s32.to.zero.pseudo %v220
    %v253 = vcvt.f32.s32.to.zero.pseudo %v221
    %v254 = vcvt.f32.s32.to.zero.pseudo %v222
    %v255 = vcvt.f32.s32.to.zero.pseudo %v223
    %v256 = vcvt.f32.s32.to.zero.pseudo %v224
    %v257 = vcvt.f32.s32.to.zero.pseudo %v225
    %v258 = vcvt.f32.s32.to.zero.pseudo %v226
    %v259 = vmul.f32 %v227, %v227
    %v260 = vmul.f32 %v228, %v228
    %v261 = vmul.f32 %v229, %v229
    %v262 = vmul.f32 %v230, %v230
    %v263 = vmul.f32 %v231, %v231
    %v264 = vmul.f32 %v232, %v232
    %v265 = vmul.f32 %v233, %v233
    %v266 = vmul.f32 %v234, %v234
    %v267 = vmul.f32 %v235, %v235
    %v268 = vmul.f32 %v236, %v236
    %v269 = vmul.f32 %v237, %v237
    %v270 = vmul.f32 %v238, %v238
    %v271 = vmul.f32 %v239, %v239
    %v272 = vmul.f32 %v240, %v240
    %v273 = vmul.f32 %v241, %v241
    %v274 = vmul.f32 %v242, %v242
    %v275 = vmul.f32 %v259, %v227
    %v276 = vmul.f32 %v260, %v228
    %v277 = vmul.f32 %v261, %v229
    %v278 = vmul.f32 %v262, %v230
    %v279 = vmul.f32 %v263, %v231
    %v280 = vmul.f32 %v264, %v232
    %v281 = vmul.f32 %v265, %v233
    %v282 = vmul.f32 %v266, %v234
    %v283 = vmul.f32 %v267, %v235
    %v284 = vmul.f32 %v268, %v236
    %v285 = vmul.f32 %v269, %v237
    %v286 = vmul.f32 %v270, %v238
    %v287 = vmul.f32 %v271, %v239
    %v288 = vmul.f32 %v272, %v240
    %v289 = vmul.f32 %v273, %v241
    %v290 = vmul.f32 %v274, %v242
    %v291 = vmul.f32 %v227, -0.5
    %v292 = vmul.f32 %v228, -0.5
    %v293 = vmul.f32 %v229, -0.5
    %v294 = vmul.f32 %v230, -0.5
    %v295 = vmul.f32 %v231, -0.5
    %v296 = vmul.f32 %v232, -0.5
    %v297 = vmul.f32 %v233, -0.5
    %v298 = vmul.f32 %v234, -0.5
    %v299 = vmul.f32 %v235, -0.5
    %v300 = vmul.f32 %v236, -0.5
    %v301 = vmul.f32 %v237, -0.5
    %v302 = vmul.f32 %v238, -0.5
    %v303 = vmul.f32 %v239, -0.5
    %v304 = vmul.f32 %v240, -0.5
    %v305 = vmul.f32 %v241, -0.5
    %v306 = vmul.f32 %v242, -0.5
    %v307 = vadd.f32 %v291, 0.16666667
    %v308 = vadd.f32 %v292, 0.16666667
    %v309 = vadd.f32 %v293, 0.16666667
    %v310 = vadd.f32 %v294, 0.16666667
    %v311 = vadd.f32 %v295, 0.16666667
    %v312 = vadd.f32 %v296, 0.16666667
    %v313 = vadd.f32 %v297, 0.16666667
    %v314 = vadd.f32 %v298, 0.16666667
    %v315 = vadd.f32 %v299, 0.16666667
    %v316 = vadd.f32 %v300, 0.16666667
    %v317 = vadd.f32 %v301, 0.16666667
    %v318 = vadd.f32 %v302, 0.16666667
    %v319 = vadd.f32 %v303, 0.16666667
    %v320 = vadd.f32 %v304, 0.16666667
    %v321 = vadd.f32 %v305, 0.16666667
    %v322 = vadd.f32 %v306, 0.16666667
    %v323 = vmul.f32 %v259, 0.5
    %v324 = vmul.f32 %v260, 0.5
    %v325 = vmul.f32 %v261, 0.5
    %v326 = vmul.f32 %v262, 0.5
    %v327 = vmul.f32 %v263, 0.5
    %v328 = vmul.f32 %v264, 0.5
    %v329 = vmul.f32 %v265, 0.5
    %v330 = vmul.f32 %v266, 0.5
    %v331 = vmul.f32 %v267, 0.5
    %v332 = vmul.f32 %v268, 0.5
    %v333 = vmul.f32 %v269, 0.5
    %v334 = vmul.f32 %v270, 0.5
    %v335 = vmul.f32 %v271, 0.5
    %v336 = vmul.f32 %v272, 0.5
    %v337 = vmul.f32 %v273, 0.5
    %v338 = vmul.f32 %v274, 0.5
    %v339 = vadd.f32 %v307, %v323
    %v340 = vadd.f32 %v308, %v324
    %v341 = vadd.f32 %v309, %v325
    %v342 = vadd.f32 %v310, %v326
    %v343 = vadd.f32 %v311, %v327
    %v344 = vadd.f32 %v312, %v328
    %v345 = vadd.f32 %v313, %v329
    %v346 = vadd.f32 %v314, %v330
    %v347 = vadd.f32 %v315, %v331
    %v348 = vadd.f32 %v316, %v332
    %v349 = vadd.f32 %v317, %v333
    %v350 = vadd.f32 %v318, %v334
    %v351 = vadd.f32 %v319, %v335
    %v352 = vadd.f32 %v320, %v336
    %v353 = vadd.f32 %v321, %v337
    %v354 = vadd.f32 %v322, %v338
    %v355 = vmul.f32 %v275, -0.16666667
    %v356 = vmul.f32 %v276, -0.16666667
    %v357 = vmul.f32 %v277, -0.16666667
    %v358 = vmul.f32 %v278, -0.16666667
    %v359 = vmul.f32 %v279, -0.16666667
    %v360 = vmul.f32 %v280, -0.16666667
    %v361 = vmul.f32 %v281, -0.16666667
    %v362 = vmul.f32 %v282, -0.16666667
    %v363 = vmul.f32 %v283, -0.16666667
    %v364 = vmul.f32 %v284, -0.16666667
    %v365 = vmul.f32 %v285, -0.16666667
    %v366 = vmul.f32 %v286, -0.16666667
    %v367 = vmul.f32 %v287, -0.16666667
    %v368 = vmul.f32 %v288, -0.16666667
    %v369 = vmul.f32 %v289, -0.16666667
    %v370 = vmul.f32 %v290, -0.16666667
    %v371 = vadd.f32 %v339, %v355
    %v372 = vadd.f32 %v340, %v356
    %v373 = vadd.f32 %v341, %v357
    %v374 = vadd.f32 %v342, %v358
    %v375 = vadd.f32 %v343, %v359
    %v376 = vadd.f32 %v344, %v360
    %v377 = vadd.f32 %v345, %v361
    %v378 = vadd.f32 %v346, %v362
    %v379 = vadd.f32 %v347, %v363
    %v380 = vadd.f32 %v348, %v364
    %v381 = vadd.f32 %v349, %v365
    %v382 = vadd.f32 %v350, %v366
    %v383 = vadd.f32 %v351, %v367
    %v384 = vadd.f32 %v352, %v368
    %v385 = vadd.f32 %v353, %v369
    %v386 = vadd.f32 %v354, %v370
    %v387 = vmul.f32 %v227, 0.0
    %v388 = vmul.f32 %v228, 0.0
    %v389 = vmul.f32 %v229, 0.0
    %v390 = vmul.f32 %v230, 0.0
    %v391 = vmul.f32 %v231, 0.0
    %v392 = vmul.f32 %v232, 0.0
    %v393 = vmul.f32 %v233, 0.0
    %v394 = vmul.f32 %v234, 0.0
    %v395 = vmul.f32 %v235, 0.0
    %v396 = vmul.f32 %v236, 0.0
    %v397 = vmul.f32 %v237, 0.0
    %v398 = vmul.f32 %v238, 0.0
    %v399 = vmul.f32 %v239, 0.0
    %v400 = vmul.f32 %v240, 0.0
    %v401 = vmul.f32 %v241, 0.0
    %v402 = vmul.f32 %v242, 0.0
    %v403 = vadd.f32 %v387, 0.6666667
    %v404 = vadd.f32 %v388, 0.6666667
    %v405 = vadd.f32 %v389, 0.6666667
    %v406 = vadd.f32 %v390, 0.6666667
    %v407 = vadd.f32 %v391, 0.6666667
    %v408 = vadd.f32 %v392, 0.6666667
    %v409 = vadd.f32 %v393, 0.6666667
    %v410 = vadd.f32 %v394, 0.6666667
    %v411 = vadd.f32 %v395, 0.6666667
    %v412 = vadd.f32 %v396, 0.6666667
    %v413 = vadd.f32 %v397, 0.6666667
    %v414 = vadd.f32 %v398, 0.6666667
    %v415 = vadd.f32 %v399, 0.6666667
    %v416 = vadd.f32 %v400, 0.6666667
    %v417 = vadd.f32 %v401, 0.6666667
    %v418 = vadd.f32 %v402, 0.6666667
    %v419 = vmul.f32 %v259, -1.0
    %v420 = vmul.f32 %v260, -1.0
    %v421 = vmul.f32 %v261, -1.0
    %v422 = vmul.f32 %v262, -1.0
    %v423 = vmul.f32 %v263, -1.0
    %v424 = vmul.f32 %v264, -1.0
    %v425 = vmul.f32 %v265, -1.0
    %v426 = vmul.f32 %v266, -1.0
    %v427 = vmul.f32 %v267, -1.0
    %v428 = vmul.f32 %v268, -1.0
    %v429 = vmul.f32 %v269, -1.0
    %v430 = vmul.f32 %v270, -1.0
    %v431 = vmul.f32 %v271, -1.0
    %v432 = vmul.f32 %v272, -1.0
    %v433 = vmul.f32 %v273, -1.0
    %v434 = vmul.f32 %v274, -1.0
    %v435 = vadd.f32 %v403, %v419
    %v436 = vadd.f32 %v404, %v420
    %v437 = vadd.f32 %v405, %v421
    %v438 = vadd.f32 %v406, %v422
    %v439 = vadd.f32 %v407, %v423
    %v440 = vadd.f32 %v408, %v424
    %v441 = vadd.f32 %v409, %v425
    %v442 = vadd.f32 %v410, %v426
    %v443 = vadd.f32 %v411, %v427
    %v444 = vadd.f32 %v412, %v428
    %v445 = vadd.f32 %v413, %v429
    %v446 = vadd.f32 %v414, %v430
    %v447 = vadd.f32 %v415, %v431
    %v448 = vadd.f32 %v416, %v432
    %v449 = vadd.f32 %v417, %v433
    %v450 = vadd.f32 %v418, %v434
    %v451 = vmul.f32 %v275, 0.5
    %v452 = vmul.f32 %v276, 0.5
    %v453 = vmul.f32 %v277, 0.5
    %v454 = vmul.f32 %v278, 0.5
    %v455 = vmul.f32 %v279, 0.5
    %v456 = vmul.f32 %v280, 0.5
    %v457 = vmul.f32 %v281, 0.5
    %v458 = vmul.f32 %v282, 0.5
    %v459 = vmul.f32 %v283, 0.5
    %v460 = vmul.f32 %v284, 0.5
    %v461 = vmul.f32 %v285, 0.5
    %v462 = vmul.f32 %v286, 0.5
    %v463 = vmul.f32 %v287, 0.5
    %v464 = vmul.f32 %v288, 0.5
    %v465 = vmul.f32 %v289, 0.5
    %v466 = vmul.f32 %v290, 0.5
    %v467 = vadd.f32 %v435, %v451
    %v468 = vadd.f32 %v436, %v452
    %v469 = vadd.f32 %v437, %v453
    %v470 = vadd.f32 %v438, %v454
    %v471 = vadd.f32 %v439, %v455
    %v472 = vadd.f32 %v440, %v456
    %v473 = vadd.f32 %v441, %v457
    %v474 = vadd.f32 %v442, %v458
    %v475 = vadd.f32 %v443, %v459
    %v476 = vadd.f32 %v444, %v460
    %v477 = vadd.f32 %v445, %v461
    %v478 = vadd.f32 %v446, %v462
    %v479 = vadd.f32 %v447, %v463
    %v480 = vadd.f32 %v448, %v464
    %v481 = vadd.f32 %v449, %v465
    %v482 = vadd.f32 %v450, %v466
    %v483 = vmul.f32 %v227, 0.5
    %v484 = vmul.f32 %v228, 0.5
    %v485 = vmul.f32 %v229, 0.5
    %v486 = vmul.f32 %v230, 0.5
    %v487 = vmul.f32 %v231, 0.5
    %v488 = vmul.f32 %v232, 0.5
    %v489 = vmul.f32 %v233, 0.5
    %v490 = vmul.f32 %v234, 0.5
    %v491 = vmul.f32 %v235, 0.5
    %v492 = vmul.f32 %v236, 0.5
    %v493 = vmul.f32 %v237, 0.5
    %v494 = vmul.f32 %v238, 0.5
    %v495 = vmul.f32 %v239, 0.5
    %v496 = vmul.f32 %v240, 0.5
    %v497 = vmul.f32 %v241, 0.5
    %v498 = vmul.f32 %v242, 0.5
    %v499 = vadd.f32 %v483, 0.16666667
    %v500 = vadd.f32 %v484, 0.16666667
    %v501 = vadd.f32 %v485, 0.16666667
    %v502 = vadd.f32 %v486, 0.16666667
    %v503 = vadd.f32 %v487, 0.16666667
    %v504 = vadd.f32 %v488, 0.16666667
    %v505 = vadd.f32 %v489, 0.16666667
    %v506 = vadd.f32 %v490, 0.16666667
    %v507 = vadd.f32 %v491, 0.16666667
    %v508 = vadd.f32 %v492, 0.16666667
    %v509 = vadd.f32 %v493, 0.16666667
    %v510 = vadd.f32 %v494, 0.16666667
    %v511 = vadd.f32 %v495, 0.16666667
    %v512 = vadd.f32 %v496, 0.16666667
    %v513 = vadd.f32 %v497, 0.16666667
    %v514 = vadd.f32 %v498, 0.16666667
    %v515 = vadd.f32 %v499, %v323
    %v516 = vadd.f32 %v500, %v324
    %v517 = vadd.f32 %v501, %v325
    %v518 = vadd.f32 %v502, %v326
    %v519 = vadd.f32 %v503, %v327
    %v520 = vadd.f32 %v504, %v328
    %v521 = vadd.f32 %v505, %v329
    %v522 = vadd.f32 %v506, %v330
    %v523 = vadd.f32 %v507, %v331
    %v524 = vadd.f32 %v508, %v332
    %v525 = vadd.f32 %v509, %v333
    %v526 = vadd.f32 %v510, %v334
    %v527 = vadd.f32 %v511, %v335
    %v528 = vadd.f32 %v512, %v336
    %v529 = vadd.f32 %v513, %v337
    %v530 = vadd.f32 %v514, %v338
    %v531 = vmul.f32 %v275, -0.5
    %v532 = vmul.f32 %v276, -0.5
    %v533 = vmul.f32 %v277, -0.5
    %v534 = vmul.f32 %v278, -0.5
    %v535 = vmul.f32 %v279, -0.5
    %v536 = vmul.f32 %v280, -0.5
    %v537 = vmul.f32 %v281, -0.5
    %v538 = vmul.f32 %v282, -0.5
    %v539 = vmul.f32 %v283, -0.5
    %v540 = vmul.f32 %v284, -0.5
    %v541 = vmul.f32 %v285, -0.5
    %v542 = vmul.f32 %v286, -0.5
    %v543 = vmul.f32 %v287, -0.5
    %v544 = vmul.f32 %v288, -0.5
    %v545 = vmul.f32 %v289, -0.5
    %v546 = vmul.f32 %v290, -0.5
    %v547 = vadd.f32 %v515, %v531
    %v548 = vadd.f32 %v516, %v532
    %v549 = vadd.f32 %v517, %v533
    %v550 = vadd.f32 %v518, %v534
    %v551 = vadd.f32 %v519, %v535
    %v552 = vadd.f32 %v520, %v536
    %v553 = vadd.f32 %v521, %v537
    %v554 = vadd.f32 %v522, %v538
    %v555 = vadd.f32 %v523, %v539
    %v556 = vadd.f32 %v524, %v540
    %v557 = vadd.f32 %v525, %v541
    %v558 = vadd.f32 %v526, %v542
    %v559 = vadd.f32 %v527, %v543
    %v560 = vadd.f32 %v528, %v544
    %v561 = vadd.f32 %v529, %v545
    %v562 = vadd.f32 %v530, %v546
    %v563 = vadd.f32 %v387, 0.0
    %v564 = vadd.f32 %v388, 0.0
    %v565 = vadd.f32 %v389, 0.0
    %v566 = vadd.f32 %v390, 0.0
    %v567 = vadd.f32 %v391, 0.0
    %v568 = vadd.f32 %v392, 0.0
    %v569 = vadd.f32 %v393, 0.0
    %v570 = vadd.f32 %v394, 0.0
    %v571 = vadd.f32 %v395, 0.0
    %v572 = vadd.f32 %v396, 0.0
    %v573 = vadd.f32 %v397, 0.0
    %v574 = vadd.f32 %v398, 0.0
    %v575 = vadd.f32 %v399, 0.0
    %v576 = vadd.f32 %v400, 0.0
    %v577 = vadd.f32 %v401, 0.0
    %v578 = vadd.f32 %v402, 0.0
    %v579 = vmul.f32 %v259, 0.0
    %v580 = vmul.f32 %v260, 0.0
    %v581 = vmul.f32 %v261, 0.0
    %v582 = vmul.f32 %v262, 0.0
    %v583 = vmul.f32 %v263, 0.0
    %v584 = vmul.f32 %v264, 0.0
    %v585 = vmul.f32 %v265, 0.0
    %v586 = vmul.f32 %v266, 0.0
    %v587 = vmul.f32 %v267, 0.0
    %v588 = vmul.f32 %v268, 0.0
    %v589 = vmul.f32 %v269, 0.0
    %v590 = vmul.f32 %v270, 0.0
    %v591 = vmul.f32 %v271, 0.0
    %v592 = vmul.f32 %v272, 0.0
    %v593 = vmul.f32 %v273, 0.0
    %v594 = vmul.f32 %v274, 0.0
    %v595 = vadd.f32 %v563, %v579
    %v596 = vadd.f32 %v564, %v580
    %v597 = vadd.f32 %v565, %v581
    %v598 = vadd.f32 %v566, %v582
    %v599 = vadd.f32 %v567, %v583
    %v600 = vadd.f32 %v568, %v584
    %v601 = vadd.f32 %v569, %v585
    %v602 = vadd.f32 %v570, %v586
    %v603 = vadd.f32 %v571, %v587
    %v604 = vadd.f32 %v572, %v588
    %v605 = vadd.f32 %v573, %v589
    %v606 = vadd.f32 %v574, %v590
    %v607 = vadd.f32 %v575, %v591
    %v608 = vadd.f32 %v576, %v592
    %v609 = vadd.f32 %v577, %v593
    %v610 = vadd.f32 %v578, %v594
    %v611 = vmul.f32 %v275, 0.16666667
    %v612 = vmul.f32 %v276, 0.16666667
    %v613 = vmul.f32 %v277, 0.16666667
    %v614 = vmul.f32 %v278, 0.16666667
    %v615 = vmul.f32 %v279, 0.16666667
    %v616 = vmul.f32 %v280, 0.16666667
    %v617 = vmul.f32 %v281, 0.16666667
    %v618 = vmul.f32 %v282, 0.16666667
    %v619 = vmul.f32 %v283, 0.16666667
    %v620 = vmul.f32 %v284, 0.16666667
    %v621 = vmul.f32 %v285, 0.16666667
    %v622 = vmul.f32 %v286, 0.16666667
    %v623 = vmul.f32 %v287, 0.16666667
    %v624 = vmul.f32 %v288, 0.16666667
    %v625 = vmul.f32 %v289, 0.16666667
    %v626 = vmul.f32 %v290, 0.16666667
    %v627 = vadd.f32 %v595, %v611
    %v628 = vadd.f32 %v596, %v612
    %v629 = vadd.f32 %v597, %v613
    %v630 = vadd.f32 %v598, %v614
    %v631 = vadd.f32 %v599, %v615
    %v632 = vadd.f32 %v600, %v616
    %v633 = vadd.f32 %v601, %v617
    %v634 = vadd.f32 %v602, %v618
    %v635 = vadd.f32 %v603, %v619
    %v636 = vadd.f32 %v604, %v620
    %v637 = vadd.f32 %v605, %v621
    %v638 = vadd.f32 %v606, %v622
    %v639 = vadd.f32 %v607, %v623
    %v640 = vadd.f32 %v608, %v624
    %v641 = vadd.f32 %v609, %v625
    %v642 = vadd.f32 %v610, %v626
    %v643 = vlaneseq
    %v644 = vand.u32 %v643, 127
    %645 = vset.pattern.permute.xlu0 0
    %646 = vperm.xlu0 %645, %v243
    %v647 = vpop.permute.xlu0 %646
    %648 = vset.pattern.permute.xlu0 0
    %649 = vperm.xlu0 %648, %v244
    %v650 = vpop.permute.xlu0 %649
    %651 = vset.pattern.permute.xlu0 0
    %652 = vperm.xlu0 %651, %v245
    %v653 = vpop.permute.xlu0 %652
    %654 = vset.pattern.permute.xlu0 0
    %655 = vperm.xlu0 %654, %v246
    %v656 = vpop.permute.xlu0 %655
    %657 = vset.pattern.permute.xlu0 0
    %658 = vperm.xlu0 %657, %v247
    %v659 = vpop.permute.xlu0 %658
    %660 = vset.pattern.permute.xlu0 0
    %661 = vperm.xlu0 %660, %v248
    %v662 = vpop.permute.xlu0 %661
    %663 = vset.pattern.permute.xlu0 0
    %664 = vperm.xlu0 %663, %v249
    %v665 = vpop.permute.xlu0 %664
    %666 = vset.pattern.permute.xlu0 0
    %667 = vperm.xlu0 %666, %v250
    %v668 = vpop.permute.xlu0 %667
    %669 = vset.pattern.permute.xlu0 0
    %670 = vperm.xlu0 %669, %v251
    %v671 = vpop.permute.xlu0 %670
    %672 = vset.pattern.permute.xlu0 0
    %673 = vperm.xlu0 %672, %v252
    %v674 = vpop.permute.xlu0 %673
    %675 = vset.pattern.permute.xlu0 0
    %676 = vperm.xlu0 %675, %v253
    %v677 = vpop.permute.xlu0 %676
    %678 = vset.pattern.permute.xlu0 0
    %679 = vperm.xlu0 %678, %v254
    %v680 = vpop.permute.xlu0 %679
    %681 = vset.pattern.permute.xlu0 0
    %682 = vperm.xlu0 %681, %v255
    %v683 = vpop.permute.xlu0 %682
    %684 = vset.pattern.permute.xlu0 0
    %685 = vperm.xlu0 %684, %v256
    %v686 = vpop.permute.xlu0 %685
    %687 = vset.pattern.permute.xlu0 0
    %688 = vperm.xlu0 %687, %v257
    %v689 = vpop.permute.xlu0 %688
    %690 = vset.pattern.permute.xlu0 0
    %691 = vperm.xlu0 %690, %v258
    %v692 = vpop.permute.xlu0 %691
    %v693 = vsub.s32 %v644, %v647
    %v694 = vsub.s32 %v644, %v650
    %v695 = vsub.s32 %v644, %v653
    %v696 = vsub.s32 %v644, %v656
    %v697 = vsub.s32 %v644, %v659
    %v698 = vsub.s32 %v644, %v662
    %v699 = vsub.s32 %v644, %v665
    %v700 = vsub.s32 %v644, %v668
    %v701 = vsub.s32 %v644, %v671
    %v702 = vsub.s32 %v644, %v674
    %v703 = vsub.s32 %v644, %v677
    %v704 = vsub.s32 %v644, %v680
    %v705 = vsub.s32 %v644, %v683
    %v706 = vsub.s32 %v644, %v686
    %v707 = vsub.s32 %v644, %v689
    %v708 = vsub.s32 %v644, %v692
    %v709 = vadd.s32 %v693, 1
    %v710 = vadd.s32 %v694, 1
    %v711 = vadd.s32 %v695, 1
    %v712 = vadd.s32 %v696, 1
    %v713 = vadd.s32 %v697, 1
    %v714 = vadd.s32 %v698, 1
    %v715 = vadd.s32 %v699, 1
    %v716 = vadd.s32 %v700, 1
    %v717 = vadd.s32 %v701, 1
    %v718 = vadd.s32 %v702, 1
    %v719 = vadd.s32 %v703, 1
    %v720 = vadd.s32 %v704, 1
    %v721 = vadd.s32 %v705, 1
    %v722 = vadd.s32 %v706, 1
    %v723 = vadd.s32 %v707, 1
    %v724 = vadd.s32 %v708, 1
    %vm725 = vcmp.eq.s32.totalorder %v709, 0
    %vm726 = vcmp.eq.s32.totalorder %v710, 0
    %vm727 = vcmp.eq.s32.totalorder %v711, 0
    %vm728 = vcmp.eq.s32.totalorder %v712, 0
    %vm729 = vcmp.eq.s32.totalorder %v713, 0
    %vm730 = vcmp.eq.s32.totalorder %v714, 0
    %vm731 = vcmp.eq.s32.totalorder %v715, 0
    %vm732 = vcmp.eq.s32.totalorder %v716, 0
    %vm733 = vcmp.eq.s32.totalorder %v717, 0
    %vm734 = vcmp.eq.s32.totalorder %v718, 0
    %vm735 = vcmp.eq.s32.totalorder %v719, 0
    %vm736 = vcmp.eq.s32.totalorder %v720, 0
    %vm737 = vcmp.eq.s32.totalorder %v721, 0
    %vm738 = vcmp.eq.s32.totalorder %v722, 0
    %vm739 = vcmp.eq.s32.totalorder %v723, 0
    %vm740 = vcmp.eq.s32.totalorder %v724, 0
    %vm741 = vcmp.eq.s32.totalorder %v709, 1
    %vm742 = vcmp.eq.s32.totalorder %v710, 1
    %vm743 = vcmp.eq.s32.totalorder %v711, 1
    %vm744 = vcmp.eq.s32.totalorder %v712, 1
    %vm745 = vcmp.eq.s32.totalorder %v713, 1
    %vm746 = vcmp.eq.s32.totalorder %v714, 1
    %vm747 = vcmp.eq.s32.totalorder %v715, 1
    %vm748 = vcmp.eq.s32.totalorder %v716, 1
    %vm749 = vcmp.eq.s32.totalorder %v717, 1
    %vm750 = vcmp.eq.s32.totalorder %v718, 1
    %vm751 = vcmp.eq.s32.totalorder %v719, 1
    %vm752 = vcmp.eq.s32.totalorder %v720, 1
    %vm753 = vcmp.eq.s32.totalorder %v721, 1
    %vm754 = vcmp.eq.s32.totalorder %v722, 1
    %vm755 = vcmp.eq.s32.totalorder %v723, 1
    %vm756 = vcmp.eq.s32.totalorder %v724, 1
    %vm757 = vcmp.eq.s32.totalorder %v709, 2
    %vm758 = vcmp.eq.s32.totalorder %v710, 2
    %vm759 = vcmp.eq.s32.totalorder %v711, 2
    %vm760 = vcmp.eq.s32.totalorder %v712, 2
    %vm761 = vcmp.eq.s32.totalorder %v713, 2
    %vm762 = vcmp.eq.s32.totalorder %v714, 2
    %vm763 = vcmp.eq.s32.totalorder %v715, 2
    %vm764 = vcmp.eq.s32.totalorder %v716, 2
    %vm765 = vcmp.eq.s32.totalorder %v717, 2
    %vm766 = vcmp.eq.s32.totalorder %v718, 2
    %vm767 = vcmp.eq.s32.totalorder %v719, 2
    %vm768 = vcmp.eq.s32.totalorder %v720, 2
    %vm769 = vcmp.eq.s32.totalorder %v721, 2
    %vm770 = vcmp.eq.s32.totalorder %v722, 2
    %vm771 = vcmp.eq.s32.totalorder %v723, 2
    %vm772 = vcmp.eq.s32.totalorder %v724, 2
    %vm773 = vcmp.eq.s32.totalorder %v709, 3
    %vm774 = vcmp.eq.s32.totalorder %v710, 3
    %vm775 = vcmp.eq.s32.totalorder %v711, 3
    %vm776 = vcmp.eq.s32.totalorder %v712, 3
    %vm777 = vcmp.eq.s32.totalorder %v713, 3
    %vm778 = vcmp.eq.s32.totalorder %v714, 3
    %vm779 = vcmp.eq.s32.totalorder %v715, 3
    %vm780 = vcmp.eq.s32.totalorder %v716, 3
    %vm781 = vcmp.eq.s32.totalorder %v717, 3
    %vm782 = vcmp.eq.s32.totalorder %v718, 3
    %vm783 = vcmp.eq.s32.totalorder %v719, 3
    %vm784 = vcmp.eq.s32.totalorder %v720, 3
    %vm785 = vcmp.eq.s32.totalorder %v721, 3
    %vm786 = vcmp.eq.s32.totalorder %v722, 3
    %vm787 = vcmp.eq.s32.totalorder %v723, 3
    %vm788 = vcmp.eq.s32.totalorder %v724, 3
    %790 = vset.pattern.permute.xlu0 0
    %791 = vperm.xlu0 %790, %v627
    %v792 = vpop.permute.xlu0 %791
    %795 = vset.pattern.permute.xlu0 0
    %796 = vperm.xlu0 %795, %v628
    %v797 = vpop.permute.xlu0 %796
    %800 = vset.pattern.permute.xlu0 0
    %801 = vperm.xlu0 %800, %v629
    %v802 = vpop.permute.xlu0 %801
    %805 = vset.pattern.permute.xlu0 0
    %806 = vperm.xlu0 %805, %v630
    %v807 = vpop.permute.xlu0 %806
    %810 = vset.pattern.permute.xlu0 0
    %811 = vperm.xlu0 %810, %v631
    %v812 = vpop.permute.xlu0 %811
    %815 = vset.pattern.permute.xlu0 0
    %816 = vperm.xlu0 %815, %v632
    %v817 = vpop.permute.xlu0 %816
    %820 = vset.pattern.permute.xlu0 0
    %821 = vperm.xlu0 %820, %v633
    %v822 = vpop.permute.xlu0 %821
    %825 = vset.pattern.permute.xlu0 0
    %826 = vperm.xlu0 %825, %v634
    %v827 = vpop.permute.xlu0 %826
    %830 = vset.pattern.permute.xlu0 0
    %831 = vperm.xlu0 %830, %v635
    %v832 = vpop.permute.xlu0 %831
    %835 = vset.pattern.permute.xlu0 0
    %836 = vperm.xlu0 %835, %v636
    %v837 = vpop.permute.xlu0 %836
    %840 = vset.pattern.permute.xlu0 0
    %841 = vperm.xlu0 %840, %v637
    %v842 = vpop.permute.xlu0 %841
    %845 = vset.pattern.permute.xlu0 0
    %846 = vperm.xlu0 %845, %v638
    %v847 = vpop.permute.xlu0 %846
    %850 = vset.pattern.permute.xlu0 0
    %851 = vperm.xlu0 %850, %v639
    %v852 = vpop.permute.xlu0 %851
    %855 = vset.pattern.permute.xlu0 0
    %856 = vperm.xlu0 %855, %v640
    %v857 = vpop.permute.xlu0 %856
    %860 = vset.pattern.permute.xlu0 0
    %861 = vperm.xlu0 %860, %v641
    %v862 = vpop.permute.xlu0 %861
    %865 = vset.pattern.permute.xlu0 0
    %866 = vperm.xlu0 %865, %v642
    %v867 = vpop.permute.xlu0 %866
    %v869 = vsel %vm773, %v792, 0.0
    %v870 = vsel %vm774, %v797, 0.0
    %v871 = vsel %vm775, %v802, 0.0
    %v872 = vsel %vm776, %v807, 0.0
    %v873 = vsel %vm777, %v812, 0.0
    %v874 = vsel %vm778, %v817, 0.0
    %v875 = vsel %vm779, %v822, 0.0
    %v876 = vsel %vm780, %v827, 0.0
    %v877 = vsel %vm781, %v832, 0.0
    %v878 = vsel %vm782, %v837, 0.0
    %v879 = vsel %vm783, %v842, 0.0
    %v880 = vsel %vm784, %v847, 0.0
    %v881 = vsel %vm785, %v852, 0.0
    %v882 = vsel %vm786, %v857, 0.0
    %v883 = vsel %vm787, %v862, 0.0
    %v884 = vsel %vm788, %v867, 0.0
    %886 = vset.pattern.permute.xlu0 0
    %887 = vperm.xlu0 %886, %v547
    %v888 = vpop.permute.xlu0 %887
    %891 = vset.pattern.permute.xlu0 0
    %892 = vperm.xlu0 %891, %v548
    %v893 = vpop.permute.xlu0 %892
    %896 = vset.pattern.permute.xlu0 0
    %897 = vperm.xlu0 %896, %v549
    %v898 = vpop.permute.xlu0 %897
    %901 = vset.pattern.permute.xlu0 0
    %902 = vperm.xlu0 %901, %v550
    %v903 = vpop.permute.xlu0 %902
    %906 = vset.pattern.permute.xlu0 0
    %907 = vperm.xlu0 %906, %v551
    %v908 = vpop.permute.xlu0 %907
    %911 = vset.pattern.permute.xlu0 0
    %912 = vperm.xlu0 %911, %v552
    %v913 = vpop.permute.xlu0 %912
    %916 = vset.pattern.permute.xlu0 0
    %917 = vperm.xlu0 %916, %v553
    %v918 = vpop.permute.xlu0 %917
    %921 = vset.pattern.permute.xlu0 0
    %922 = vperm.xlu0 %921, %v554
    %v923 = vpop.permute.xlu0 %922
    %926 = vset.pattern.permute.xlu0 0
    %927 = vperm.xlu0 %926, %v555
    %v928 = vpop.permute.xlu0 %927
    %931 = vset.pattern.permute.xlu0 0
    %932 = vperm.xlu0 %931, %v556
    %v933 = vpop.permute.xlu0 %932
    %936 = vset.pattern.permute.xlu0 0
    %937 = vperm.xlu0 %936, %v557
    %v938 = vpop.permute.xlu0 %937
    %941 = vset.pattern.permute.xlu0 0
    %942 = vperm.xlu0 %941, %v558
    %v943 = vpop.permute.xlu0 %942
    %946 = vset.pattern.permute.xlu0 0
    %947 = vperm.xlu0 %946, %v559
    %v948 = vpop.permute.xlu0 %947
    %951 = vset.pattern.permute.xlu0 0
    %952 = vperm.xlu0 %951, %v560
    %v953 = vpop.permute.xlu0 %952
    %956 = vset.pattern.permute.xlu0 0
    %957 = vperm.xlu0 %956, %v561
    %v958 = vpop.permute.xlu0 %957
    %961 = vset.pattern.permute.xlu0 0
    %962 = vperm.xlu0 %961, %v562
    %v963 = vpop.permute.xlu0 %962
    %v965 = vsel %vm757, %v888, %v869
    %v966 = vsel %vm758, %v893, %v870
    %v967 = vsel %vm759, %v898, %v871
    %v968 = vsel %vm760, %v903, %v872
    %v969 = vsel %vm761, %v908, %v873
    %v970 = vsel %vm762, %v913, %v874
    %v971 = vsel %vm763, %v918, %v875
    %v972 = vsel %vm764, %v923, %v876
    %v973 = vsel %vm765, %v928, %v877
    %v974 = vsel %vm766, %v933, %v878
    %v975 = vsel %vm767, %v938, %v879
    %v976 = vsel %vm768, %v943, %v880
    %v977 = vsel %vm769, %v948, %v881
    %v978 = vsel %vm770, %v953, %v882
    %v979 = vsel %vm771, %v958, %v883
    %v980 = vsel %vm772, %v963, %v884
    %982 = vset.pattern.permute.xlu0 0
    %983 = vperm.xlu0 %982, %v467
    %v984 = vpop.permute.xlu0 %983
    %987 = vset.pattern.permute.xlu0 0
    %988 = vperm.xlu0 %987, %v468
    %v989 = vpop.permute.xlu0 %988
    %992 = vset.pattern.permute.xlu0 0
    %993 = vperm.xlu0 %992, %v469
    %v994 = vpop.permute.xlu0 %993
    %997 = vset.pattern.permute.xlu0 0
    %998 = vperm.xlu0 %997, %v470
    %v999 = vpop.permute.xlu0 %998
    %1002 = vset.pattern.permute.xlu0 0
    %1003 = vperm.xlu0 %1002, %v471
    %v1004 = vpop.permute.xlu0 %1003
    %1007 = vset.pattern.permute.xlu0 0
    %1008 = vperm.xlu0 %1007, %v472
    %v1009 = vpop.permute.xlu0 %1008
    %1012 = vset.pattern.permute.xlu0 0
    %1013 = vperm.xlu0 %1012, %v473
    %v1014 = vpop.permute.xlu0 %1013
    %1017 = vset.pattern.permute.xlu0 0
    %1018 = vperm.xlu0 %1017, %v474
    %v1019 = vpop.permute.xlu0 %1018
    %1022 = vset.pattern.permute.xlu0 0
    %1023 = vperm.xlu0 %1022, %v475
    %v1024 = vpop.permute.xlu0 %1023
    %1027 = vset.pattern.permute.xlu0 0
    %1028 = vperm.xlu0 %1027, %v476
    %v1029 = vpop.permute.xlu0 %1028
    %1032 = vset.pattern.permute.xlu0 0
    %1033 = vperm.xlu0 %1032, %v477
    %v1034 = vpop.permute.xlu0 %1033
    %1037 = vset.pattern.permute.xlu0 0
    %1038 = vperm.xlu0 %1037, %v478
    %v1039 = vpop.permute.xlu0 %1038
    %1042 = vset.pattern.permute.xlu0 0
    %1043 = vperm.xlu0 %1042, %v479
    %v1044 = vpop.permute.xlu0 %1043
    %1047 = vset.pattern.permute.xlu0 0
    %1048 = vperm.xlu0 %1047, %v480
    %v1049 = vpop.permute.xlu0 %1048
    %1052 = vset.pattern.permute.xlu0 0
    %1053 = vperm.xlu0 %1052, %v481
    %v1054 = vpop.permute.xlu0 %1053
    %1057 = vset.pattern.permute.xlu0 0
    %1058 = vperm.xlu0 %1057, %v482
    %v1059 = vpop.permute.xlu0 %1058
    %v1061 = vsel %vm741, %v984, %v965
    %v1062 = vsel %vm742, %v989, %v966
    %v1063 = vsel %vm743, %v994, %v967
    %v1064 = vsel %vm744, %v999, %v968
    %v1065 = vsel %vm745, %v1004, %v969
    %v1066 = vsel %vm746, %v1009, %v970
    %v1067 = vsel %vm747, %v1014, %v971
    %v1068 = vsel %vm748, %v1019, %v972
    %v1069 = vsel %vm749, %v1024, %v973
    %v1070 = vsel %vm750, %v1029, %v974
    %v1071 = vsel %vm751, %v1034, %v975
    %v1072 = vsel %vm752, %v1039, %v976
    %v1073 = vsel %vm753, %v1044, %v977
    %v1074 = vsel %vm754, %v1049, %v978
    %v1075 = vsel %vm755, %v1054, %v979
    %v1076 = vsel %vm756, %v1059, %v980
    %1078 = vset.pattern.permute.xlu0 0
    %1079 = vperm.xlu0 %1078, %v371
    %v1080 = vpop.permute.xlu0 %1079
    %1083 = vset.pattern.permute.xlu0 0
    %1084 = vperm.xlu0 %1083, %v372
    %v1085 = vpop.permute.xlu0 %1084
    %1088 = vset.pattern.permute.xlu0 0
    %1089 = vperm.xlu0 %1088, %v373
    %v1090 = vpop.permute.xlu0 %1089
    %1093 = vset.pattern.permute.xlu0 0
    %1094 = vperm.xlu0 %1093, %v374
    %v1095 = vpop.permute.xlu0 %1094
    %1098 = vset.pattern.permute.xlu0 0
    %1099 = vperm.xlu0 %1098, %v375
    %v1100 = vpop.permute.xlu0 %1099
    %1103 = vset.pattern.permute.xlu0 0
    %1104 = vperm.xlu0 %1103, %v376
    %v1105 = vpop.permute.xlu0 %1104
    %1108 = vset.pattern.permute.xlu0 0
    %1109 = vperm.xlu0 %1108, %v377
    %v1110 = vpop.permute.xlu0 %1109
    %1113 = vset.pattern.permute.xlu0 0
    %1114 = vperm.xlu0 %1113, %v378
    %v1115 = vpop.permute.xlu0 %1114
    %1118 = vset.pattern.permute.xlu0 0
    %1119 = vperm.xlu0 %1118, %v379
    %v1120 = vpop.permute.xlu0 %1119
    %1123 = vset.pattern.permute.xlu0 0
    %1124 = vperm.xlu0 %1123, %v380
    %v1125 = vpop.permute.xlu0 %1124
    %1128 = vset.pattern.permute.xlu0 0
    %1129 = vperm.xlu0 %1128, %v381
    %v1130 = vpop.permute.xlu0 %1129
    %1133 = vset.pattern.permute.xlu0 0
    %1134 = vperm.xlu0 %1133, %v382
    %v1135 = vpop.permute.xlu0 %1134
    %1138 = vset.pattern.permute.xlu0 0
    %1139 = vperm.xlu0 %1138, %v383
    %v1140 = vpop.permute.xlu0 %1139
    %1143 = vset.pattern.permute.xlu0 0
    %1144 = vperm.xlu0 %1143, %v384
    %v1145 = vpop.permute.xlu0 %1144
    %1148 = vset.pattern.permute.xlu0 0
    %1149 = vperm.xlu0 %1148, %v385
    %v1150 = vpop.permute.xlu0 %1149
    %1153 = vset.pattern.permute.xlu0 0
    %1154 = vperm.xlu0 %1153, %v386
    %v1155 = vpop.permute.xlu0 %1154
    %v1157 = vsel %vm725, %v1080, %v1061
    %v1158 = vsel %vm726, %v1085, %v1062
    %v1159 = vsel %vm727, %v1090, %v1063
    %v1160 = vsel %vm728, %v1095, %v1064
    %v1161 = vsel %vm729, %v1100, %v1065
    %v1162 = vsel %vm730, %v1105, %v1066
    %v1163 = vsel %vm731, %v1110, %v1067
    %v1164 = vsel %vm732, %v1115, %v1068
    %v1165 = vsel %vm733, %v1120, %v1069
    %v1166 = vsel %vm734, %v1125, %v1070
    %v1167 = vsel %vm735, %v1130, %v1071
    %v1168 = vsel %vm736, %v1135, %v1072
    %v1169 = vsel %vm737, %v1140, %v1073
    %v1170 = vsel %vm738, %v1145, %v1074
    %v1171 = vsel %vm739, %v1150, %v1075
    %v1172 = vsel %vm740, %v1155, %v1076
    %v1173 = vpack.c.bf16 %v1158, %v1157
    %v1174 = vpack.c.bf16 %v1160, %v1159
    %v1175 = vpack.c.bf16 %v1162, %v1161
    %v1176 = vpack.c.bf16 %v1164, %v1163
    %v1177 = vpack.c.bf16 %v1166, %v1165
    %v1178 = vpack.c.bf16 %v1168, %v1167
    %v1179 = vpack.c.bf16 %v1170, %v1169
    %v1180 = vpack.c.bf16 %v1172, %v1171
    %1181 = vset.pattern.permute.xlu0 1
    %1182 = vperm.xlu0 %1181, %v243
    %v1183 = vpop.permute.xlu0 %1182
    %1184 = vset.pattern.permute.xlu0 1
    %1185 = vperm.xlu0 %1184, %v244
    %v1186 = vpop.permute.xlu0 %1185
    %1187 = vset.pattern.permute.xlu0 1
    %1188 = vperm.xlu0 %1187, %v245
    %v1189 = vpop.permute.xlu0 %1188
    %1190 = vset.pattern.permute.xlu0 1
    %1191 = vperm.xlu0 %1190, %v246
    %v1192 = vpop.permute.xlu0 %1191
    %1193 = vset.pattern.permute.xlu0 1
    %1194 = vperm.xlu0 %1193, %v247
    %v1195 = vpop.permute.xlu0 %1194
    %1196 = vset.pattern.permute.xlu0 1
    %1197 = vperm.xlu0 %1196, %v248
    %v1198 = vpop.permute.xlu0 %1197
    %1199 = vset.pattern.permute.xlu0 1
    %1200 = vperm.xlu0 %1199, %v249
    %v1201 = vpop.permute.xlu0 %1200
    %1202 = vset.pattern.permute.xlu0 1
    %1203 = vperm.xlu0 %1202, %v250
    %v1204 = vpop.permute.xlu0 %1203
    %1205 = vset.pattern.permute.xlu0 1
    %1206 = vperm.xlu0 %1205, %v251
    %v1207 = vpop.permute.xlu0 %1206
    %1208 = vset.pattern.permute.xlu0 1
    %1209 = vperm.xlu0 %1208, %v252
    %v1210 = vpop.permute.xlu0 %1209
    %1211 = vset.pattern.permute.xlu0 1
    %1212 = vperm.xlu0 %1211, %v253
    %v1213 = vpop.permute.xlu0 %1212
    %1214 = vset.pattern.permute.xlu0 1
    %1215 = vperm.xlu0 %1214, %v254
    %v1216 = vpop.permute.xlu0 %1215
    %1217 = vset.pattern.permute.xlu0 1
    %1218 = vperm.xlu0 %1217, %v255
    %v1219 = vpop.permute.xlu0 %1218
    %1220 = vset.pattern.permute.xlu0 1
    %1221 = vperm.xlu0 %1220, %v256
    %v1222 = vpop.permute.xlu0 %1221
    %1223 = vset.pattern.permute.xlu0 1
    %1224 = vperm.xlu0 %1223, %v257
    %v1225 = vpop.permute.xlu0 %1224
    %1226 = vset.pattern.permute.xlu0 1
    %1227 = vperm.xlu0 %1226, %v258
    %v1228 = vpop.permute.xlu0 %1227
    %v1229 = vsub.s32 %v644, %v1183
    %v1230 = vsub.s32 %v644, %v1186
    %v1231 = vsub.s32 %v644, %v1189
    %v1232 = vsub.s32 %v644, %v1192
    %v1233 = vsub.s32 %v644, %v1195
    %v1234 = vsub.s32 %v644, %v1198
    %v1235 = vsub.s32 %v644, %v1201
    %v1236 = vsub.s32 %v644, %v1204
    %v1237 = vsub.s32 %v644, %v1207
    %v1238 = vsub.s32 %v644, %v1210
    %v1239 = vsub.s32 %v644, %v1213
    %v1240 = vsub.s32 %v644, %v1216
    %v1241 = vsub.s32 %v644, %v1219
    %v1242 = vsub.s32 %v644, %v1222
    %v1243 = vsub.s32 %v644, %v1225
    %v1244 = vsub.s32 %v644, %v1228
    %v1245 = vadd.s32 %v1229, 1
    %v1246 = vadd.s32 %v1230, 1
    %v1247 = vadd.s32 %v1231, 1
    %v1248 = vadd.s32 %v1232, 1
    %v1249 = vadd.s32 %v1233, 1
    %v1250 = vadd.s32 %v1234, 1
    %v1251 = vadd.s32 %v1235, 1
    %v1252 = vadd.s32 %v1236, 1
    %v1253 = vadd.s32 %v1237, 1
    %v1254 = vadd.s32 %v1238, 1
    %v1255 = vadd.s32 %v1239, 1
    %v1256 = vadd.s32 %v1240, 1
    %v1257 = vadd.s32 %v1241, 1
    %v1258 = vadd.s32 %v1242, 1
    %v1259 = vadd.s32 %v1243, 1
    %v1260 = vadd.s32 %v1244, 1
    %vm1261 = vcmp.eq.s32.totalorder %v1245, 0
    %vm1262 = vcmp.eq.s32.totalorder %v1246, 0
    %vm1263 = vcmp.eq.s32.totalorder %v1247, 0
    %vm1264 = vcmp.eq.s32.totalorder %v1248, 0
    %vm1265 = vcmp.eq.s32.totalorder %v1249, 0
    %vm1266 = vcmp.eq.s32.totalorder %v1250, 0
    %vm1267 = vcmp.eq.s32.totalorder %v1251, 0
    %vm1268 = vcmp.eq.s32.totalorder %v1252, 0
    %vm1269 = vcmp.eq.s32.totalorder %v1253, 0
    %vm1270 = vcmp.eq.s32.totalorder %v1254, 0
    %vm1271 = vcmp.eq.s32.totalorder %v1255, 0
    %vm1272 = vcmp.eq.s32.totalorder %v1256, 0
    %vm1273 = vcmp.eq.s32.totalorder %v1257, 0
    %vm1274 = vcmp.eq.s32.totalorder %v1258, 0
    %vm1275 = vcmp.eq.s32.totalorder %v1259, 0
    %vm1276 = vcmp.eq.s32.totalorder %v1260, 0
    %vm1277 = vcmp.eq.s32.totalorder %v1245, 1
    %vm1278 = vcmp.eq.s32.totalorder %v1246, 1
    %vm1279 = vcmp.eq.s32.totalorder %v1247, 1
    %vm1280 = vcmp.eq.s32.totalorder %v1248, 1
    %vm1281 = vcmp.eq.s32.totalorder %v1249, 1
    %vm1282 = vcmp.eq.s32.totalorder %v1250, 1
    %vm1283 = vcmp.eq.s32.totalorder %v1251, 1
    %vm1284 = vcmp.eq.s32.totalorder %v1252, 1
    %vm1285 = vcmp.eq.s32.totalorder %v1253, 1
    %vm1286 = vcmp.eq.s32.totalorder %v1254, 1
    %vm1287 = vcmp.eq.s32.totalorder %v1255, 1
    %vm1288 = vcmp.eq.s32.totalorder %v1256, 1
    %vm1289 = vcmp.eq.s32.totalorder %v1257, 1
    %vm1290 = vcmp.eq.s32.totalorder %v1258, 1
    %vm1291 = vcmp.eq.s32.totalorder %v1259, 1
    %vm1292 = vcmp.eq.s32.totalorder %v1260, 1
    %vm1293 = vcmp.eq.s32.totalorder %v1245, 2
    %vm1294 = vcmp.eq.s32.totalorder %v1246, 2
    %vm1295 = vcmp.eq.s32.totalorder %v1247, 2
    %vm1296 = vcmp.eq.s32.totalorder %v1248, 2
    %vm1297 = vcmp.eq.s32.totalorder %v1249, 2
    %vm1298 = vcmp.eq.s32.totalorder %v1250, 2
    %vm1299 = vcmp.eq.s32.totalorder %v1251, 2
    %vm1300 = vcmp.eq.s32.totalorder %v1252, 2
    %vm1301 = vcmp.eq.s32.totalorder %v1253, 2
    %vm1302 = vcmp.eq.s32.totalorder %v1254, 2
    %vm1303 = vcmp.eq.s32.totalorder %v1255, 2
    %vm1304 = vcmp.eq.s32.totalorder %v1256, 2
    %vm1305 = vcmp.eq.s32.totalorder %v1257, 2
    %vm1306 = vcmp.eq.s32.totalorder %v1258, 2
    %vm1307 = vcmp.eq.s32.totalorder %v1259, 2
    %vm1308 = vcmp.eq.s32.totalorder %v1260, 2
    %vm1309 = vcmp.eq.s32.totalorder %v1245, 3
    %vm1310 = vcmp.eq.s32.totalorder %v1246, 3
    %vm1311 = vcmp.eq.s32.totalorder %v1247, 3
    %vm1312 = vcmp.eq.s32.totalorder %v1248, 3
    %vm1313 = vcmp.eq.s32.totalorder %v1249, 3
    %vm1314 = vcmp.eq.s32.totalorder %v1250, 3
    %vm1315 = vcmp.eq.s32.totalorder %v1251, 3
    %vm1316 = vcmp.eq.s32.totalorder %v1252, 3
    %vm1317 = vcmp.eq.s32.totalorder %v1253, 3
    %vm1318 = vcmp.eq.s32.totalorder %v1254, 3
    %vm1319 = vcmp.eq.s32.totalorder %v1255, 3
    %vm1320 = vcmp.eq.s32.totalorder %v1256, 3
    %vm1321 = vcmp.eq.s32.totalorder %v1257, 3
    %vm1322 = vcmp.eq.s32.totalorder %v1258, 3
    %vm1323 = vcmp.eq.s32.totalorder %v1259, 3
    %vm1324 = vcmp.eq.s32.totalorder %v1260, 3
    %1325 = vset.pattern.permute.xlu0 1
    %1326 = vperm.xlu0 %1325, %v627
    %v1327 = vpop.permute.xlu0 %1326
    %1329 = vset.pattern.permute.xlu0 1
    %1330 = vperm.xlu0 %1329, %v628
    %v1331 = vpop.permute.xlu0 %1330
    %1333 = vset.pattern.permute.xlu0 1
    %1334 = vperm.xlu0 %1333, %v629
    %v1335 = vpop.permute.xlu0 %1334
    %1337 = vset.pattern.permute.xlu0 1
    %1338 = vperm.xlu0 %1337, %v630
    %v1339 = vpop.permute.xlu0 %1338
    %1341 = vset.pattern.permute.xlu0 1
    %1342 = vperm.xlu0 %1341, %v631
    %v1343 = vpop.permute.xlu0 %1342
    %1345 = vset.pattern.permute.xlu0 1
    %1346 = vperm.xlu0 %1345, %v632
    %v1347 = vpop.permute.xlu0 %1346
    %1349 = vset.pattern.permute.xlu0 1
    %1350 = vperm.xlu0 %1349, %v633
    %v1351 = vpop.permute.xlu0 %1350
    %1353 = vset.pattern.permute.xlu0 1
    %1354 = vperm.xlu0 %1353, %v634
    %v1355 = vpop.permute.xlu0 %1354
    %1357 = vset.pattern.permute.xlu0 1
    %1358 = vperm.xlu0 %1357, %v635
    %v1359 = vpop.permute.xlu0 %1358
    %1361 = vset.pattern.permute.xlu0 1
    %1362 = vperm.xlu0 %1361, %v636
    %v1363 = vpop.permute.xlu0 %1362
    %1365 = vset.pattern.permute.xlu0 1
    %1366 = vperm.xlu0 %1365, %v637
    %v1367 = vpop.permute.xlu0 %1366
    %1369 = vset.pattern.permute.xlu0 1
    %1370 = vperm.xlu0 %1369, %v638
    %v1371 = vpop.permute.xlu0 %1370
    %1373 = vset.pattern.permute.xlu0 1
    %1374 = vperm.xlu0 %1373, %v639
    %v1375 = vpop.permute.xlu0 %1374
    %1377 = vset.pattern.permute.xlu0 1
    %1378 = vperm.xlu0 %1377, %v640
    %v1379 = vpop.permute.xlu0 %1378
    %1381 = vset.pattern.permute.xlu0 1
    %1382 = vperm.xlu0 %1381, %v641
    %v1383 = vpop.permute.xlu0 %1382
    %1385 = vset.pattern.permute.xlu0 1
    %1386 = vperm.xlu0 %1385, %v642
    %v1387 = vpop.permute.xlu0 %1386
    %v1389 = vsel %vm1309, %v1327, 0.0
    %v1390 = vsel %vm1310, %v1331, 0.0
    %v1391 = vsel %vm1311, %v1335, 0.0
    %v1392 = vsel %vm1312, %v1339, 0.0
    %v1393 = vsel %vm1313, %v1343, 0.0
    %v1394 = vsel %vm1314, %v1347, 0.0
    %v1395 = vsel %vm1315, %v1351, 0.0
    %v1396 = vsel %vm1316, %v1355, 0.0
    %v1397 = vsel %vm1317, %v1359, 0.0
    %v1398 = vsel %vm1318, %v1363, 0.0
    %v1399 = vsel %vm1319, %v1367, 0.0
    %v1400 = vsel %vm1320, %v1371, 0.0
    %v1401 = vsel %vm1321, %v1375, 0.0
    %v1402 = vsel %vm1322, %v1379, 0.0
    %v1403 = vsel %vm1323, %v1383, 0.0
    %v1404 = vsel %vm1324, %v1387, 0.0
    %1405 = vset.pattern.permute.xlu0 1
    %1406 = vperm.xlu0 %1405, %v547
    %v1407 = vpop.permute.xlu0 %1406
    %1409 = vset.pattern.permute.xlu0 1
    %1410 = vperm.xlu0 %1409, %v548
    %v1411 = vpop.permute.xlu0 %1410
    %1413 = vset.pattern.permute.xlu0 1
    %1414 = vperm.xlu0 %1413, %v549
    %v1415 = vpop.permute.xlu0 %1414
    %1417 = vset.pattern.permute.xlu0 1
    %1418 = vperm.xlu0 %1417, %v550
    %v1419 = vpop.permute.xlu0 %1418
    %1421 = vset.pattern.permute.xlu0 1
    %1422 = vperm.xlu0 %1421, %v551
    %v1423 = vpop.permute.xlu0 %1422
    %1425 = vset.pattern.permute.xlu0 1
    %1426 = vperm.xlu0 %1425, %v552
    %v1427 = vpop.permute.xlu0 %1426
    %1429 = vset.pattern.permute.xlu0 1
    %1430 = vperm.xlu0 %1429, %v553
    %v1431 = vpop.permute.xlu0 %1430
    %1433 = vset.pattern.permute.xlu0 1
    %1434 = vperm.xlu0 %1433, %v554
    %v1435 = vpop.permute.xlu0 %1434
    %1437 = vset.pattern.permute.xlu0 1
    %1438 = vperm.xlu0 %1437, %v555
    %v1439 = vpop.permute.xlu0 %1438
    %1441 = vset.pattern.permute.xlu0 1
    %1442 = vperm.xlu0 %1441, %v556
    %v1443 = vpop.permute.xlu0 %1442
    %1445 = vset.pattern.permute.xlu0 1
    %1446 = vperm.xlu0 %1445, %v557
    %v1447 = vpop.permute.xlu0 %1446
    %1449 = vset.pattern.permute.xlu0 1
    %1450 = vperm.xlu0 %1449, %v558
    %v1451 = vpop.permute.xlu0 %1450
    %1453 = vset.pattern.permute.xlu0 1
    %1454 = vperm.xlu0 %1453, %v559
    %v1455 = vpop.permute.xlu0 %1454
    %1457 = vset.pattern.permute.xlu0 1
    %1458 = vperm.xlu0 %1457, %v560
    %v1459 = vpop.permute.xlu0 %1458
    %1461 = vset.pattern.permute.xlu0 1
    %1462 = vperm.xlu0 %1461, %v561
    %v1463 = vpop.permute.xlu0 %1462
    %1465 = vset.pattern.permute.xlu0 1
    %1466 = vperm.xlu0 %1465, %v562
    %v1467 = vpop.permute.xlu0 %1466
    %v1469 = vsel %vm1293, %v1407, %v1389
    %v1470 = vsel %vm1294, %v1411, %v1390
    %v1471 = vsel %vm1295, %v1415, %v1391
    %v1472 = vsel %vm1296, %v1419, %v1392
    %v1473 = vsel %vm1297, %v1423, %v1393
    %v1474 = vsel %vm1298, %v1427, %v1394
    %v1475 = vsel %vm1299, %v1431, %v1395
    %v1476 = vsel %vm1300, %v1435, %v1396
    %v1477 = vsel %vm1301, %v1439, %v1397
    %v1478 = vsel %vm1302, %v1443, %v1398
    %v1479 = vsel %vm1303, %v1447, %v1399
    %v1480 = vsel %vm1304, %v1451, %v1400
    %v1481 = vsel %vm1305, %v1455, %v1401
    %v1482 = vsel %vm1306, %v1459, %v1402
    %v1483 = vsel %vm1307, %v1463, %v1403
    %v1484 = vsel %vm1308, %v1467, %v1404
    %1485 = vset.pattern.permute.xlu0 1
    %1486 = vperm.xlu0 %1485, %v467
    %v1487 = vpop.permute.xlu0 %1486
    %1489 = vset.pattern.permute.xlu0 1
    %1490 = vperm.xlu0 %1489, %v468
    %v1491 = vpop.permute.xlu0 %1490
    %1493 = vset.pattern.permute.xlu0 1
    %1494 = vperm.xlu0 %1493, %v469
    %v1495 = vpop.permute.xlu0 %1494
    %1497 = vset.pattern.permute.xlu0 1
    %1498 = vperm.xlu0 %1497, %v470
    %v1499 = vpop.permute.xlu0 %1498
    %1501 = vset.pattern.permute.xlu0 1
    %1502 = vperm.xlu0 %1501, %v471
    %v1503 = vpop.permute.xlu0 %1502
    %1505 = vset.pattern.permute.xlu0 1
    %1506 = vperm.xlu0 %1505, %v472
    %v1507 = vpop.permute.xlu0 %1506
    %1509 = vset.pattern.permute.xlu0 1
    %1510 = vperm.xlu0 %1509, %v473
    %v1511 = vpop.permute.xlu0 %1510
    %1513 = vset.pattern.permute.xlu0 1
    %1514 = vperm.xlu0 %1513, %v474
    %v1515 = vpop.permute.xlu0 %1514
    %1517 = vset.pattern.permute.xlu0 1
    %1518 = vperm.xlu0 %1517, %v475
    %v1519 = vpop.permute.xlu0 %1518
    %1521 = vset.pattern.permute.xlu0 1
    %1522 = vperm.xlu0 %1521, %v476
    %v1523 = vpop.permute.xlu0 %1522
    %1525 = vset.pattern.permute.xlu0 1
    %1526 = vperm.xlu0 %1525, %v477
    %v1527 = vpop.permute.xlu0 %1526
    %1529 = vset.pattern.permute.xlu0 1
    %1530 = vperm.xlu0 %1529, %v478
    %v1531 = vpop.permute.xlu0 %1530
    %1533 = vset.pattern.permute.xlu0 1
    %1534 = vperm.xlu0 %1533, %v479
    %v1535 = vpop.permute.xlu0 %1534
    %1537 = vset.pattern.permute.xlu0 1
    %1538 = vperm.xlu0 %1537, %v480
    %v1539 = vpop.permute.xlu0 %1538
    %1541 = vset.pattern.permute.xlu0 1
    %1542 = vperm.xlu0 %1541, %v481
    %v1543 = vpop.permute.xlu0 %1542
    %1545 = vset.pattern.permute.xlu0 1
    %1546 = vperm.xlu0 %1545, %v482
    %v1547 = vpop.permute.xlu0 %1546
    %v1549 = vsel %vm1277, %v1487, %v1469
    %v1550 = vsel %vm1278, %v1491, %v1470
    %v1551 = vsel %vm1279, %v1495, %v1471
    %v1552 = vsel %vm1280, %v1499, %v1472
    %v1553 = vsel %vm1281, %v1503, %v1473
    %v1554 = vsel %vm1282, %v1507, %v1474
    %v1555 = vsel %vm1283, %v1511, %v1475
    %v1556 = vsel %vm1284, %v1515, %v1476
    %v1557 = vsel %vm1285, %v1519, %v1477
    %v1558 = vsel %vm1286, %v1523, %v1478
    %v1559 = vsel %vm1287, %v1527, %v1479
    %v1560 = vsel %vm1288, %v1531, %v1480
    %v1561 = vsel %vm1289, %v1535, %v1481
    %v1562 = vsel %vm1290, %v1539, %v1482
    %v1563 = vsel %vm1291, %v1543, %v1483
    %v1564 = vsel %vm1292, %v1547, %v1484
    %1565 = vset.pattern.permute.xlu0 1
    %1566 = vperm.xlu0 %1565, %v371
    %v1567 = vpop.permute.xlu0 %1566
    %1569 = vset.pattern.permute.xlu0 1
    %1570 = vperm.xlu0 %1569, %v372
    %v1571 = vpop.permute.xlu0 %1570
    %1573 = vset.pattern.permute.xlu0 1
    %1574 = vperm.xlu0 %1573, %v373
    %v1575 = vpop.permute.xlu0 %1574
    %1577 = vset.pattern.permute.xlu0 1
    %1578 = vperm.xlu0 %1577, %v374
    %v1579 = vpop.permute.xlu0 %1578
    %1581 = vset.pattern.permute.xlu0 1
    %1582 = vperm.xlu0 %1581, %v375
    %v1583 = vpop.permute.xlu0 %1582
    %1585 = vset.pattern.permute.xlu0 1
    %1586 = vperm.xlu0 %1585, %v376
    %v1587 = vpop.permute.xlu0 %1586
    %1589 = vset.pattern.permute.xlu0 1
    %1590 = vperm.xlu0 %1589, %v377
    %v1591 = vpop.permute.xlu0 %1590
    %1593 = vset.pattern.permute.xlu0 1
    %1594 = vperm.xlu0 %1593, %v378
    %v1595 = vpop.permute.xlu0 %1594
    %1597 = vset.pattern.permute.xlu0 1
    %1598 = vperm.xlu0 %1597, %v379
    %v1599 = vpop.permute.xlu0 %1598
    %1601 = vset.pattern.permute.xlu0 1
    %1602 = vperm.xlu0 %1601, %v380
    %v1603 = vpop.permute.xlu0 %1602
    %1605 = vset.pattern.permute.xlu0 1
    %1606 = vperm.xlu0 %1605, %v381
    %v1607 = vpop.permute.xlu0 %1606
    %1609 = vset.pattern.permute.xlu0 1
    %1610 = vperm.xlu0 %1609, %v382
    %v1611 = vpop.permute.xlu0 %1610
    %1613 = vset.pattern.permute.xlu0 1
    %1614 = vperm.xlu0 %1613, %v383
    %v1615 = vpop.permute.xlu0 %1614
    %1617 = vset.pattern.permute.xlu0 1
    %1618 = vperm.xlu0 %1617, %v384
    %v1619 = vpop.permute.xlu0 %1618
    %1621 = vset.pattern.permute.xlu0 1
    %1622 = vperm.xlu0 %1621, %v385
    %v1623 = vpop.permute.xlu0 %1622
    %1625 = vset.pattern.permute.xlu0 1
    %1626 = vperm.xlu0 %1625, %v386
    %v1627 = vpop.permute.xlu0 %1626
    %v1629 = vsel %vm1261, %v1567, %v1549
    %v1630 = vsel %vm1262, %v1571, %v1550
    %v1631 = vsel %vm1263, %v1575, %v1551
    %v1632 = vsel %vm1264, %v1579, %v1552
    %v1633 = vsel %vm1265, %v1583, %v1553
    %v1634 = vsel %vm1266, %v1587, %v1554
    %v1635 = vsel %vm1267, %v1591, %v1555
    %v1636 = vsel %vm1268, %v1595, %v1556
    %v1637 = vsel %vm1269, %v1599, %v1557
    %v1638 = vsel %vm1270, %v1603, %v1558
    %v1639 = vsel %vm1271, %v1607, %v1559
    %v1640 = vsel %vm1272, %v1611, %v1560
    %v1641 = vsel %vm1273, %v1615, %v1561
    %v1642 = vsel %vm1274, %v1619, %v1562
    %v1643 = vsel %vm1275, %v1623, %v1563
    %v1644 = vsel %vm1276, %v1627, %v1564
    %v1645 = vpack.c.bf16 %v1630, %v1629
    %v1646 = vpack.c.bf16 %v1632, %v1631
    %v1647 = vpack.c.bf16 %v1634, %v1633
    %v1648 = vpack.c.bf16 %v1636, %v1635
    %v1649 = vpack.c.bf16 %v1638, %v1637
    %v1650 = vpack.c.bf16 %v1640, %v1639
    %v1651 = vpack.c.bf16 %v1642, %v1641
    %v1652 = vpack.c.bf16 %v1644, %v1643
    %1653 = vset.pattern.permute.xlu0 2
    %1654 = vperm.xlu0 %1653, %v243
    %v1655 = vpop.permute.xlu0 %1654
    %1656 = vset.pattern.permute.xlu0 2
    %1657 = vperm.xlu0 %1656, %v244
    %v1658 = vpop.permute.xlu0 %1657
    %1659 = vset.pattern.permute.xlu0 2
    %1660 = vperm.xlu0 %1659, %v245
    %v1661 = vpop.permute.xlu0 %1660
    %1662 = vset.pattern.permute.xlu0 2
    %1663 = vperm.xlu0 %1662, %v246
    %v1664 = vpop.permute.xlu0 %1663
    %1665 = vset.pattern.permute.xlu0 2
    %1666 = vperm.xlu0 %1665, %v247
    %v1667 = vpop.permute.xlu0 %1666
    %1668 = vset.pattern.permute.xlu0 2
    %1669 = vperm.xlu0 %1668, %v248
    %v1670 = vpop.permute.xlu0 %1669
    %1671 = vset.pattern.permute.xlu0 2
    %1672 = vperm.xlu0 %1671, %v249
    %v1673 = vpop.permute.xlu0 %1672
    %1674 = vset.pattern.permute.xlu0 2
    %1675 = vperm.xlu0 %1674, %v250
    %v1676 = vpop.permute.xlu0 %1675
    %1677 = vset.pattern.permute.xlu0 2
    %1678 = vperm.xlu0 %1677, %v251
    %v1679 = vpop.permute.xlu0 %1678
    %1680 = vset.pattern.permute.xlu0 2
    %1681 = vperm.xlu0 %1680, %v252
    %v1682 = vpop.permute.xlu0 %1681
    %1683 = vset.pattern.permute.xlu0 2
    %1684 = vperm.xlu0 %1683, %v253
    %v1685 = vpop.permute.xlu0 %1684
    %1686 = vset.pattern.permute.xlu0 2
    %1687 = vperm.xlu0 %1686, %v254
    %v1688 = vpop.permute.xlu0 %1687
    %1689 = vset.pattern.permute.xlu0 2
    %1690 = vperm.xlu0 %1689, %v255
    %v1691 = vpop.permute.xlu0 %1690
    %1692 = vset.pattern.permute.xlu0 2
    %1693 = vperm.xlu0 %1692, %v256
    %v1694 = vpop.permute.xlu0 %1693
    %1695 = vset.pattern.permute.xlu0 2
    %1696 = vperm.xlu0 %1695, %v257
    %v1697 = vpop.permute.xlu0 %1696
    %1698 = vset.pattern.permute.xlu0 2
    %1699 = vperm.xlu0 %1698, %v258
    %v1700 = vpop.permute.xlu0 %1699
    %v1701 = vsub.s32 %v644, %v1655
    %v1702 = vsub.s32 %v644, %v1658
    %v1703 = vsub.s32 %v644, %v1661
    %v1704 = vsub.s32 %v644, %v1664
    %v1705 = vsub.s32 %v644, %v1667
    %v1706 = vsub.s32 %v644, %v1670
    %v1707 = vsub.s32 %v644, %v1673
    %v1708 = vsub.s32 %v644, %v1676
    %v1709 = vsub.s32 %v644, %v1679
    %v1710 = vsub.s32 %v644, %v1682
    %v1711 = vsub.s32 %v644, %v1685
    %v1712 = vsub.s32 %v644, %v1688
    %v1713 = vsub.s32 %v644, %v1691
    %v1714 = vsub.s32 %v644, %v1694
    %v1715 = vsub.s32 %v644, %v1697
    %v1716 = vsub.s32 %v644, %v1700
    %v1717 = vadd.s32 %v1701, 1
    %v1718 = vadd.s32 %v1702, 1
    %v1719 = vadd.s32 %v1703, 1
    %v1720 = vadd.s32 %v1704, 1
    %v1721 = vadd.s32 %v1705, 1
    %v1722 = vadd.s32 %v1706, 1
    %v1723 = vadd.s32 %v1707, 1
    %v1724 = vadd.s32 %v1708, 1
    %v1725 = vadd.s32 %v1709, 1
    %v1726 = vadd.s32 %v1710, 1
    %v1727 = vadd.s32 %v1711, 1
    %v1728 = vadd.s32 %v1712, 1
    %v1729 = vadd.s32 %v1713, 1
    %v1730 = vadd.s32 %v1714, 1
    %v1731 = vadd.s32 %v1715, 1
    %v1732 = vadd.s32 %v1716, 1
    %vm1733 = vcmp.eq.s32.totalorder %v1717, 0
    %vm1734 = vcmp.eq.s32.totalorder %v1718, 0
    %vm1735 = vcmp.eq.s32.totalorder %v1719, 0
    %vm1736 = vcmp.eq.s32.totalorder %v1720, 0
    %vm1737 = vcmp.eq.s32.totalorder %v1721, 0
    %vm1738 = vcmp.eq.s32.totalorder %v1722, 0
    %vm1739 = vcmp.eq.s32.totalorder %v1723, 0
    %vm1740 = vcmp.eq.s32.totalorder %v1724, 0
    %vm1741 = vcmp.eq.s32.totalorder %v1725, 0
    %vm1742 = vcmp.eq.s32.totalorder %v1726, 0
    %vm1743 = vcmp.eq.s32.totalorder %v1727, 0
    %vm1744 = vcmp.eq.s32.totalorder %v1728, 0
    %vm1745 = vcmp.eq.s32.totalorder %v1729, 0
    %vm1746 = vcmp.eq.s32.totalorder %v1730, 0
    %vm1747 = vcmp.eq.s32.totalorder %v1731, 0
    %vm1748 = vcmp.eq.s32.totalorder %v1732, 0
    %vm1749 = vcmp.eq.s32.totalorder %v1717, 1
    %vm1750 = vcmp.eq.s32.totalorder %v1718, 1
    %vm1751 = vcmp.eq.s32.totalorder %v1719, 1
    %vm1752 = vcmp.eq.s32.totalorder %v1720, 1
    %vm1753 = vcmp.eq.s32.totalorder %v1721, 1
    %vm1754 = vcmp.eq.s32.totalorder %v1722, 1
    %vm1755 = vcmp.eq.s32.totalorder %v1723, 1
    %vm1756 = vcmp.eq.s32.totalorder %v1724, 1
    %vm1757 = vcmp.eq.s32.totalorder %v1725, 1
    %vm1758 = vcmp.eq.s32.totalorder %v1726, 1
    %vm1759 = vcmp.eq.s32.totalorder %v1727, 1
    %vm1760 = vcmp.eq.s32.totalorder %v1728, 1
    %vm1761 = vcmp.eq.s32.totalorder %v1729, 1
    %vm1762 = vcmp.eq.s32.totalorder %v1730, 1
    %vm1763 = vcmp.eq.s32.totalorder %v1731, 1
    %vm1764 = vcmp.eq.s32.totalorder %v1732, 1
    %vm1765 = vcmp.eq.s32.totalorder %v1717, 2
    %vm1766 = vcmp.eq.s32.totalorder %v1718, 2
    %vm1767 = vcmp.eq.s32.totalorder %v1719, 2
    %vm1768 = vcmp.eq.s32.totalorder %v1720, 2
    %vm1769 = vcmp.eq.s32.totalorder %v1721, 2
    %vm1770 = vcmp.eq.s32.totalorder %v1722, 2
    %vm1771 = vcmp.eq.s32.totalorder %v1723, 2
    %vm1772 = vcmp.eq.s32.totalorder %v1724, 2
    %vm1773 = vcmp.eq.s32.totalorder %v1725, 2
    %vm1774 = vcmp.eq.s32.totalorder %v1726, 2
    %vm1775 = vcmp.eq.s32.totalorder %v1727, 2
    %vm1776 = vcmp.eq.s32.totalorder %v1728, 2
    %vm1777 = vcmp.eq.s32.totalorder %v1729, 2
    %vm1778 = vcmp.eq.s32.totalorder %v1730, 2
    %vm1779 = vcmp.eq.s32.totalorder %v1731, 2
    %vm1780 = vcmp.eq.s32.totalorder %v1732, 2
    %vm1781 = vcmp.eq.s32.totalorder %v1717, 3
    %vm1782 = vcmp.eq.s32.totalorder %v1718, 3
    %vm1783 = vcmp.eq.s32.totalorder %v1719, 3
    %vm1784 = vcmp.eq.s32.totalorder %v1720, 3
    %vm1785 = vcmp.eq.s32.totalorder %v1721, 3
    %vm1786 = vcmp.eq.s32.totalorder %v1722, 3
    %vm1787 = vcmp.eq.s32.totalorder %v1723, 3
    %vm1788 = vcmp.eq.s32.totalorder %v1724, 3
    %vm1789 = vcmp.eq.s32.totalorder %v1725, 3
    %vm1790 = vcmp.eq.s32.totalorder %v1726, 3
    %vm1791 = vcmp.eq.s32.totalorder %v1727, 3
    %vm1792 = vcmp.eq.s32.totalorder %v1728, 3
    %vm1793 = vcmp.eq.s32.totalorder %v1729, 3
    %vm1794 = vcmp.eq.s32.totalorder %v1730, 3
    %vm1795 = vcmp.eq.s32.totalorder %v1731, 3
    %vm1796 = vcmp.eq.s32.totalorder %v1732, 3
    %1797 = vset.pattern.permute.xlu0 2
    %1798 = vperm.xlu0 %1797, %v627
    %v1799 = vpop.permute.xlu0 %1798
    %1801 = vset.pattern.permute.xlu0 2
    %1802 = vperm.xlu0 %1801, %v628
    %v1803 = vpop.permute.xlu0 %1802
    %1805 = vset.pattern.permute.xlu0 2
    %1806 = vperm.xlu0 %1805, %v629
    %v1807 = vpop.permute.xlu0 %1806
    %1809 = vset.pattern.permute.xlu0 2
    %1810 = vperm.xlu0 %1809, %v630
    %v1811 = vpop.permute.xlu0 %1810
    %1813 = vset.pattern.permute.xlu0 2
    %1814 = vperm.xlu0 %1813, %v631
    %v1815 = vpop.permute.xlu0 %1814
    %1817 = vset.pattern.permute.xlu0 2
    %1818 = vperm.xlu0 %1817, %v632
    %v1819 = vpop.permute.xlu0 %1818
    %1821 = vset.pattern.permute.xlu0 2
    %1822 = vperm.xlu0 %1821, %v633
    %v1823 = vpop.permute.xlu0 %1822
    %1825 = vset.pattern.permute.xlu0 2
    %1826 = vperm.xlu0 %1825, %v634
    %v1827 = vpop.permute.xlu0 %1826
    %1829 = vset.pattern.permute.xlu0 2
    %1830 = vperm.xlu0 %1829, %v635
    %v1831 = vpop.permute.xlu0 %1830
    %1833 = vset.pattern.permute.xlu0 2
    %1834 = vperm.xlu0 %1833, %v636
    %v1835 = vpop.permute.xlu0 %1834
    %1837 = vset.pattern.permute.xlu0 2
    %1838 = vperm.xlu0 %1837, %v637
    %v1839 = vpop.permute.xlu0 %1838
    %1841 = vset.pattern.permute.xlu0 2
    %1842 = vperm.xlu0 %1841, %v638
    %v1843 = vpop.permute.xlu0 %1842
    %1845 = vset.pattern.permute.xlu0 2
    %1846 = vperm.xlu0 %1845, %v639
    %v1847 = vpop.permute.xlu0 %1846
    %1849 = vset.pattern.permute.xlu0 2
    %1850 = vperm.xlu0 %1849, %v640
    %v1851 = vpop.permute.xlu0 %1850
    %1853 = vset.pattern.permute.xlu0 2
    %1854 = vperm.xlu0 %1853, %v641
    %v1855 = vpop.permute.xlu0 %1854
    %1857 = vset.pattern.permute.xlu0 2
    %1858 = vperm.xlu0 %1857, %v642
    %v1859 = vpop.permute.xlu0 %1858
    %v1861 = vsel %vm1781, %v1799, 0.0
    %v1862 = vsel %vm1782, %v1803, 0.0
    %v1863 = vsel %vm1783, %v1807, 0.0
    %v1864 = vsel %vm1784, %v1811, 0.0
    %v1865 = vsel %vm1785, %v1815, 0.0
    %v1866 = vsel %vm1786, %v1819, 0.0
    %v1867 = vsel %vm1787, %v1823, 0.0
    %v1868 = vsel %vm1788, %v1827, 0.0
    %v1869 = vsel %vm1789, %v1831, 0.0
    %v1870 = vsel %vm1790, %v1835, 0.0
    %v1871 = vsel %vm1791, %v1839, 0.0
    %v1872 = vsel %vm1792, %v1843, 0.0
    %v1873 = vsel %vm1793, %v1847, 0.0
    %v1874 = vsel %vm1794, %v1851, 0.0
    %v1875 = vsel %vm1795, %v1855, 0.0
    %v1876 = vsel %vm1796, %v1859, 0.0
    %1877 = vset.pattern.permute.xlu0 2
    %1878 = vperm.xlu0 %1877, %v547
    %v1879 = vpop.permute.xlu0 %1878
    %1881 = vset.pattern.permute.xlu0 2
    %1882 = vperm.xlu0 %1881, %v548
    %v1883 = vpop.permute.xlu0 %1882
    %1885 = vset.pattern.permute.xlu0 2
    %1886 = vperm.xlu0 %1885, %v549
    %v1887 = vpop.permute.xlu0 %1886
    %1889 = vset.pattern.permute.xlu0 2
    %1890 = vperm.xlu0 %1889, %v550
    %v1891 = vpop.permute.xlu0 %1890
    %1893 = vset.pattern.permute.xlu0 2
    %1894 = vperm.xlu0 %1893, %v551
    %v1895 = vpop.permute.xlu0 %1894
    %1897 = vset.pattern.permute.xlu0 2
    %1898 = vperm.xlu0 %1897, %v552
    %v1899 = vpop.permute.xlu0 %1898
    %1901 = vset.pattern.permute.xlu0 2
    %1902 = vperm.xlu0 %1901, %v553
    %v1903 = vpop.permute.xlu0 %1902
    %1905 = vset.pattern.permute.xlu0 2
    %1906 = vperm.xlu0 %1905, %v554
    %v1907 = vpop.permute.xlu0 %1906
    %1909 = vset.pattern.permute.xlu0 2
    %1910 = vperm.xlu0 %1909, %v555
    %v1911 = vpop.permute.xlu0 %1910
    %1913 = vset.pattern.permute.xlu0 2
    %1914 = vperm.xlu0 %1913, %v556
    %v1915 = vpop.permute.xlu0 %1914
    %1917 = vset.pattern.permute.xlu0 2
    %1918 = vperm.xlu0 %1917, %v557
    %v1919 = vpop.permute.xlu0 %1918
    %1921 = vset.pattern.permute.xlu0 2
    %1922 = vperm.xlu0 %1921, %v558
    %v1923 = vpop.permute.xlu0 %1922
    %1925 = vset.pattern.permute.xlu0 2
    %1926 = vperm.xlu0 %1925, %v559
    %v1927 = vpop.permute.xlu0 %1926
    %1929 = vset.pattern.permute.xlu0 2
    %1930 = vperm.xlu0 %1929, %v560
    %v1931 = vpop.permute.xlu0 %1930
    %1933 = vset.pattern.permute.xlu0 2
    %1934 = vperm.xlu0 %1933, %v561
    %v1935 = vpop.permute.xlu0 %1934
    %1937 = vset.pattern.permute.xlu0 2
    %1938 = vperm.xlu0 %1937, %v562
    %v1939 = vpop.permute.xlu0 %1938
    %v1941 = vsel %vm1765, %v1879, %v1861
    %v1942 = vsel %vm1766, %v1883, %v1862
    %v1943 = vsel %vm1767, %v1887, %v1863
    %v1944 = vsel %vm1768, %v1891, %v1864
    %v1945 = vsel %vm1769, %v1895, %v1865
    %v1946 = vsel %vm1770, %v1899, %v1866
    %v1947 = vsel %vm1771, %v1903, %v1867
    %v1948 = vsel %vm1772, %v1907, %v1868
    %v1949 = vsel %vm1773, %v1911, %v1869
    %v1950 = vsel %vm1774, %v1915, %v1870
    %v1951 = vsel %vm1775, %v1919, %v1871
    %v1952 = vsel %vm1776, %v1923, %v1872
    %v1953 = vsel %vm1777, %v1927, %v1873
    %v1954 = vsel %vm1778, %v1931, %v1874
    %v1955 = vsel %vm1779, %v1935, %v1875
    %v1956 = vsel %vm1780, %v1939, %v1876
    %1957 = vset.pattern.permute.xlu0 2
    %1958 = vperm.xlu0 %1957, %v467
    %v1959 = vpop.permute.xlu0 %1958
    %1961 = vset.pattern.permute.xlu0 2
    %1962 = vperm.xlu0 %1961, %v468
    %v1963 = vpop.permute.xlu0 %1962
    %1965 = vset.pattern.permute.xlu0 2
    %1966 = vperm.xlu0 %1965, %v469
    %v1967 = vpop.permute.xlu0 %1966
    %1969 = vset.pattern.permute.xlu0 2
    %1970 = vperm.xlu0 %1969, %v470
    %v1971 = vpop.permute.xlu0 %1970
    %1973 = vset.pattern.permute.xlu0 2
    %1974 = vperm.xlu0 %1973, %v471
    %v1975 = vpop.permute.xlu0 %1974
    %1977 = vset.pattern.permute.xlu0 2
    %1978 = vperm.xlu0 %1977, %v472
    %v1979 = vpop.permute.xlu0 %1978
    %1981 = vset.pattern.permute.xlu0 2
    %1982 = vperm.xlu0 %1981, %v473
    %v1983 = vpop.permute.xlu0 %1982
    %1985 = vset.pattern.permute.xlu0 2
    %1986 = vperm.xlu0 %1985, %v474
    %v1987 = vpop.permute.xlu0 %1986
    %1989 = vset.pattern.permute.xlu0 2
    %1990 = vperm.xlu0 %1989, %v475
    %v1991 = vpop.permute.xlu0 %1990
    %1993 = vset.pattern.permute.xlu0 2
    %1994 = vperm.xlu0 %1993, %v476
    %v1995 = vpop.permute.xlu0 %1994
    %1997 = vset.pattern.permute.xlu0 2
    %1998 = vperm.xlu0 %1997, %v477
    %v1999 = vpop.permute.xlu0 %1998
    %2001 = vset.pattern.permute.xlu0 2
    %2002 = vperm.xlu0 %2001, %v478
    %v2003 = vpop.permute.xlu0 %2002
    %2005 = vset.pattern.permute.xlu0 2
    %2006 = vperm.xlu0 %2005, %v479
    %v2007 = vpop.permute.xlu0 %2006
    %2009 = vset.pattern.permute.xlu0 2
    %2010 = vperm.xlu0 %2009, %v480
    %v2011 = vpop.permute.xlu0 %2010
    %2013 = vset.pattern.permute.xlu0 2
    %2014 = vperm.xlu0 %2013, %v481
    %v2015 = vpop.permute.xlu0 %2014
    %2017 = vset.pattern.permute.xlu0 2
    %2018 = vperm.xlu0 %2017, %v482
    %v2019 = vpop.permute.xlu0 %2018
    %v2021 = vsel %vm1749, %v1959, %v1941
    %v2022 = vsel %vm1750, %v1963, %v1942
    %v2023 = vsel %vm1751, %v1967, %v1943
    %v2024 = vsel %vm1752, %v1971, %v1944
    %v2025 = vsel %vm1753, %v1975, %v1945
    %v2026 = vsel %vm1754, %v1979, %v1946
    %v2027 = vsel %vm1755, %v1983, %v1947
    %v2028 = vsel %vm1756, %v1987, %v1948
    %v2029 = vsel %vm1757, %v1991, %v1949
    %v2030 = vsel %vm1758, %v1995, %v1950
    %v2031 = vsel %vm1759, %v1999, %v1951
    %v2032 = vsel %vm1760, %v2003, %v1952
    %v2033 = vsel %vm1761, %v2007, %v1953
    %v2034 = vsel %vm1762, %v2011, %v1954
    %v2035 = vsel %vm1763, %v2015, %v1955
    %v2036 = vsel %vm1764, %v2019, %v1956
    %2037 = vset.pattern.permute.xlu0 2
    %2038 = vperm.xlu0 %2037, %v371
    %v2039 = vpop.permute.xlu0 %2038
    %2041 = vset.pattern.permute.xlu0 2
    %2042 = vperm.xlu0 %2041, %v372
    %v2043 = vpop.permute.xlu0 %2042
    %2045 = vset.pattern.permute.xlu0 2
    %2046 = vperm.xlu0 %2045, %v373
    %v2047 = vpop.permute.xlu0 %2046
    %2049 = vset.pattern.permute.xlu0 2
    %2050 = vperm.xlu0 %2049, %v374
    %v2051 = vpop.permute.xlu0 %2050
    %2053 = vset.pattern.permute.xlu0 2
    %2054 = vperm.xlu0 %2053, %v375
    %v2055 = vpop.permute.xlu0 %2054
    %2057 = vset.pattern.permute.xlu0 2
    %2058 = vperm.xlu0 %2057, %v376
    %v2059 = vpop.permute.xlu0 %2058
    %2061 = vset.pattern.permute.xlu0 2
    %2062 = vperm.xlu0 %2061, %v377
    %v2063 = vpop.permute.xlu0 %2062
    %2065 = vset.pattern.permute.xlu0 2
    %2066 = vperm.xlu0 %2065, %v378
    %v2067 = vpop.permute.xlu0 %2066
    %2069 = vset.pattern.permute.xlu0 2
    %2070 = vperm.xlu0 %2069, %v379
    %v2071 = vpop.permute.xlu0 %2070
    %2073 = vset.pattern.permute.xlu0 2
    %2074 = vperm.xlu0 %2073, %v380
    %v2075 = vpop.permute.xlu0 %2074
    %2077 = vset.pattern.permute.xlu0 2
    %2078 = vperm.xlu0 %2077, %v381
    %v2079 = vpop.permute.xlu0 %2078
    %2081 = vset.pattern.permute.xlu0 2
    %2082 = vperm.xlu0 %2081, %v382
    %v2083 = vpop.permute.xlu0 %2082
    %2085 = vset.pattern.permute.xlu0 2
    %2086 = vperm.xlu0 %2085, %v383
    %v2087 = vpop.permute.xlu0 %2086
    %2089 = vset.pattern.permute.xlu0 2
    %2090 = vperm.xlu0 %2089, %v384
    %v2091 = vpop.permute.xlu0 %2090
    %2093 = vset.pattern.permute.xlu0 2
    %2094 = vperm.xlu0 %2093, %v385
    %v2095 = vpop.permute.xlu0 %2094
    %2097 = vset.pattern.permute.xlu0 2
    %2098 = vperm.xlu0 %2097, %v386
    %v2099 = vpop.permute.xlu0 %2098
    %v2101 = vsel %vm1733, %v2039, %v2021
    %v2102 = vsel %vm1734, %v2043, %v2022
    %v2103 = vsel %vm1735, %v2047, %v2023
    %v2104 = vsel %vm1736, %v2051, %v2024
    %v2105 = vsel %vm1737, %v2055, %v2025
    %v2106 = vsel %vm1738, %v2059, %v2026
    %v2107 = vsel %vm1739, %v2063, %v2027
    %v2108 = vsel %vm1740, %v2067, %v2028
    %v2109 = vsel %vm1741, %v2071, %v2029
    %v2110 = vsel %vm1742, %v2075, %v2030
    %v2111 = vsel %vm1743, %v2079, %v2031
    %v2112 = vsel %vm1744, %v2083, %v2032
    %v2113 = vsel %vm1745, %v2087, %v2033
    %v2114 = vsel %vm1746, %v2091, %v2034
    %v2115 = vsel %vm1747, %v2095, %v2035
    %v2116 = vsel %vm1748, %v2099, %v2036
    %v2117 = vpack.c.bf16 %v2102, %v2101
    %v2118 = vpack.c.bf16 %v2104, %v2103
    %v2119 = vpack.c.bf16 %v2106, %v2105
    %v2120 = vpack.c.bf16 %v2108, %v2107
    %v2121 = vpack.c.bf16 %v2110, %v2109
    %v2122 = vpack.c.bf16 %v2112, %v2111
    %v2123 = vpack.c.bf16 %v2114, %v2113
    %v2124 = vpack.c.bf16 %v2116, %v2115
    %v2125 = vld [vmem:[#allocation2] sm:$0xf]
    %v2126 = vld [vmem:[#allocation2 + $0x4] sm:$0xf]
    %v2127 = vld [vmem:[#allocation2 + $0x8] sm:$0xf]
    %v2128 = vld [vmem:[#allocation2 + $0xc] sm:$0xf]
    %v2129 = vld [vmem:[#allocation2 + $0x10] sm:$0xf]
    %v2130 = vld [vmem:[#allocation2 + $0x14] sm:$0xf]
    %v2131 = vld [vmem:[#allocation2 + $0x18] sm:$0xf]
    %v2132 = vld [vmem:[#allocation2 + $0x1c] sm:$0xf]
    %v2133 = vld [vmem:[#allocation2 + $0x20] sm:$0xf]
    %v2134 = vld [vmem:[#allocation2 + $0x24] sm:$0xf]
    %v2135 = vld [vmem:[#allocation2 + $0x28] sm:$0xf]
    %v2136 = vld [vmem:[#allocation2 + $0x2c] sm:$0xf]
    %v2137 = vld [vmem:[#allocation2 + $0x30] sm:$0xf]
    %v2138 = vld [vmem:[#allocation2 + $0x34] sm:$0xf]
    %v2139 = vld [vmem:[#allocation2 + $0x38] sm:$0xf]
    %v2140 = vld [vmem:[#allocation2 + $0x3c] sm:$0xf]
    %v2157 = vunpack.c.l.b16 %v2125
    %v2158 = vunpack.c.l.b16 %v2126
    %v2159 = vunpack.c.l.b16 %v2127
    %v2160 = vunpack.c.l.b16 %v2128
    %v2161 = vunpack.c.l.b16 %v2129
    %v2162 = vunpack.c.l.b16 %v2130
    %v2163 = vunpack.c.l.b16 %v2131
    %v2164 = vunpack.c.l.b16 %v2132
    %v2165 = vunpack.c.l.b16 %v2133
    %v2166 = vunpack.c.l.b16 %v2134
    %v2167 = vunpack.c.l.b16 %v2135
    %v2168 = vunpack.c.l.b16 %v2136
    %v2169 = vunpack.c.l.b16 %v2137
    %v2170 = vunpack.c.l.b16 %v2138
    %v2171 = vunpack.c.l.b16 %v2139
    %v2172 = vunpack.c.l.b16 %v2140
    %v2173 = vpack.c.b16 %v2158, %v2157
    %v2174 = vpack.c.b16 %v2160, %v2159
    %v2175 = vpack.c.b16 %v2162, %v2161
    %v2176 = vpack.c.b16 %v2164, %v2163
    %v2177 = vpack.c.b16 %v2166, %v2165
    %v2178 = vpack.c.b16 %v2168, %v2167
    %v2179 = vpack.c.b16 %v2170, %v2169
    %v2180 = vpack.c.b16 %v2172, %v2171
    %2189 = vmatprep.subr.bf16.mxu0 0
    %2190 = vmatpush1.bf16.msra.mxu0 %v2173
    %2191 = vmatprep.subr.bf16.mxu0 0
    %2192 = vmatpush1.bf16.msra.mxu0 %v2174
    %2193 = vmatprep.subr.bf16.mxu0 0
    %2194 = vmatpush1.bf16.msra.mxu0 %v2175
    %2195 = vmatprep.subr.bf16.mxu0 0
    %2196 = vmatpush1.bf16.msra.mxu0 %v2176
    %2197 = vmatprep.subr.bf16.mxu0 0
    %2198 = vmatpush1.bf16.msra.mxu0 %v2177
    %2199 = vmatprep.subr.bf16.mxu0 0
    %2200 = vmatpush1.bf16.msra.mxu0 %v2178
    %2201 = vmatprep.subr.bf16.mxu0 0
    %2202 = vmatpush1.bf16.msra.mxu0 %v2179
    %2203 = vmatprep.subr.bf16.mxu0 0
    %2204 = vmatpush1.bf16.msra.mxu0 %v2180
    %2205 = vmatprep.subr.bf16.mxu0 0
    %2206 = vmatpush1.bf16.msra.mxu0 0
    %2207 = vmatprep.subr.bf16.mxu0 0
    %2208 = vmatpush1.bf16.msra.mxu0 0
    %2209 = vmatprep.subr.bf16.mxu0 0
    %2210 = vmatpush1.bf16.msra.mxu0 0
    %2211 = vmatprep.subr.bf16.mxu0 0
    %2212 = vmatpush1.bf16.msra.mxu0 0
    %2213 = vmatprep.subr.bf16.mxu0 0
    %2214 = vmatpush1.bf16.msra.mxu0 0
    %2215 = vmatprep.subr.bf16.mxu0 0
    %2216 = vmatpush1.bf16.msra.mxu0 0
    %2217 = vmatprep.subr.bf16.mxu0 0
    %2218 = vmatpush1.bf16.msra.mxu0 0
    %2219 = vmatprep.subr.bf16.mxu0 0
    %2220 = vmatpush1.bf16.msra.mxu0 0
    %2221 = vmatprep.mubr.bf16.mxu0 0
    %2222 = vmatmul.mubr.bf16.gmra.mrb[0].mxu0 %v1173
    %v2223 = vpop.f32.mrb[0].mxu0
    %v2224 = vadd.f32 0.0, %v2223
    %v2225 = vpop.f32.mrb[0].mxu0
    %v2226 = vpop.f32.mrb[0].mxu0
    %v2227 = vadd.f32 0.0, %v2226
    %v2228 = vpop.f32.mrb[0].mxu0
    %2229 = vmatprep.mubr.bf16.mxu0 0
    %2230 = vmatmul.mubr.bf16.gmra.mrb[0].mxu0 %v1174
    %v2231 = vpop.f32.mrb[0].mxu0
    %v2232 = vadd.f32 0.0, %v2231
    %v2233 = vpop.f32.mrb[0].mxu0
    %v2234 = vpop.f32.mrb[0].mxu0
    %v2235 = vadd.f32 0.0, %v2234
    %v2236 = vpop.f32.mrb[0].mxu0
    %2237 = vmatprep.mubr.bf16.mxu0 0
    %2238 = vmatmul.mubr.bf16.gmra.mrb[0].mxu0 %v1175
    %v2239 = vpop.f32.mrb[0].mxu0
    %v2240 = vadd.f32 0.0, %v2239
    %v2241 = vpop.f32.mrb[0].mxu0
    %v2242 = vpop.f32.mrb[0].mxu0
    %v2243 = vadd.f32 0.0, %v2242
    %v2244 = vpop.f32.mrb[0].mxu0
    %2245 = vmatprep.mubr.bf16.mxu0 0
    %2246 = vmatmul.mubr.bf16.gmra.mrb[0].mxu0 %v1176
    %v2247 = vpop.f32.mrb[0].mxu0
    %v2248 = vadd.f32 0.0, %v2247
    %v2249 = vpop.f32.mrb[0].mxu0
    %v2250 = vpop.f32.mrb[0].mxu0
    %v2251 = vadd.f32 0.0, %v2250
    %v2252 = vpop.f32.mrb[0].mxu0
    %2253 = vmatprep.mubr.bf16.mxu0 0
    %2254 = vmatmul.mubr.bf16.gmra.mrb[0].mxu0 %v1177
    %v2255 = vpop.f32.mrb[0].mxu0
    %v2256 = vadd.f32 0.0, %v2255
    %v2257 = vpop.f32.mrb[0].mxu0
    %v2258 = vpop.f32.mrb[0].mxu0
    %v2259 = vadd.f32 0.0, %v2258
    %v2260 = vpop.f32.mrb[0].mxu0
    %2261 = vmatprep.mubr.bf16.mxu0 0
    %2262 = vmatmul.mubr.bf16.gmra.mrb[0].mxu0 %v1178
    %v2263 = vpop.f32.mrb[0].mxu0
    %v2264 = vadd.f32 0.0, %v2263
    %v2265 = vpop.f32.mrb[0].mxu0
    %v2266 = vpop.f32.mrb[0].mxu0
    %v2267 = vadd.f32 0.0, %v2266
    %v2268 = vpop.f32.mrb[0].mxu0
    %2269 = vmatprep.mubr.bf16.mxu0 0
    %2270 = vmatmul.mubr.bf16.gmra.mrb[0].mxu0 %v1179
    %v2271 = vpop.f32.mrb[0].mxu0
    %v2272 = vadd.f32 0.0, %v2271
    %v2273 = vpop.f32.mrb[0].mxu0
    %v2274 = vpop.f32.mrb[0].mxu0
    %v2275 = vadd.f32 0.0, %v2274
    %v2276 = vpop.f32.mrb[0].mxu0
    %2277 = vmatprep.mubr.bf16.mxu0 0
    %2278 = vmatmul.mubr.bf16.gmra.mrb[0].mxu0 %v1180
    %v2279 = vpop.f32.mrb[0].mxu0
    %v2280 = vadd.f32 0.0, %v2279
    %v2281 = vpop.f32.mrb[0].mxu0
    %v2282 = vpop.f32.mrb[0].mxu0
    %v2283 = vadd.f32 0.0, %v2282
    %v2284 = vpop.f32.mrb[0].mxu0
    %2285 = vdwg.mxu0
    %v2286 = vld [vmem:[#allocation5] sm:$0xf]
    %v2287 = vld [vmem:[#allocation5 + $0x4] sm:$0xf]
    %v2288 = vld [vmem:[#allocation5 + $0x8] sm:$0xf]
    %v2289 = vld [vmem:[#allocation5 + $0xc] sm:$0xf]
    %v2290 = vld [vmem:[#allocation5 + $0x10] sm:$0xf]
    %v2291 = vld [vmem:[#allocation5 + $0x14] sm:$0xf]
    %v2292 = vld [vmem:[#allocation5 + $0x18] sm:$0xf]
    %v2293 = vld [vmem:[#allocation5 + $0x1c] sm:$0xf]
    %v2294 = vld [vmem:[#allocation5 + $0x20] sm:$0xf]
    %v2295 = vld [vmem:[#allocation5 + $0x24] sm:$0xf]
    %v2296 = vld [vmem:[#allocation5 + $0x28] sm:$0xf]
    %v2297 = vld [vmem:[#allocation5 + $0x2c] sm:$0xf]
    %v2298 = vld [vmem:[#allocation5 + $0x30] sm:$0xf]
    %v2299 = vld [vmem:[#allocation5 + $0x34] sm:$0xf]
    %v2300 = vld [vmem:[#allocation5 + $0x38] sm:$0xf]
    %v2301 = vld [vmem:[#allocation5 + $0x3c] sm:$0xf]
    %v2318 = vunpack.c.l.b16 %v2286
    %v2319 = vunpack.c.l.b16 %v2287
    %v2320 = vunpack.c.l.b16 %v2288
    %v2321 = vunpack.c.l.b16 %v2289
    %v2322 = vunpack.c.l.b16 %v2290
    %v2323 = vunpack.c.l.b16 %v2291
    %v2324 = vunpack.c.l.b16 %v2292
    %v2325 = vunpack.c.l.b16 %v2293
    %v2326 = vunpack.c.l.b16 %v2294
    %v2327 = vunpack.c.l.b16 %v2295
    %v2328 = vunpack.c.l.b16 %v2296
    %v2329 = vunpack.c.l.b16 %v2297
    %v2330 = vunpack.c.l.b16 %v2298
    %v2331 = vunpack.c.l.b16 %v2299
    %v2332 = vunpack.c.l.b16 %v2300
    %v2333 = vunpack.c.l.b16 %v2301
    %v2334 = vpack.c.b16 %v2319, %v2318
    %v2335 = vpack.c.b16 %v2321, %v2320
    %v2336 = vpack.c.b16 %v2323, %v2322
    %v2337 = vpack.c.b16 %v2325, %v2324
    %v2338 = vpack.c.b16 %v2327, %v2326
    %v2339 = vpack.c.b16 %v2329, %v2328
    %v2340 = vpack.c.b16 %v2331, %v2330
    %v2341 = vpack.c.b16 %v2333, %v2332
    %2350 = vmatprep.subr.bf16.mxu0 0
    %2351 = vmatpush1.bf16.msra.mxu0 %v2334
    %2352 = vmatprep.subr.bf16.mxu0 0
    %2353 = vmatpush1.bf16.msra.mxu0 %v2335
    %2354 = vmatprep.subr.bf16.mxu0 0
    %2355 = vmatpush1.bf16.msra.mxu0 %v2336
    %2356 = vmatprep.subr.bf16.mxu0 0
    %2357 = vmatpush1.bf16.msra.mxu0 %v2337
    %2358 = vmatprep.subr.bf16.mxu0 0
    %2359 = vmatpush1.bf16.msra.mxu0 %v2338
    %2360 = vmatprep.subr.bf16.mxu0 0
    %2361 = vmatpush1.bf16.msra.mxu0 %v2339
    %2362 = vmatprep.subr.bf16.mxu0 0
    %2363 = vmatpush1.bf16.msra.mxu0 %v2340
    %2364 = vmatprep.subr.bf16.mxu0 0
    %2365 = vmatpush1.bf16.msra.mxu0 %v2341
    %2366 = vmatprep.subr.bf16.mxu0 0
    %2367 = vmatpush1.bf16.msra.mxu0 0
    %2368 = vmatprep.subr.bf16.mxu0 0
    %2369 = vmatpush1.bf16.msra.mxu0 0
    %2370 = vmatprep.subr.bf16.mxu0 0
    %2371 = vmatpush1.bf16.msra.mxu0 0
    %2372 = vmatprep.subr.bf16.mxu0 0
    %2373 = vmatpush1.bf16.msra.mxu0 0
    %2374 = vmatprep.subr.bf16.mxu0 0
    %2375 = vmatpush1.bf16.msra.mxu0 0
    %2376 = vmatprep.subr.bf16.mxu0 0
    %2377 = vmatpush1.bf16.msra.mxu0 0
    %2378 = vmatprep.subr.bf16.mxu0 0
    %2379 = vmatpush1.bf16.msra.mxu0 0
    %2380 = vmatprep.subr.bf16.mxu0 0
    %2381 = vmatpush1.bf16.msra.mxu0 0
    %2382 = vmatprep.mubr.bf16.mxu0 0
    %2383 = vmatmul.mubr.bf16.gmra.mrb[0].mxu0 %v1645
    %v2384 = vpop.f32.mrb[0].mxu0
    %v2385 = vadd.f32 0.0, %v2384
    %v2386 = vpop.f32.mrb[0].mxu0
    %v2387 = vpop.f32.mrb[0].mxu0
    %v2388 = vadd.f32 0.0, %v2387
    %v2389 = vpop.f32.mrb[0].mxu0
    %2390 = vmatprep.mubr.bf16.mxu0 0
    %2391 = vmatmul.mubr.bf16.gmra.mrb[0].mxu0 %v1646
    %v2392 = vpop.f32.mrb[0].mxu0
    %v2393 = vadd.f32 0.0, %v2392
    %v2394 = vpop.f32.mrb[0].mxu0
    %v2395 = vpop.f32.mrb[0].mxu0
    %v2396 = vadd.f32 0.0, %v2395
    %v2397 = vpop.f32.mrb[0].mxu0
    %2398 = vmatprep.mubr.bf16.mxu0 0
    %2399 = vmatmul.mubr.bf16.gmra.mrb[0].mxu0 %v1647
    %v2400 = vpop.f32.mrb[0].mxu0
    %v2401 = vadd.f32 0.0, %v2400
    %v2402 = vpop.f32.mrb[0].mxu0
    %v2403 = vpop.f32.mrb[0].mxu0
    %v2404 = vadd.f32 0.0, %v2403
    %v2405 = vpop.f32.mrb[0].mxu0
    %2406 = vmatprep.mubr.bf16.mxu0 0
    %2407 = vmatmul.mubr.bf16.gmra.mrb[0].mxu0 %v1648
    %v2408 = vpop.f32.mrb[0].mxu0
    %v2409 = vadd.f32 0.0, %v2408
    %v2410 = vpop.f32.mrb[0].mxu0
    %v2411 = vpop.f32.mrb[0].mxu0
    %v2412 = vadd.f32 0.0, %v2411
    %v2413 = vpop.f32.mrb[0].mxu0
    %2414 = vmatprep.mubr.bf16.mxu0 0
    %2415 = vmatmul.mubr.bf16.gmra.mrb[0].mxu0 %v1649
    %v2416 = vpop.f32.mrb[0].mxu0
    %v2417 = vadd.f32 0.0, %v2416
    %v2418 = vpop.f32.mrb[0].mxu0
    %v2419 = vpop.f32.mrb[0].mxu0
    %v2420 = vadd.f32 0.0, %v2419
    %v2421 = vpop.f32.mrb[0].mxu0
    %2422 = vmatprep.mubr.bf16.mxu0 0
    %2423 = vmatmul.mubr.bf16.gmra.mrb[0].mxu0 %v1650
    %v2424 = vpop.f32.mrb[0].mxu0
    %v2425 = vadd.f32 0.0, %v2424
    %v2426 = vpop.f32.mrb[0].mxu0
    %v2427 = vpop.f32.mrb[0].mxu0
    %v2428 = vadd.f32 0.0, %v2427
    %v2429 = vpop.f32.mrb[0].mxu0
    %2430 = vmatprep.mubr.bf16.mxu0 0
    %2431 = vmatmul.mubr.bf16.gmra.mrb[0].mxu0 %v1651
    %v2432 = vpop.f32.mrb[0].mxu0
    %v2433 = vadd.f32 0.0, %v2432
    %v2434 = vpop.f32.mrb[0].mxu0
    %v2435 = vpop.f32.mrb[0].mxu0
    %v2436 = vadd.f32 0.0, %v2435
    %v2437 = vpop.f32.mrb[0].mxu0
    %2438 = vmatprep.mubr.bf16.mxu0 0
    %2439 = vmatmul.mubr.bf16.gmra.mrb[0].mxu0 %v1652
    %v2440 = vpop.f32.mrb[0].mxu0
    %v2441 = vadd.f32 0.0, %v2440
    %v2442 = vpop.f32.mrb[0].mxu0
    %v2443 = vpop.f32.mrb[0].mxu0
    %v2444 = vadd.f32 0.0, %v2443
    %v2445 = vpop.f32.mrb[0].mxu0
    %2446 = vdwg.mxu0
    %v2447 = vmul.f32 %v2224, %v2385
    %v2448 = vmul.f32 %v2227, %v2388
    %v2449 = vmul.f32 %v2232, %v2393
    %v2450 = vmul.f32 %v2235, %v2396
    %v2451 = vmul.f32 %v2240, %v2401
    %v2452 = vmul.f32 %v2243, %v2404
    %v2453 = vmul.f32 %v2248, %v2409
    %v2454 = vmul.f32 %v2251, %v2412
    %v2455 = vmul.f32 %v2256, %v2417
    %v2456 = vmul.f32 %v2259, %v2420
    %v2457 = vmul.f32 %v2264, %v2425
    %v2458 = vmul.f32 %v2267, %v2428
    %v2459 = vmul.f32 %v2272, %v2433
    %v2460 = vmul.f32 %v2275, %v2436
    %v2461 = vmul.f32 %v2280, %v2441
    %v2462 = vmul.f32 %v2283, %v2444
    %v2463 = vpack.c.bf16 %v2448, %v2447
    %v2464 = vpack.c.bf16 %v2450, %v2449
    %v2465 = vpack.c.bf16 %v2452, %v2451
    %v2466 = vpack.c.bf16 %v2454, %v2453
    %v2467 = vpack.c.bf16 %v2456, %v2455
    %v2468 = vpack.c.bf16 %v2458, %v2457
    %v2469 = vpack.c.bf16 %v2460, %v2459
    %v2470 = vpack.c.bf16 %v2462, %v2461
    %v2471 = vld [vmem:[#allocation7] sm:$0xff]
    %v2472 = vld [vmem:[#allocation7 + $0x8] sm:$0xff]
    %v2473 = vld [vmem:[#allocation7 + $0x10] sm:$0xff]
    %v2474 = vld [vmem:[#allocation7 + $0x18] sm:$0xff]
    %v2475 = vld [vmem:[#allocation7 + $0x20] sm:$0xff]
    %v2476 = vld [vmem:[#allocation7 + $0x28] sm:$0xff]
    %v2477 = vld [vmem:[#allocation7 + $0x30] sm:$0xff]
    %v2478 = vld [vmem:[#allocation7 + $0x38] sm:$0xff]
    %v2479 = vld [vmem:[#allocation7 + $0x40] sm:$0xff]
    %v2480 = vld [vmem:[#allocation7 + $0x48] sm:$0xff]
    %v2481 = vld [vmem:[#allocation7 + $0x50] sm:$0xff]
    %v2482 = vld [vmem:[#allocation7 + $0x58] sm:$0xff]
    %v2483 = vld [vmem:[#allocation7 + $0x60] sm:$0xff]
    %v2484 = vld [vmem:[#allocation7 + $0x68] sm:$0xff]
    %v2485 = vld [vmem:[#allocation7 + $0x70] sm:$0xff]
    %v2486 = vld [vmem:[#allocation7 + $0x78] sm:$0xff]
    %v2503 = vunpack.c.l.b16 %v2471
    %v2504 = vunpack.c.h.b16 %v2471
    %v2505 = vunpack.c.l.b16 %v2472
    %v2506 = vunpack.c.h.b16 %v2472
    %v2507 = vunpack.c.l.b16 %v2473
    %v2508 = vunpack.c.h.b16 %v2473
    %v2509 = vunpack.c.l.b16 %v2474
    %v2510 = vunpack.c.h.b16 %v2474
    %v2511 = vunpack.c.l.b16 %v2475
    %v2512 = vunpack.c.h.b16 %v2475
    %v2513 = vunpack.c.l.b16 %v2476
    %v2514 = vunpack.c.h.b16 %v2476
    %v2515 = vunpack.c.l.b16 %v2477
    %v2516 = vunpack.c.h.b16 %v2477
    %v2517 = vunpack.c.l.b16 %v2478
    %v2518 = vunpack.c.h.b16 %v2478
    %v2519 = vunpack.c.l.b16 %v2479
    %v2520 = vunpack.c.h.b16 %v2479
    %v2521 = vunpack.c.l.b16 %v2480
    %v2522 = vunpack.c.h.b16 %v2480
    %v2523 = vunpack.c.l.b16 %v2481
    %v2524 = vunpack.c.h.b16 %v2481
    %v2525 = vunpack.c.l.b16 %v2482
    %v2526 = vunpack.c.h.b16 %v2482
    %v2527 = vunpack.c.l.b16 %v2483
    %v2528 = vunpack.c.h.b16 %v2483
    %v2529 = vunpack.c.l.b16 %v2484
    %v2530 = vunpack.c.h.b16 %v2484
    %v2531 = vunpack.c.l.b16 %v2485
    %v2532 = vunpack.c.h.b16 %v2485
    %v2533 = vunpack.c.l.b16 %v2486
    %v2534 = vunpack.c.h.b16 %v2486
    %v2535 = vpack.c.b16 %v2505, %v2503
    %v2536 = vpack.c.b16 %v2506, %v2504
    %v2537 = vpack.c.b16 %v2509, %v2507
    %v2538 = vpack.c.b16 %v2510, %v2508
    %v2539 = vpack.c.b16 %v2513, %v2511
    %v2540 = vpack.c.b16 %v2514, %v2512
    %v2541 = vpack.c.b16 %v2517, %v2515
    %v2542 = vpack.c.b16 %v2518, %v2516
    %v2543 = vpack.c.b16 %v2521, %v2519
    %v2544 = vpack.c.b16 %v2522, %v2520
    %v2545 = vpack.c.b16 %v2525, %v2523
    %v2546 = vpack.c.b16 %v2526, %v2524
    %v2547 = vpack.c.b16 %v2529, %v2527
    %v2548 = vpack.c.b16 %v2530, %v2528
    %v2549 = vpack.c.b16 %v2533, %v2531
    %v2550 = vpack.c.b16 %v2534, %v2532
    %2567 = vmatprep.subr.bf16.mxu0 %v2536
    %2568 = vmatpush1.bf16.msra.mxu0 %v2535
    %2569 = vmatprep.subr.bf16.mxu0 %v2538
    %2570 = vmatpush1.bf16.msra.mxu0 %v2537
    %2571 = vmatprep.subr.bf16.mxu0 %v2540
    %2572 = vmatpush1.bf16.msra.mxu0 %v2539
    %2573 = vmatprep.subr.bf16.mxu0 %v2542
    %2574 = vmatpush1.bf16.msra.mxu0 %v2541
    %2575 = vmatprep.subr.bf16.mxu0 %v2544
    %2576 = vmatpush1.bf16.msra.mxu0 %v2543
    %2577 = vmatprep.subr.bf16.mxu0 %v2546
    %2578 = vmatpush1.bf16.msra.mxu0 %v2545
    %2579 = vmatprep.subr.bf16.mxu0 %v2548
    %2580 = vmatpush1.bf16.msra.mxu0 %v2547
    %2581 = vmatprep.subr.bf16.mxu0 %v2550
    %2582 = vmatpush1.bf16.msra.mxu0 %v2549
    %2583 = vmatprep.subr.bf16.mxu0 0
    %2584 = vmatpush1.bf16.msra.mxu0 0
    %2585 = vmatprep.subr.bf16.mxu0 0
    %2586 = vmatpush1.bf16.msra.mxu0 0
    %2587 = vmatprep.subr.bf16.mxu0 0
    %2588 = vmatpush1.bf16.msra.mxu0 0
    %2589 = vmatprep.subr.bf16.mxu0 0
    %2590 = vmatpush1.bf16.msra.mxu0 0
    %2591 = vmatprep.subr.bf16.mxu0 0
    %2592 = vmatpush1.bf16.msra.mxu0 0
    %2593 = vmatprep.subr.bf16.mxu0 0
    %2594 = vmatpush1.bf16.msra.mxu0 0
    %2595 = vmatprep.subr.bf16.mxu0 0
    %2596 = vmatpush1.bf16.msra.mxu0 0
    %2597 = vmatprep.subr.bf16.mxu0 0
    %2598 = vmatpush1.bf16.msra.mxu0 0
    %2599 = vmatprep.mubr.bf16.mxu0 0
    %2600 = vmatmul.mubr.bf16.gmra.mrb[0].mxu0 %v2463
    %v2601 = vpop.f32.mrb[0].mxu0
    %v2602 = vadd.f32 0.0, %v2601
    %v2603 = vpop.f32.mrb[0].mxu0
    %v2604 = vadd.f32 0.0, %v2603
    %v2605 = vpop.f32.mrb[0].mxu0
    %v2606 = vadd.f32 0.0, %v2605
    %v2607 = vpop.f32.mrb[0].mxu0
    %v2608 = vadd.f32 0.0, %v2607
    %2609 = vmatprep.mubr.bf16.mxu0 0
    %2610 = vmatmul.mubr.bf16.gmra.mrb[0].mxu0 %v2464
    %v2611 = vpop.f32.mrb[0].mxu0
    %v2612 = vadd.f32 0.0, %v2611
    %v2613 = vpop.f32.mrb[0].mxu0
    %v2614 = vadd.f32 0.0, %v2613
    %v2615 = vpop.f32.mrb[0].mxu0
    %v2616 = vadd.f32 0.0, %v2615
    %v2617 = vpop.f32.mrb[0].mxu0
    %v2618 = vadd.f32 0.0, %v2617
    %2619 = vmatprep.mubr.bf16.mxu0 0
    %2620 = vmatmul.mubr.bf16.gmra.mrb[0].mxu0 %v2465
    %v2621 = vpop.f32.mrb[0].mxu0
    %v2622 = vadd.f32 0.0, %v2621
    %v2623 = vpop.f32.mrb[0].mxu0
    %v2624 = vadd.f32 0.0, %v2623
    %v2625 = vpop.f32.mrb[0].mxu0
    %v2626 = vadd.f32 0.0, %v2625
    %v2627 = vpop.f32.mrb[0].mxu0
    %v2628 = vadd.f32 0.0, %v2627
    %2629 = vmatprep.mubr.bf16.mxu0 0
    %2630 = vmatmul.mubr.bf16.gmra.mrb[0].mxu0 %v2466
    %v2631 = vpop.f32.mrb[0].mxu0
    %v2632 = vadd.f32 0.0, %v2631
    %v2633 = vpop.f32.mrb[0].mxu0
    %v2634 = vadd.f32 0.0, %v2633
    %v2635 = vpop.f32.mrb[0].mxu0
    %v2636 = vadd.f32 0.0, %v2635
    %v2637 = vpop.f32.mrb[0].mxu0
    %v2638 = vadd.f32 0.0, %v2637
    %2639 = vmatprep.mubr.bf16.mxu0 0
    %2640 = vmatmul.mubr.bf16.gmra.mrb[0].mxu0 %v2467
    %v2641 = vpop.f32.mrb[0].mxu0
    %v2642 = vadd.f32 0.0, %v2641
    %v2643 = vpop.f32.mrb[0].mxu0
    %v2644 = vadd.f32 0.0, %v2643
    %v2645 = vpop.f32.mrb[0].mxu0
    %v2646 = vadd.f32 0.0, %v2645
    %v2647 = vpop.f32.mrb[0].mxu0
    %v2648 = vadd.f32 0.0, %v2647
    %2649 = vmatprep.mubr.bf16.mxu0 0
    %2650 = vmatmul.mubr.bf16.gmra.mrb[0].mxu0 %v2468
    %v2651 = vpop.f32.mrb[0].mxu0
    %v2652 = vadd.f32 0.0, %v2651
    %v2653 = vpop.f32.mrb[0].mxu0
    %v2654 = vadd.f32 0.0, %v2653
    %v2655 = vpop.f32.mrb[0].mxu0
    %v2656 = vadd.f32 0.0, %v2655
    %v2657 = vpop.f32.mrb[0].mxu0
    %v2658 = vadd.f32 0.0, %v2657
    %2659 = vmatprep.mubr.bf16.mxu0 0
    %2660 = vmatmul.mubr.bf16.gmra.mrb[0].mxu0 %v2469
    %v2661 = vpop.f32.mrb[0].mxu0
    %v2662 = vadd.f32 0.0, %v2661
    %v2663 = vpop.f32.mrb[0].mxu0
    %v2664 = vadd.f32 0.0, %v2663
    %v2665 = vpop.f32.mrb[0].mxu0
    %v2666 = vadd.f32 0.0, %v2665
    %v2667 = vpop.f32.mrb[0].mxu0
    %v2668 = vadd.f32 0.0, %v2667
    %2669 = vmatprep.mubr.bf16.mxu0 0
    %2670 = vmatmul.mubr.bf16.gmra.mrb[0].mxu0 %v2470
    %v2671 = vpop.f32.mrb[0].mxu0
    %v2672 = vadd.f32 0.0, %v2671
    %v2673 = vpop.f32.mrb[0].mxu0
    %v2674 = vadd.f32 0.0, %v2673
    %v2675 = vpop.f32.mrb[0].mxu0
    %v2676 = vadd.f32 0.0, %v2675
    %v2677 = vpop.f32.mrb[0].mxu0
    %v2678 = vadd.f32 0.0, %v2677
    %2679 = vdwg.mxu0
    %v2680 = vld [vmem:[%s3] sm:$0xff]
    %v2681 = vld [vmem:[%s3 + $0x8] sm:$0xff]
    %v2682 = vld [vmem:[%s3 + $0x10] sm:$0xff]
    %v2683 = vld [vmem:[%s3 + $0x18] sm:$0xff]
    %v2684 = vld [vmem:[%s3 + $0x20] sm:$0xff]
    %v2685 = vld [vmem:[%s3 + $0x28] sm:$0xff]
    %v2686 = vld [vmem:[%s3 + $0x30] sm:$0xff]
    %v2687 = vld [vmem:[%s3 + $0x38] sm:$0xff]
    %v2688 = vld [vmem:[%s3 + $0x40] sm:$0xff]
    %v2689 = vld [vmem:[%s3 + $0x48] sm:$0xff]
    %v2690 = vld [vmem:[%s3 + $0x50] sm:$0xff]
    %v2691 = vld [vmem:[%s3 + $0x58] sm:$0xff]
    %v2692 = vld [vmem:[%s3 + $0x60] sm:$0xff]
    %v2693 = vld [vmem:[%s3 + $0x68] sm:$0xff]
    %v2694 = vld [vmem:[%s3 + $0x70] sm:$0xff]
    %v2695 = vld [vmem:[%s3 + $0x78] sm:$0xff]
    %v2712 = vunpack.c.l.b16 %v2680
    %v2713 = vunpack.c.h.b16 %v2680
    %v2714 = vunpack.c.l.b16 %v2681
    %v2715 = vunpack.c.h.b16 %v2681
    %v2716 = vunpack.c.l.b16 %v2682
    %v2717 = vunpack.c.h.b16 %v2682
    %v2718 = vunpack.c.l.b16 %v2683
    %v2719 = vunpack.c.h.b16 %v2683
    %v2720 = vunpack.c.l.b16 %v2684
    %v2721 = vunpack.c.h.b16 %v2684
    %v2722 = vunpack.c.l.b16 %v2685
    %v2723 = vunpack.c.h.b16 %v2685
    %v2724 = vunpack.c.l.b16 %v2686
    %v2725 = vunpack.c.h.b16 %v2686
    %v2726 = vunpack.c.l.b16 %v2687
    %v2727 = vunpack.c.h.b16 %v2687
    %v2728 = vunpack.c.l.b16 %v2688
    %v2729 = vunpack.c.h.b16 %v2688
    %v2730 = vunpack.c.l.b16 %v2689
    %v2731 = vunpack.c.h.b16 %v2689
    %v2732 = vunpack.c.l.b16 %v2690
    %v2733 = vunpack.c.h.b16 %v2690
    %v2734 = vunpack.c.l.b16 %v2691
    %v2735 = vunpack.c.h.b16 %v2691
    %v2736 = vunpack.c.l.b16 %v2692
    %v2737 = vunpack.c.h.b16 %v2692
    %v2738 = vunpack.c.l.b16 %v2693
    %v2739 = vunpack.c.h.b16 %v2693
    %v2740 = vunpack.c.l.b16 %v2694
    %v2741 = vunpack.c.h.b16 %v2694
    %v2742 = vunpack.c.l.b16 %v2695
    %v2743 = vunpack.c.h.b16 %v2695
    %v2744 = vpack.c.b16 %v2714, %v2712
    %v2745 = vpack.c.b16 %v2715, %v2713
    %v2746 = vpack.c.b16 %v2718, %v2716
    %v2747 = vpack.c.b16 %v2719, %v2717
    %v2748 = vpack.c.b16 %v2722, %v2720
    %v2749 = vpack.c.b16 %v2723, %v2721
    %v2750 = vpack.c.b16 %v2726, %v2724
    %v2751 = vpack.c.b16 %v2727, %v2725
    %v2752 = vpack.c.b16 %v2730, %v2728
    %v2753 = vpack.c.b16 %v2731, %v2729
    %v2754 = vpack.c.b16 %v2734, %v2732
    %v2755 = vpack.c.b16 %v2735, %v2733
    %v2756 = vpack.c.b16 %v2738, %v2736
    %v2757 = vpack.c.b16 %v2739, %v2737
    %v2758 = vpack.c.b16 %v2742, %v2740
    %v2759 = vpack.c.b16 %v2743, %v2741
    %2776 = vmatprep.subr.bf16.mxu0 %v2745
    %2777 = vmatpush1.bf16.msra.mxu0 %v2744
    %2778 = vmatprep.subr.bf16.mxu0 %v2747
    %2779 = vmatpush1.bf16.msra.mxu0 %v2746
    %2780 = vmatprep.subr.bf16.mxu0 %v2749
    %2781 = vmatpush1.bf16.msra.mxu0 %v2748
    %2782 = vmatprep.subr.bf16.mxu0 %v2751
    %2783 = vmatpush1.bf16.msra.mxu0 %v2750
    %2784 = vmatprep.subr.bf16.mxu0 %v2753
    %2785 = vmatpush1.bf16.msra.mxu0 %v2752
    %2786 = vmatprep.subr.bf16.mxu0 %v2755
    %2787 = vmatpush1.bf16.msra.mxu0 %v2754
    %2788 = vmatprep.subr.bf16.mxu0 %v2757
    %2789 = vmatpush1.bf16.msra.mxu0 %v2756
    %2790 = vmatprep.subr.bf16.mxu0 %v2759
    %2791 = vmatpush1.bf16.msra.mxu0 %v2758
    %2792 = vmatprep.subr.bf16.mxu0 0
    %2793 = vmatpush1.bf16.msra.mxu0 0
    %2794 = vmatprep.subr.bf16.mxu0 0
    %2795 = vmatpush1.bf16.msra.mxu0 0
    %2796 = vmatprep.subr.bf16.mxu0 0
    %2797 = vmatpush1.bf16.msra.mxu0 0
    %2798 = vmatprep.subr.bf16.mxu0 0
    %2799 = vmatpush1.bf16.msra.mxu0 0
    %2800 = vmatprep.subr.bf16.mxu0 0
    %2801 = vmatpush1.bf16.msra.mxu0 0
    %2802 = vmatprep.subr.bf16.mxu0 0
    %2803 = vmatpush1.bf16.msra.mxu0 0
    %2804 = vmatprep.subr.bf16.mxu0 0
    %2805 = vmatpush1.bf16.msra.mxu0 0
    %2806 = vmatprep.subr.bf16.mxu0 0
    %2807 = vmatpush1.bf16.msra.mxu0 0
    %2808 = vmatprep.mubr.bf16.mxu0 0
    %2809 = vmatmul.mubr.bf16.gmra.mrb[0].mxu0 %v2117
    %v2810 = vpop.f32.mrb[0].mxu0
    %v2811 = vadd.f32 0.0, %v2810
    %v2812 = vpop.f32.mrb[0].mxu0
    %v2813 = vadd.f32 0.0, %v2812
    %v2814 = vpop.f32.mrb[0].mxu0
    %v2815 = vadd.f32 0.0, %v2814
    %v2816 = vpop.f32.mrb[0].mxu0
    %v2817 = vadd.f32 0.0, %v2816
    %2818 = vmatprep.mubr.bf16.mxu0 0
    %2819 = vmatmul.mubr.bf16.gmra.mrb[0].mxu0 %v2118
    %v2820 = vpop.f32.mrb[0].mxu0
    %v2821 = vadd.f32 0.0, %v2820
    %v2822 = vpop.f32.mrb[0].mxu0
    %v2823 = vadd.f32 0.0, %v2822
    %v2824 = vpop.f32.mrb[0].mxu0
    %v2825 = vadd.f32 0.0, %v2824
    %v2826 = vpop.f32.mrb[0].mxu0
    %v2827 = vadd.f32 0.0, %v2826
    %2828 = vmatprep.mubr.bf16.mxu0 0
    %2829 = vmatmul.mubr.bf16.gmra.mrb[0].mxu0 %v2119
    %v2830 = vpop.f32.mrb[0].mxu0
    %v2831 = vadd.f32 0.0, %v2830
    %v2832 = vpop.f32.mrb[0].mxu0
    %v2833 = vadd.f32 0.0, %v2832
    %v2834 = vpop.f32.mrb[0].mxu0
    %v2835 = vadd.f32 0.0, %v2834
    %v2836 = vpop.f32.mrb[0].mxu0
    %v2837 = vadd.f32 0.0, %v2836
    %2838 = vmatprep.mubr.bf16.mxu0 0
    %2839 = vmatmul.mubr.bf16.gmra.mrb[0].mxu0 %v2120
    %v2840 = vpop.f32.mrb[0].mxu0
    %v2841 = vadd.f32 0.0, %v2840
    %v2842 = vpop.f32.mrb[0].mxu0
    %v2843 = vadd.f32 0.0, %v2842
    %v2844 = vpop.f32.mrb[0].mxu0
    %v2845 = vadd.f32 0.0, %v2844
    %v2846 = vpop.f32.mrb[0].mxu0
    %v2847 = vadd.f32 0.0, %v2846
    %2848 = vmatprep.mubr.bf16.mxu0 0
    %2849 = vmatmul.mubr.bf16.gmra.mrb[0].mxu0 %v2121
    %v2850 = vpop.f32.mrb[0].mxu0
    %v2851 = vadd.f32 0.0, %v2850
    %v2852 = vpop.f32.mrb[0].mxu0
    %v2853 = vadd.f32 0.0, %v2852
    %v2854 = vpop.f32.mrb[0].mxu0
    %v2855 = vadd.f32 0.0, %v2854
    %v2856 = vpop.f32.mrb[0].mxu0
    %v2857 = vadd.f32 0.0, %v2856
    %2858 = vmatprep.mubr.bf16.mxu0 0
    %2859 = vmatmul.mubr.bf16.gmra.mrb[0].mxu0 %v2122
    %v2860 = vpop.f32.mrb[0].mxu0
    %v2861 = vadd.f32 0.0, %v2860
    %v2862 = vpop.f32.mrb[0].mxu0
    %v2863 = vadd.f32 0.0, %v2862
    %v2864 = vpop.f32.mrb[0].mxu0
    %v2865 = vadd.f32 0.0, %v2864
    %v2866 = vpop.f32.mrb[0].mxu0
    %v2867 = vadd.f32 0.0, %v2866
    %2868 = vmatprep.mubr.bf16.mxu0 0
    %2869 = vmatmul.mubr.bf16.gmra.mrb[0].mxu0 %v2123
    %v2870 = vpop.f32.mrb[0].mxu0
    %v2871 = vadd.f32 0.0, %v2870
    %v2872 = vpop.f32.mrb[0].mxu0
    %v2873 = vadd.f32 0.0, %v2872
    %v2874 = vpop.f32.mrb[0].mxu0
    %v2875 = vadd.f32 0.0, %v2874
    %v2876 = vpop.f32.mrb[0].mxu0
    %v2877 = vadd.f32 0.0, %v2876
    %2878 = vmatprep.mubr.bf16.mxu0 0
    %2879 = vmatmul.mubr.bf16.gmra.mrb[0].mxu0 %v2124
    %v2880 = vpop.f32.mrb[0].mxu0
    %v2881 = vadd.f32 0.0, %v2880
    %v2882 = vpop.f32.mrb[0].mxu0
    %v2883 = vadd.f32 0.0, %v2882
    %v2884 = vpop.f32.mrb[0].mxu0
    %v2885 = vadd.f32 0.0, %v2884
    %v2886 = vpop.f32.mrb[0].mxu0
    %v2887 = vadd.f32 0.0, %v2886
    %2888 = vdwg.mxu0
    %v2889 = vmul.f32 %v2602, %v2811
    %v2890 = vmul.f32 %v2604, %v2813
    %v2891 = vmul.f32 %v2606, %v2815
    %v2892 = vmul.f32 %v2608, %v2817
    %v2893 = vmul.f32 %v2612, %v2821
    %v2894 = vmul.f32 %v2614, %v2823
    %v2895 = vmul.f32 %v2616, %v2825
    %v2896 = vmul.f32 %v2618, %v2827
    %v2897 = vmul.f32 %v2622, %v2831
    %v2898 = vmul.f32 %v2624, %v2833
    %v2899 = vmul.f32 %v2626, %v2835
    %v2900 = vmul.f32 %v2628, %v2837
    %v2901 = vmul.f32 %v2632, %v2841
    %v2902 = vmul.f32 %v2634, %v2843
    %v2903 = vmul.f32 %v2636, %v2845
    %v2904 = vmul.f32 %v2638, %v2847
    %v2905 = vmul.f32 %v2642, %v2851
    %v2906 = vmul.f32 %v2644, %v2853
    %v2907 = vmul.f32 %v2646, %v2855
    %v2908 = vmul.f32 %v2648, %v2857
    %v2909 = vmul.f32 %v2652, %v2861
    %v2910 = vmul.f32 %v2654, %v2863
    %v2911 = vmul.f32 %v2656, %v2865
    %v2912 = vmul.f32 %v2658, %v2867
    %v2913 = vmul.f32 %v2662, %v2871
    %v2914 = vmul.f32 %v2664, %v2873
    %v2915 = vmul.f32 %v2666, %v2875
    %v2916 = vmul.f32 %v2668, %v2877
    %v2917 = vmul.f32 %v2672, %v2881
    %v2918 = vmul.f32 %v2674, %v2883
    %v2919 = vmul.f32 %v2676, %v2885
    %v2920 = vmul.f32 %v2678, %v2887
    %v2921 = vpack.c.bf16 %v2891, %v2889
    %v2922 = vpack.c.bf16 %v2892, %v2890
    %v2923 = vpack.c.bf16 %v2895, %v2893
    %v2924 = vpack.c.bf16 %v2896, %v2894
    %v2925 = vpack.c.bf16 %v2899, %v2897
    %v2926 = vpack.c.bf16 %v2900, %v2898
    %v2927 = vpack.c.bf16 %v2903, %v2901
    %v2928 = vpack.c.bf16 %v2904, %v2902
    %v2929 = vpack.c.bf16 %v2907, %v2905
    %v2930 = vpack.c.bf16 %v2908, %v2906
    %v2931 = vpack.c.bf16 %v2911, %v2909
    %v2932 = vpack.c.bf16 %v2912, %v2910
    %v2933 = vpack.c.bf16 %v2915, %v2913
    %v2934 = vpack.c.bf16 %v2916, %v2914
    %v2935 = vpack.c.bf16 %v2919, %v2917
    %v2936 = vpack.c.bf16 %v2920, %v2918
    %v2937 = vld [vmem:[#allocation8] sm:$0xf]
    %v2938 = vld [vmem:[#allocation8 + $0x4] sm:$0xf]
    %v2939 = vld [vmem:[#allocation8 + $0x8] sm:$0xf]
    %v2940 = vld [vmem:[#allocation8 + $0xc] sm:$0xf]
    %v2941 = vld [vmem:[#allocation8 + $0x10] sm:$0xf]
    %v2942 = vld [vmem:[#allocation8 + $0x14] sm:$0xf]
    %v2943 = vld [vmem:[#allocation8 + $0x18] sm:$0xf]
    %v2944 = vld [vmem:[#allocation8 + $0x1c] sm:$0xf]
    %v2945 = vld [vmem:[#allocation8 + $0x20] sm:$0xf]
    %v2946 = vld [vmem:[#allocation8 + $0x24] sm:$0xf]
    %v2947 = vld [vmem:[#allocation8 + $0x28] sm:$0xf]
    %v2948 = vld [vmem:[#allocation8 + $0x2c] sm:$0xf]
    %v2949 = vld [vmem:[#allocation8 + $0x30] sm:$0xf]
    %v2950 = vld [vmem:[#allocation8 + $0x34] sm:$0xf]
    %v2951 = vld [vmem:[#allocation8 + $0x38] sm:$0xf]
    %v2952 = vld [vmem:[#allocation8 + $0x3c] sm:$0xf]
    %v2953 = vld [vmem:[#allocation8 + $0x40] sm:$0xf]
    %v2954 = vld [vmem:[#allocation8 + $0x44] sm:$0xf]
    %v2955 = vld [vmem:[#allocation8 + $0x48] sm:$0xf]
    %v2956 = vld [vmem:[#allocation8 + $0x4c] sm:$0xf]
    %v2957 = vld [vmem:[#allocation8 + $0x50] sm:$0xf]
    %v2958 = vld [vmem:[#allocation8 + $0x54] sm:$0xf]
    %v2959 = vld [vmem:[#allocation8 + $0x58] sm:$0xf]
    %v2960 = vld [vmem:[#allocation8 + $0x5c] sm:$0xf]
    %v2961 = vld [vmem:[#allocation8 + $0x60] sm:$0xf]
    %v2962 = vld [vmem:[#allocation8 + $0x64] sm:$0xf]
    %v2963 = vld [vmem:[#allocation8 + $0x68] sm:$0xf]
    %v2964 = vld [vmem:[#allocation8 + $0x6c] sm:$0xf]
    %v2965 = vld [vmem:[#allocation8 + $0x70] sm:$0xf]
    %v2966 = vld [vmem:[#allocation8 + $0x74] sm:$0xf]
    %v2967 = vld [vmem:[#allocation8 + $0x78] sm:$0xf]
    %v2968 = vld [vmem:[#allocation8 + $0x7c] sm:$0xf]
    %v2969 = vld [vmem:[%s6] sm:$0x1]
    %v2971 = vlaneseq
    %v2972 = vshrl.u32 %v2971, 7
    %v2973 = vsub.s32 0, %v2972
    %v2974 = vrot.slane %v2969, %v2973
    %v3008 = vunpack.c.l.b16 %v2937
    %v3009 = vunpack.c.l.b16 %v2938
    %v3010 = vunpack.c.l.b16 %v2939
    %v3011 = vunpack.c.l.b16 %v2940
    %v3012 = vunpack.c.l.b16 %v2941
    %v3013 = vunpack.c.l.b16 %v2942
    %v3014 = vunpack.c.l.b16 %v2943
    %v3015 = vunpack.c.l.b16 %v2944
    %v3016 = vunpack.c.l.b16 %v2945
    %v3017 = vunpack.c.l.b16 %v2946
    %v3018 = vunpack.c.l.b16 %v2947
    %v3019 = vunpack.c.l.b16 %v2948
    %v3020 = vunpack.c.l.b16 %v2949
    %v3021 = vunpack.c.l.b16 %v2950
    %v3022 = vunpack.c.l.b16 %v2951
    %v3023 = vunpack.c.l.b16 %v2952
    %v3024 = vunpack.c.l.b16 %v2953
    %v3025 = vunpack.c.l.b16 %v2954
    %v3026 = vunpack.c.l.b16 %v2955
    %v3027 = vunpack.c.l.b16 %v2956
    %v3028 = vunpack.c.l.b16 %v2957
    %v3029 = vunpack.c.l.b16 %v2958
    %v3030 = vunpack.c.l.b16 %v2959
    %v3031 = vunpack.c.l.b16 %v2960
    %v3032 = vunpack.c.l.b16 %v2961
    %v3033 = vunpack.c.l.b16 %v2962
    %v3034 = vunpack.c.l.b16 %v2963
    %v3035 = vunpack.c.l.b16 %v2964
    %v3036 = vunpack.c.l.b16 %v2965
    %v3037 = vunpack.c.l.b16 %v2966
    %v3038 = vunpack.c.l.b16 %v2967
    %v3039 = vunpack.c.l.b16 %v2968
    %v3040 = vpack.c.b16 %v3009, %v3008
    %v3041 = vpack.c.b16 %v3011, %v3010
    %v3042 = vpack.c.b16 %v3013, %v3012
    %v3043 = vpack.c.b16 %v3015, %v3014
    %v3044 = vpack.c.b16 %v3017, %v3016
    %v3045 = vpack.c.b16 %v3019, %v3018
    %v3046 = vpack.c.b16 %v3021, %v3020
    %v3047 = vpack.c.b16 %v3023, %v3022
    %v3048 = vpack.c.b16 %v3025, %v3024
    %v3049 = vpack.c.b16 %v3027, %v3026
    %v3050 = vpack.c.b16 %v3029, %v3028
    %v3051 = vpack.c.b16 %v3031, %v3030
    %v3052 = vpack.c.b16 %v3033, %v3032
    %v3053 = vpack.c.b16 %v3035, %v3034
    %v3054 = vpack.c.b16 %v3037, %v3036
    %v3055 = vpack.c.b16 %v3039, %v3038
    %3072 = vmatprep.subr.bf16.mxu0 0
    %3073 = vmatpush1.bf16.msra.mxu0 %v3040
    %3074 = vmatprep.subr.bf16.mxu0 0
    %3075 = vmatpush1.bf16.msra.mxu0 %v3041
    %3076 = vmatprep.subr.bf16.mxu0 0
    %3077 = vmatpush1.bf16.msra.mxu0 %v3042
    %3078 = vmatprep.subr.bf16.mxu0 0
    %3079 = vmatpush1.bf16.msra.mxu0 %v3043
    %3080 = vmatprep.subr.bf16.mxu0 0
    %3081 = vmatpush1.bf16.msra.mxu0 %v3044
    %3082 = vmatprep.subr.bf16.mxu0 0
    %3083 = vmatpush1.bf16.msra.mxu0 %v3045
    %3084 = vmatprep.subr.bf16.mxu0 0
    %3085 = vmatpush1.bf16.msra.mxu0 %v3046
    %3086 = vmatprep.subr.bf16.mxu0 0
    %3087 = vmatpush1.bf16.msra.mxu0 %v3047
    %3088 = vmatprep.subr.bf16.mxu0 0
    %3089 = vmatpush1.bf16.msra.mxu0 %v3048
    %3090 = vmatprep.subr.bf16.mxu0 0
    %3091 = vmatpush1.bf16.msra.mxu0 %v3049
    %3092 = vmatprep.subr.bf16.mxu0 0
    %3093 = vmatpush1.bf16.msra.mxu0 %v3050
    %3094 = vmatprep.subr.bf16.mxu0 0
    %3095 = vmatpush1.bf16.msra.mxu0 %v3051
    %3096 = vmatprep.subr.bf16.mxu0 0
    %3097 = vmatpush1.bf16.msra.mxu0 %v3052
    %3098 = vmatprep.subr.bf16.mxu0 0
    %3099 = vmatpush1.bf16.msra.mxu0 %v3053
    %3100 = vmatprep.subr.bf16.mxu0 0
    %3101 = vmatpush1.bf16.msra.mxu0 %v3054
    %3102 = vmatprep.subr.bf16.mxu0 0
    %3103 = vmatpush1.bf16.msra.mxu0 %v3055
    %3104 = vmatprep.mubr.bf16.mxu0 %v2922
    %3105 = vmatmul.mubr.bf16.gmra.mrb[0].mxu0 %v2921
    %v3106 = vpop.f32.mrb[0].mxu0
    %v3107 = vadd.f32 %v2974, %v3106
    %v3108 = vpop.f32.mrb[0].mxu0
    %v3109 = vpop.f32.mrb[0].mxu0
    %v3110 = vadd.f32 %v2974, %v3109
    %v3111 = vpop.f32.mrb[0].mxu0
    %3112 = vmatprep.mubr.bf16.mxu0 %v2924
    %3113 = vmatmul.mubr.bf16.gmra.mrb[0].mxu0 %v2923
    %v3114 = vpop.f32.mrb[0].mxu0
    %v3115 = vadd.f32 %v2974, %v3114
    %v3116 = vpop.f32.mrb[0].mxu0
    %v3117 = vpop.f32.mrb[0].mxu0
    %v3118 = vadd.f32 %v2974, %v3117
    %v3119 = vpop.f32.mrb[0].mxu0
    %3120 = vmatprep.mubr.bf16.mxu0 %v2926
    %3121 = vmatmul.mubr.bf16.gmra.mrb[0].mxu0 %v2925
    %v3122 = vpop.f32.mrb[0].mxu0
    %v3123 = vadd.f32 %v2974, %v3122
    %v3124 = vpop.f32.mrb[0].mxu0
    %v3125 = vpop.f32.mrb[0].mxu0
    %v3126 = vadd.f32 %v2974, %v3125
    %v3127 = vpop.f32.mrb[0].mxu0
    %3128 = vmatprep.mubr.bf16.mxu0 %v2928
    %3129 = vmatmul.mubr.bf16.gmra.mrb[0].mxu0 %v2927
    %v3130 = vpop.f32.mrb[0].mxu0
    %v3131 = vadd.f32 %v2974, %v3130
    %v3132 = vpop.f32.mrb[0].mxu0
    %v3133 = vpop.f32.mrb[0].mxu0
    %v3134 = vadd.f32 %v2974, %v3133
    %v3135 = vpop.f32.mrb[0].mxu0
    %3136 = vmatprep.mubr.bf16.mxu0 %v2930
    %3137 = vmatmul.mubr.bf16.gmra.mrb[0].mxu0 %v2929
    %v3138 = vpop.f32.mrb[0].mxu0
    %v3139 = vadd.f32 %v2974, %v3138
    %v3140 = vpop.f32.mrb[0].mxu0
    %v3141 = vpop.f32.mrb[0].mxu0
    %v3142 = vadd.f32 %v2974, %v3141
    %v3143 = vpop.f32.mrb[0].mxu0
    %3144 = vmatprep.mubr.bf16.mxu0 %v2932
    %3145 = vmatmul.mubr.bf16.gmra.mrb[0].mxu0 %v2931
    %v3146 = vpop.f32.mrb[0].mxu0
    %v3147 = vadd.f32 %v2974, %v3146
    %v3148 = vpop.f32.mrb[0].mxu0
    %v3149 = vpop.f32.mrb[0].mxu0
    %v3150 = vadd.f32 %v2974, %v3149
    %v3151 = vpop.f32.mrb[0].mxu0
    %3152 = vmatprep.mubr.bf16.mxu0 %v2934
    %3153 = vmatmul.mubr.bf16.gmra.mrb[0].mxu0 %v2933
    %v3154 = vpop.f32.mrb[0].mxu0
    %v3155 = vadd.f32 %v2974, %v3154
    %v3156 = vpop.f32.mrb[0].mxu0
    %v3157 = vpop.f32.mrb[0].mxu0
    %v3158 = vadd.f32 %v2974, %v3157
    %v3159 = vpop.f32.mrb[0].mxu0
    %3160 = vmatprep.mubr.bf16.mxu0 %v2936
    %3161 = vmatmul.mubr.bf16.gmra.mrb[0].mxu0 %v2935
    %v3162 = vpop.f32.mrb[0].mxu0
    %v3163 = vadd.f32 %v2974, %v3162
    %v3164 = vpop.f32.mrb[0].mxu0
    %v3165 = vpop.f32.mrb[0].mxu0
    %v3166 = vadd.f32 %v2974, %v3165
    %v3167 = vpop.f32.mrb[0].mxu0
    %3168 = vdwg.mxu0
    %3169 = vst [vmem:[#allocation10] sm:$0xff] %v3107
    %3170 = vst [vmem:[#allocation10 + $0x8] sm:$0xff] %v3110
    %3171 = vst [vmem:[#allocation10 + $0x10] sm:$0xff] %v3115
    %3172 = vst [vmem:[#allocation10 + $0x18] sm:$0xff] %v3118
    %3173 = vst [vmem:[#allocation10 + $0x20] sm:$0xff] %v3123
    %3174 = vst [vmem:[#allocation10 + $0x28] sm:$0xff] %v3126
    %3175 = vst [vmem:[#allocation10 + $0x30] sm:$0xff] %v3131
    %3176 = vst [vmem:[#allocation10 + $0x38] sm:$0xff] %v3134
    %3177 = vst [vmem:[#allocation10 + $0x40] sm:$0xff] %v3139
    %3178 = vst [vmem:[#allocation10 + $0x48] sm:$0xff] %v3142
    %3179 = vst [vmem:[#allocation10 + $0x50] sm:$0xff] %v3147
    %3180 = vst [vmem:[#allocation10 + $0x58] sm:$0xff] %v3150
    %3181 = vst [vmem:[#allocation10 + $0x60] sm:$0xff] %v3155
    %3182 = vst [vmem:[#allocation10 + $0x68] sm:$0xff] %v3158
    %3183 = vst [vmem:[#allocation10 + $0x70] sm:$0xff] %v3163
    %3184 = vst [vmem:[#allocation10 + $0x78] sm:$0xff] %v3166
    // Predicated region
    $region46: #{tpu_custom_call.1} parent=1 // pred_check
      _
    $region47: #{tpu_custom_call.1} parent=1 // pred_check_branch
      %3186 = sbr.rel (0) target = $region49
    $region48: #{tpu_custom_call.1} parent=1 // pred_region
      %s3188 = ssub.s32 2048, 2048
      %3189 = vsyncadd [#allocation4], %s3188
      %s3190 = sshll.u32 [#allocation10], 4
      %s3191 = int_to_ptr.vmem [resolvable:$true] %s3190
      %3196 = dma.vmem_to_hbm [thread:$0]  %s3191, 2048, %s7, [#allocation4], 128, 128, 8
    $region49: #{tpu_custom_call.1} parent=1 // pred_fallthru
      _
    // Predicated region
    $region50: #{tpu_custom_call.1} parent=1 // pred_check
      _
    $region51: #{tpu_custom_call.1} parent=1 // pred_check_branch
      %3198 = sbr.rel (0) target = $region53
    $region52: #{tpu_custom_call.1} parent=1 // pred_region
      %3199 = dma.done [#allocation4], 2048
    $region53: #{tpu_custom_call.1} parent=1 // pred_fallthru
      _
    %3200 = vsyncpa [#allocation3], 1
    %3201 = vsyncpa [#allocation6], 1
    %3202 = vsyncpa [#allocation9], 1
    %3203 = vsyncpa [#allocation4], 1

</llo_original>
